<compile_context>
chip_gen: v6e
topology: v6e:2x2x1
jax: 0.10.0
libtpu: 0.0.40
codegen_flags: <defaults>
</compile_context>

<pallas_src>
import jax
import jax.numpy as jnp
from jax.experimental import pallas as pl
from jax.experimental.pallas import tpu as pltpu


# ---------------------------------------------------------------------------
# Pallas kernel factory: fused (multi-source) 3x3 conv + BN(eval) + ReLU.
# ---------------------------------------------------------------------------
def _make_branch_kernel(n_src, cins, tile_h, W, compute_dtype):
    """Kernel over grid (batch, row-tile).

    Ref layout (in order):
      for each source s: main (1, tile_h, W, C_s), top-halo (1, 1, W, C_s),
                         bottom-halo (1, 1, W, C_s)
      w_ref     (9*Cin_total, Cout_pad)
      scale_ref (1, Cout_pad)     gamma / sqrt(var + eps)
      shift_ref (1, Cout_pad)     beta - mean * scale
      o_ref     (1, tile_h*W, Cout_pad)
      rows_ref  VMEM scratch (tile_h+2, W+2, Cin_total)  f32, zero-halo buffer
      patch_ref VMEM scratch (tile_h*W, 9*Cin_total)     f32, im2col matrix
    """
    cin_tot = sum(cins)

    def kernel(*args):
        x_refs = args[:3 * n_src]
        w_ref, scale_ref, shift_ref, o_ref, rows_ref, patch_ref = args[3 * n_src:]

        t = pl.program_id(1)
        n_tiles = pl.num_programs(1)
        # 0/1 masks: halo rows outside the image are the conv's zero padding.
        m_top = jnp.where(t > 0, 1.0, 0.0)
        m_bot = jnp.where(t < n_tiles - 1, 1.0, 0.0)

        # Zero the halo buffer, then write the interior (implicit pad+concat).
        rows_ref[...] = jnp.zeros((tile_h + 2, W + 2, cin_tot), jnp.float32)

        ch = 0
        for s in range(n_src):
            c = cins[s]
            main = x_refs[3 * s][0].astype(jnp.float32)              # (tile_h, W, c)
            top = x_refs[3 * s + 1][0].astype(jnp.float32) * m_top   # (1, W, c)
            bot = x_refs[3 * s + 2][0].astype(jnp.float32) * m_bot   # (1, W, c)
            rows_ref[1:tile_h + 1, 1:W + 1, ch:ch + c] = main
            rows_ref[0:1, 1:W + 1, ch:ch + c] = top
            rows_ref[tile_h + 1:tile_h + 2, 1:W + 1, ch:ch + c] = bot
            ch += c

        # im2col: build one (tile_h*W, 9*Cin_total) patch matrix.  The per-tap
        # reshape is layout-friendly because W is a multiple of 8.
        for dy in range(3):
            for dx in range(3):
                tap = dy * 3 + dx
                piece = rows_ref[dy:dy + tile_h, dx:dx + W, :]       # (tile_h, W, cin_tot)
                patch_ref[:, tap * cin_tot:(tap + 1) * cin_tot] = (
                    piece.reshape(tile_h * W, cin_tot))

        # Single MXU matmul with K = 9*Cin_total, N = 128 (lane-dense).
        patch = patch_ref[...].astype(compute_dtype)
        acc = jnp.dot(patch, w_ref[...],
                      preferred_element_type=jnp.float32)            # (tile_h*W, 128)

        y = acc * scale_ref[0] + shift_ref[0]                        # BatchNorm (eval)
        y = jnp.maximum(y, 0.0)                                      # ReLU
        o_ref[0] = y.astype(o_ref.dtype)                             # flat, lane-dense store

    return kernel


# ---------------------------------------------------------------------------
# Wrapper: one fused pallas_call per pyramid branch.
# ---------------------------------------------------------------------------
def fused_multiscale_conv_bn_relu(sources, w, scale, shift, *,
                                  compute_dtype=jnp.bfloat16,
                                  tile_h_cap=16,
                                  out_dtype=jnp.float32):
    """sources: list of NHWC arrays (same N, H, W); w: (3, 3, sum(Cin_s), Cout)."""
    n_src = len(sources)
    N, H, W = sources[0].shape[:3]
    cins = [int(s.shape[-1]) for s in sources]
    cin_tot = sum(cins)
    cout = int(w.shape[-1])
    assert w.shape == (3, 3, cin_tot, cout), (w.shape, cin_tot, cout)

    K = 9 * cin_tot
    cpad = max(128, -(-cout // 128) * 128)           # lane-dense output / MXU N

    tile_h = min(tile_h_cap, H)
    if H % tile_h != 0 or (tile_h * W) % 8 != 0:
        tile_h = H
    n_tiles = H // tile_h

    # Pack parameters once on the host side (reviewer item 1 + 3a).
    w2 = jnp.pad(w.reshape(K, cout), ((0, 0), (0, cpad - cout))).astype(compute_dtype)
    scale_p = jnp.pad(scale.astype(jnp.float32), (0, cpad - cout)).reshape(1, cpad)
    shift_p = jnp.pad(shift.astype(jnp.float32), (0, cpad - cout)).reshape(1, cpad)
    xs = [s.astype(compute_dtype) for s in sources]  # bf16 halves HBM traffic

    in_specs = []
    inputs = []
    for s in range(n_src):
        c = cins[s]
        # main rows of the tile
        in_specs.append(pl.BlockSpec((1, tile_h, W, c),
                                     lambda n, t: (n, t, 0, 0)))
        # one halo row above / below (clamped at image edges, masked in-kernel)
        in_specs.append(pl.BlockSpec(
            (1, 1, W, c),
            lambda n, t: (n, jnp.maximum(t * tile_h - 1, 0), 0, 0)))
        in_specs.append(pl.BlockSpec(
            (1, 1, W, c),
            lambda n, t: (n, jnp.minimum((t + 1) * tile_h, H - 1), 0, 0)))
        inputs += [xs[s], xs[s], xs[s]]

    in_specs += [
        pl.BlockSpec((K, cpad), lambda n, t: (0, 0)),
        pl.BlockSpec((1, cpad), lambda n, t: (0, 0)),
        pl.BlockSpec((1, cpad), lambda n, t: (0, 0)),
    ]
    inputs += [w2, scale_p, shift_p]

    cd_bytes = jnp.dtype(compute_dtype).itemsize
    flops = 2 * N * H * W * K * cout
    bytes_accessed = (sum(N * H * W * c for c in cins) * cd_bytes
                      + K * cpad * cd_bytes
                      + N * H * W * cpad * jnp.dtype(out_dtype).itemsize)

    out = pl.pallas_call(
        _make_branch_kernel(n_src, cins, tile_h, W, compute_dtype),
        out_shape=jax.ShapeDtypeStruct((N, H * W, cpad), out_dtype),
        grid_spec=pltpu.PrefetchScalarGridSpec(
            num_scalar_prefetch=0,
            grid=(N, n_tiles),
            in_specs=in_specs,
            out_specs=pl.BlockSpec((1, tile_h * W, cpad),
                                   lambda n, t: (n, t, 0)),
            scratch_shapes=[
                pltpu.VMEM((tile_h + 2, W + 2, cin_tot), jnp.float32),
                pltpu.VMEM((tile_h * W, K), jnp.float32),
            ]),
        compiler_params=pltpu.CompilerParams(
            dimension_semantics=("parallel", "parallel"),
            vmem_limit_bytes=32 * 1024 * 1024),
        cost_estimate=pl.CostEstimate(flops=flops, transcendentals=0,
                                      bytes_accessed=bytes_accessed),
    )(*inputs)

    # Free-ish layout plumbing outside the kernel: drop channel padding, un-flatten.
    return out[:, :, :cout].reshape(N, H, W, cout)


# ---------------------------------------------------------------------------
# Glue: pyramid rescaling (maxpool / nearest upsample) and synthetic params.
# ---------------------------------------------------------------------------
def maxpool2x(x):
    # nn.MaxPool2d(2) on NHWC
    N, H, W, C = x.shape
    return jnp.max(x.reshape(N, H // 2, 2, W // 2, 2, C), axis=(2, 4))


def upsample2x(x):
    # nn.Upsample(scale_factor=2, mode='nearest') on NHWC
    return jnp.repeat(jnp.repeat(x, 2, axis=1), 2, axis=2)


def init_multigrid_params(key, nb_scale, in_channels, out_channels, eps=1e-5):
    """Deterministic synthetic params per branch: (w (3,3,Cin_tot,Cout), scale, shift)."""
    cin_totals = [in_channels[0] + in_channels[1]]
    for i in range(1, nb_scale - 1):
        cin_totals.append(in_channels[i - 1] + in_channels[i] + in_channels[i + 1])
    cin_totals.append(in_channels[-2] + in_channels[-1])

    params = []
    for i, (cin, cout) in enumerate(zip(cin_totals, out_channels)):
        kw, kg, kb = jax.random.split(jax.random.fold_in(key, i), 3)
        w = 0.1 * jax.random.normal(kw, (3, 3, cin, cout), jnp.float32)
        gamma = 1.0 + 0.1 * jax.random.normal(kg, (cout,), jnp.float32)
        beta = 0.1 * jax.random.normal(kb, (cout,), jnp.float32)
        running_mean = jnp.zeros((cout,), jnp.float32)
        running_var = jnp.ones((cout,), jnp.float32)
        scale = gamma / jnp.sqrt(running_var + eps)
        shift = beta - running_mean * scale
        params.append((w, scale, shift))
    return params


def multi_grid_conv(pyramid, params, *, compute_dtype=jnp.bfloat16):
    """Forward pass of MultiGridConv. pyramid: list of NHWC arrays (fine->coarse)."""
    outputs = []
    # finest scale
    sources = [pyramid[0], upsample2x(pyramid[1])]
    outputs.append(fused_multiscale_conv_bn_relu(
        sources, *params[0], compute_dtype=compute_dtype))
    # middle scales
    for i in range(1, len(pyramid) - 1):
        sources = [maxpool2x(pyramid[i - 1]), pyramid[i], upsample2x(pyramid[i + 1])]
        outputs.append(fused_multiscale_conv_bn_relu(
            sources, *params[i], compute_dtype=compute_dtype))
    # coarsest scale
    sources = [maxpool2x(pyramid[-2]), pyramid[-1]]
    outputs.append(fused_multiscale_conv_bn_relu(
        sources, *params[-1], compute_dtype=compute_dtype))
    return outputs


# ---------------------------------------------------------------------------
# Pure-JAX reference (lax.conv), precision-matched to the kernel.
# ---------------------------------------------------------------------------
def _ref_branch(sources, w, scale, shift, compute_dtype):
    x = jnp.concatenate(sources, axis=-1).astype(compute_dtype)
    y = jax.lax.conv_general_dilated(
        x, w.astype(compute_dtype), window_strides=(1, 1), padding="SAME",
        dimension_numbers=("NHWC", "HWIO", "NHWC"),
        preferred_element_type=jnp.float32)
    return jnp.maximum(y * scale + shift, 0.0)


def multi_grid_conv_ref(pyramid, params, *, compute_dtype=jnp.bfloat16):
    outputs = []
    sources = [pyramid[0], upsample2x(pyramid[1])]
    outputs.append(_ref_branch(sources, *params[0], compute_dtype))
    for i in range(1, len(pyramid) - 1):
        sources = [maxpool2x(pyramid[i - 1]), pyramid[i], upsample2x(pyramid[i + 1])]
        outputs.append(_ref_branch(sources, *params[i], compute_dtype))
    sources = [maxpool2x(pyramid[-2]), pyramid[-1]]
    outputs.append(_ref_branch(sources, *params[-1], compute_dtype))
    return outputs


if __name__ == "__main__":
    key = jax.random.PRNGKey(0)

    # Small, deterministic problem: 3-scale pyramid, batch=2.
    N = 2
    nb_scale = 3
    in_channels = (4, 8, 8)      # fine -> coarse
    out_channels = (4, 8, 8)
    finest_spatial = 32          # scales: 32x32, 16x16, 8x8

    pyramid = []
    for s in range(nb_scale):
        hw = finest_spatial // (2 ** s)
        k = jax.random.fold_in(key, 100 + s)
        pyramid.append(jax.random.normal(k, (N, hw, hw, in_channels[s]),
                                         jnp.float32))

    params = init_multigrid_params(key, nb_scale, in_channels, out_channels)

    # Check both the f32 path (tight tolerance) and the default bf16-MXU path
    # (compared against a reference that uses the same bf16-cast operands).
    for compute_dtype, tol in ((jnp.float32, 1e-3), (jnp.bfloat16, 2e-2)):
        outs = multi_grid_conv(pyramid, params, compute_dtype=compute_dtype)
        outs = [jax.block_until_ready(o) for o in outs]
        refs = multi_grid_conv_ref(pyramid, params, compute_dtype=compute_dtype)
        for o, r in zip(outs, refs):
            assert o.shape == r.shape, (o.shape, r.shape)
            if not bool(jnp.allclose(o, r, atol=tol, rtol=tol)):
                err = float(jnp.max(jnp.abs(o - r)))
                raise AssertionError(
                    f"Pallas output does not match reference "
                    f"(dtype={compute_dtype}, max abs err={err})")

    print("KERNEL_OK")
</pallas_src>

<mosaic_0001>
module attributes {stable_mosaic.version = 11 : i64} {
  func.func @kernel(%arg0: i32, %arg1: i32, %arg2: memref<1x16x32x4xf32, #tpu.memory_space<vmem>>, %arg3: memref<1x1x32x4xf32, #tpu.memory_space<vmem>>, %arg4: memref<1x1x32x4xf32, #tpu.memory_space<vmem>>, %arg5: memref<1x16x32x8xf32, #tpu.memory_space<vmem>>, %arg6: memref<1x1x32x8xf32, #tpu.memory_space<vmem>>, %arg7: memref<1x1x32x8xf32, #tpu.memory_space<vmem>>, %arg8: memref<108x128xf32, #tpu.memory_space<vmem>>, %arg9: memref<1x128xf32, #tpu.memory_space<vmem>>, %arg10: memref<1x128xf32, #tpu.memory_space<vmem>>, %arg11: memref<1x512x128xf32, #tpu.memory_space<vmem>>, %arg12: memref<18x34x12xf32, #tpu.memory_space<vmem>>, %arg13: memref<512x108xf32, #tpu.memory_space<vmem>>) attributes {dimension_semantics = [#tpu.dimension_semantics<parallel>, #tpu.dimension_semantics<parallel>], iteration_bounds = array<i64: 2, 2>, scalar_prefetch = 0 : i64, scratch_operands = 2 : i64, tpu.core_type = #tpu.core_type<tc>, window_params = [{transform_indices = @transform_0, window_bounds = array<i64: 1, 16, 32, 4>}, {transform_indices = @transform_1, window_bounds = array<i64: 1, 1, 32, 4>}, {transform_indices = @transform_2, window_bounds = array<i64: 1, 1, 32, 4>}, {transform_indices = @transform_3, window_bounds = array<i64: 1, 16, 32, 8>}, {transform_indices = @transform_4, window_bounds = array<i64: 1, 1, 32, 8>}, {transform_indices = @transform_5, window_bounds = array<i64: 1, 1, 32, 8>}, {pipeline_mode = #tpu.pipeline_mode<synchronous>, transform_indices = @transform_6, window_bounds = array<i64: 108, 128>}, {pipeline_mode = #tpu.pipeline_mode<synchronous>, transform_indices = @transform_7, window_bounds = array<i64: 1, 128>}, {pipeline_mode = #tpu.pipeline_mode<synchronous>, transform_indices = @transform_8, window_bounds = array<i64: 1, 128>}, {transform_indices = @transform_9, window_bounds = array<i64: 1, 512, 128>}]} {
    %c0_i32 = arith.constant 0 : i32
    %0 = arith.cmpi sgt, %arg1, %c0_i32 : i32
    %cst = arith.constant 1.000000e+00 : f32
    %cst_0 = arith.constant 0.000000e+00 : f32
    %1 = arith.select %0, %cst, %cst_0 : f32
    %c1_i32 = arith.constant 1 : i32
    %2 = arith.cmpi slt, %arg1, %c1_i32 : i32
    %cst_1 = arith.constant 1.000000e+00 : f32
    %cst_2 = arith.constant 0.000000e+00 : f32
    %3 = arith.select %2, %cst_1, %cst_2 : f32
    %cst_3 = arith.constant 0.000000e+00 : f32
    %4 = vector.broadcast %cst_3 : f32 to vector<18x34x12xf32>
    %c0 = arith.constant 0 : index
    %c0_4 = arith.constant 0 : index
    %c0_5 = arith.constant 0 : index
    %5 = vector.load %arg12[%c0, %c0_4, %c0_5] : memref<18x34x12xf32, #tpu.memory_space<vmem>>, vector<18x34x12xf32>
    tpu.vector_store %arg12[%c0, %c0_4, %c0_5], %4 {strides = array<i32>} : memref<18x34x12xf32, #tpu.memory_space<vmem>>, vector<18x34x12xf32>,
    %c0_6 = arith.constant 0 : index
    %c0_7 = arith.constant 0 : index
    %c0_8 = arith.constant 0 : index
    %c0_9 = arith.constant 0 : index
    %6 = vector.load %arg2[%c0_6, %c0_7, %c0_8, %c0_9] : memref<1x16x32x4xf32, #tpu.memory_space<vmem>>, vector<1x16x32x4xf32>
    %7 = vector.shape_cast %6 : vector<1x16x32x4xf32> to vector<16x32x4xf32>
    %c0_10 = arith.constant 0 : index
    %c0_11 = arith.constant 0 : index
    %c0_12 = arith.constant 0 : index
    %c0_13 = arith.constant 0 : index
    %8 = vector.load %arg3[%c0_10, %c0_11, %c0_12, %c0_13] : memref<1x1x32x4xf32, #tpu.memory_space<vmem>>, vector<1x1x32x4xf32>
    %9 = vector.shape_cast %8 : vector<1x1x32x4xf32> to vector<1x32x4xf32>
    %10 = vector.broadcast %1 : f32 to vector<1x32x4xf32>
    %11 = arith.mulf %9, %10 : vector<1x32x4xf32>
    %c0_14 = arith.constant 0 : index
    %c0_15 = arith.constant 0 : index
    %c0_16 = arith.constant 0 : index
    %c0_17 = arith.constant 0 : index
    %12 = vector.load %arg4[%c0_14, %c0_15, %c0_16, %c0_17] : memref<1x1x32x4xf32, #tpu.memory_space<vmem>>, vector<1x1x32x4xf32>
    %13 = vector.shape_cast %12 : vector<1x1x32x4xf32> to vector<1x32x4xf32>
    %14 = vector.broadcast %3 : f32 to vector<1x32x4xf32>
    %15 = arith.mulf %13, %14 : vector<1x32x4xf32>
    %c1 = arith.constant 1 : index
    %c1_18 = arith.constant 1 : index
    %c0_19 = arith.constant 0 : index
    %16 = vector.load %arg12[%c1, %c1_18, %c0_19] : memref<18x34x12xf32, #tpu.memory_space<vmem>>, vector<16x32x4xf32>
    tpu.vector_store %arg12[%c1, %c1_18, %c0_19], %7 {strides = array<i32>} : memref<18x34x12xf32, #tpu.memory_space<vmem>>, vector<16x32x4xf32>,
    %c0_20 = arith.constant 0 : index
    %c1_21 = arith.constant 1 : index
    %c0_22 = arith.constant 0 : index
    %17 = vector.load %arg12[%c0_20, %c1_21, %c0_22] : memref<18x34x12xf32, #tpu.memory_space<vmem>>, vector<1x32x4xf32>
    tpu.vector_store %arg12[%c0_20, %c1_21, %c0_22], %11 {strides = array<i32>} : memref<18x34x12xf32, #tpu.memory_space<vmem>>, vector<1x32x4xf32>,
    %c17 = arith.constant 17 : index
    %c1_23 = arith.constant 1 : index
    %c0_24 = arith.constant 0 : index
    %18 = vector.load %arg12[%c17, %c1_23, %c0_24] : memref<18x34x12xf32, #tpu.memory_space<vmem>>, vector<1x32x4xf32>
    tpu.vector_store %arg12[%c17, %c1_23, %c0_24], %15 {strides = array<i32>} : memref<18x34x12xf32, #tpu.memory_space<vmem>>, vector<1x32x4xf32>,
    %c0_25 = arith.constant 0 : index
    %c0_26 = arith.constant 0 : index
    %c0_27 = arith.constant 0 : index
    %c0_28 = arith.constant 0 : index
    %19 = vector.load %arg5[%c0_25, %c0_26, %c0_27, %c0_28] : memref<1x16x32x8xf32, #tpu.memory_space<vmem>>, vector<1x16x32x8xf32>
    %20 = vector.shape_cast %19 : vector<1x16x32x8xf32> to vector<16x32x8xf32>
    %c0_29 = arith.constant 0 : index
    %c0_30 = arith.constant 0 : index
    %c0_31 = arith.constant 0 : index
    %c0_32 = arith.constant 0 : index
    %21 = vector.load %arg6[%c0_29, %c0_30, %c0_31, %c0_32] : memref<1x1x32x8xf32, #tpu.memory_space<vmem>>, vector<1x1x32x8xf32>
    %22 = vector.shape_cast %21 : vector<1x1x32x8xf32> to vector<1x32x8xf32>
    %23 = vector.broadcast %1 : f32 to vector<1x32x8xf32>
    %24 = arith.mulf %22, %23 : vector<1x32x8xf32>
    %c0_33 = arith.constant 0 : index
    %c0_34 = arith.constant 0 : index
    %c0_35 = arith.constant 0 : index
    %c0_36 = arith.constant 0 : index
    %25 = vector.load %arg7[%c0_33, %c0_34, %c0_35, %c0_36] : memref<1x1x32x8xf32, #tpu.memory_space<vmem>>, vector<1x1x32x8xf32>
    %26 = vector.shape_cast %25 : vector<1x1x32x8xf32> to vector<1x32x8xf32>
    %27 = vector.broadcast %3 : f32 to vector<1x32x8xf32>
    %28 = arith.mulf %26, %27 : vector<1x32x8xf32>
    %c1_37 = arith.constant 1 : index
    %c1_38 = arith.constant 1 : index
    %c4 = arith.constant 4 : index
    %29 = vector.load %arg12[%c1_37, %c1_38, %c4] : memref<18x34x12xf32, #tpu.memory_space<vmem>>, vector<16x32x8xf32>
    tpu.vector_store %arg12[%c1_37, %c1_38, %c4], %20 {strides = array<i32>} : memref<18x34x12xf32, #tpu.memory_space<vmem>>, vector<16x32x8xf32>,
    %c0_39 = arith.constant 0 : index
    %c1_40 = arith.constant 1 : index
    %c4_41 = arith.constant 4 : index
    %30 = vector.load %arg12[%c0_39, %c1_40, %c4_41] : memref<18x34x12xf32, #tpu.memory_space<vmem>>, vector<1x32x8xf32>
    tpu.vector_store %arg12[%c0_39, %c1_40, %c4_41], %24 {strides = array<i32>} : memref<18x34x12xf32, #tpu.memory_space<vmem>>, vector<1x32x8xf32>,
    %c17_42 = arith.constant 17 : index
    %c1_43 = arith.constant 1 : index
    %c4_44 = arith.constant 4 : index
    %31 = vector.load %arg12[%c17_42, %c1_43, %c4_44] : memref<18x34x12xf32, #tpu.memory_space<vmem>>, vector<1x32x8xf32>
    tpu.vector_store %arg12[%c17_42, %c1_43, %c4_44], %28 {strides = array<i32>} : memref<18x34x12xf32, #tpu.memory_space<vmem>>, vector<1x32x8xf32>,
    %c0_45 = arith.constant 0 : index
    %c0_46 = arith.constant 0 : index
    %c0_47 = arith.constant 0 : index
    %32 = vector.load %arg12[%c0_45, %c0_46, %c0_47] : memref<18x34x12xf32, #tpu.memory_space<vmem>>, vector<16x32x12xf32>
    %33 = vector.shape_cast %32 : vector<16x32x12xf32> to vector<512x12xf32>
    %c0_48 = arith.constant 0 : index
    %c0_49 = arith.constant 0 : index
    %34 = vector.load %arg13[%c0_48, %c0_49] : memref<512x108xf32, #tpu.memory_space<vmem>>, vector<512x12xf32>
    tpu.vector_store %arg13[%c0_48, %c0_49], %33 {strides = array<i32>} : memref<512x108xf32, #tpu.memory_space<vmem>>, vector<512x12xf32>,
    %c0_50 = arith.constant 0 : index
    %c1_51 = arith.constant 1 : index
    %c0_52 = arith.constant 0 : index
    %35 = vector.load %arg12[%c0_50, %c1_51, %c0_52] : memref<18x34x12xf32, #tpu.memory_space<vmem>>, vector<16x32x12xf32>
    %36 = vector.shape_cast %35 : vector<16x32x12xf32> to vector<512x12xf32>
    %c0_53 = arith.constant 0 : index
    %c12 = arith.constant 12 : index
    %37 = vector.load %arg13[%c0_53, %c12] : memref<512x108xf32, #tpu.memory_space<vmem>>, vector<512x12xf32>
    tpu.vector_store %arg13[%c0_53, %c12], %36 {strides = array<i32>} : memref<512x108xf32, #tpu.memory_space<vmem>>, vector<512x12xf32>,
    %c0_54 = arith.constant 0 : index
    %c2 = arith.constant 2 : index
    %c0_55 = arith.constant 0 : index
    %38 = vector.load %arg12[%c0_54, %c2, %c0_55] : memref<18x34x12xf32, #tpu.memory_space<vmem>>, vector<16x32x12xf32>
    %39 = vector.shape_cast %38 : vector<16x32x12xf32> to vector<512x12xf32>
    %c0_56 = arith.constant 0 : index
    %c24 = arith.constant 24 : index
    %40 = vector.load %arg13[%c0_56, %c24] : memref<512x108xf32, #tpu.memory_space<vmem>>, vector<512x12xf32>
    tpu.vector_store %arg13[%c0_56, %c24], %39 {strides = array<i32>} : memref<512x108xf32, #tpu.memory_space<vmem>>, vector<512x12xf32>,
    %c1_57 = arith.constant 1 : index
    %c0_58 = arith.constant 0 : index
    %c0_59 = arith.constant 0 : index
    %41 = vector.load %arg12[%c1_57, %c0_58, %c0_59] : memref<18x34x12xf32, #tpu.memory_space<vmem>>, vector<16x32x12xf32>
    %42 = vector.shape_cast %41 : vector<16x32x12xf32> to vector<512x12xf32>
    %c0_60 = arith.constant 0 : index
    %c36 = arith.constant 36 : index
    %43 = vector.load %arg13[%c0_60, %c36] : memref<512x108xf32, #tpu.memory_space<vmem>>, vector<512x12xf32>
    tpu.vector_store %arg13[%c0_60, %c36], %42 {strides = array<i32>} : memref<512x108xf32, #tpu.memory_space<vmem>>, vector<512x12xf32>,
    %c1_61 = arith.constant 1 : index
    %c1_62 = arith.constant 1 : index
    %c0_63 = arith.constant 0 : index
    %44 = vector.load %arg12[%c1_61, %c1_62, %c0_63] : memref<18x34x12xf32, #tpu.memory_space<vmem>>, vector<16x32x12xf32>
    %45 = vector.shape_cast %44 : vector<16x32x12xf32> to vector<512x12xf32>
    %c0_64 = arith.constant 0 : index
    %c48 = arith.constant 48 : index
    %46 = vector.load %arg13[%c0_64, %c48] : memref<512x108xf32, #tpu.memory_space<vmem>>, vector<512x12xf32>
    tpu.vector_store %arg13[%c0_64, %c48], %45 {strides = array<i32>} : memref<512x108xf32, #tpu.memory_space<vmem>>, vector<512x12xf32>,
    %c1_65 = arith.constant 1 : index
    %c2_66 = arith.constant 2 : index
    %c0_67 = arith.constant 0 : index
    %47 = vector.load %arg12[%c1_65, %c2_66, %c0_67] : memref<18x34x12xf32, #tpu.memory_space<vmem>>, vector<16x32x12xf32>
    %48 = vector.shape_cast %47 : vector<16x32x12xf32> to vector<512x12xf32>
    %c0_68 = arith.constant 0 : index
    %c60 = arith.constant 60 : index
    %49 = vector.load %arg13[%c0_68, %c60] : memref<512x108xf32, #tpu.memory_space<vmem>>, vector<512x12xf32>
    tpu.vector_store %arg13[%c0_68, %c60], %48 {strides = array<i32>} : memref<512x108xf32, #tpu.memory_space<vmem>>, vector<512x12xf32>,
    %c2_69 = arith.constant 2 : index
    %c0_70 = arith.constant 0 : index
    %c0_71 = arith.constant 0 : index
    %50 = vector.load %arg12[%c2_69, %c0_70, %c0_71] : memref<18x34x12xf32, #tpu.memory_space<vmem>>, vector<16x32x12xf32>
    %51 = vector.shape_cast %50 : vector<16x32x12xf32> to vector<512x12xf32>
    %c0_72 = arith.constant 0 : index
    %c72 = arith.constant 72 : index
    %52 = vector.load %arg13[%c0_72, %c72] : memref<512x108xf32, #tpu.memory_space<vmem>>, vector<512x12xf32>
    tpu.vector_store %arg13[%c0_72, %c72], %51 {strides = array<i32>} : memref<512x108xf32, #tpu.memory_space<vmem>>, vector<512x12xf32>,
    %c2_73 = arith.constant 2 : index
    %c1_74 = arith.constant 1 : index
    %c0_75 = arith.constant 0 : index
    %53 = vector.load %arg12[%c2_73, %c1_74, %c0_75] : memref<18x34x12xf32, #tpu.memory_space<vmem>>, vector<16x32x12xf32>
    %54 = vector.shape_cast %53 : vector<16x32x12xf32> to vector<512x12xf32>
    %c0_76 = arith.constant 0 : index
    %c84 = arith.constant 84 : index
    %55 = vector.load %arg13[%c0_76, %c84] : memref<512x108xf32, #tpu.memory_space<vmem>>, vector<512x12xf32>
    tpu.vector_store %arg13[%c0_76, %c84], %54 {strides = array<i32>} : memref<512x108xf32, #tpu.memory_space<vmem>>, vector<512x12xf32>,
    %c2_77 = arith.constant 2 : index
    %c2_78 = arith.constant 2 : index
    %c0_79 = arith.constant 0 : index
    %56 = vector.load %arg12[%c2_77, %c2_78, %c0_79] : memref<18x34x12xf32, #tpu.memory_space<vmem>>, vector<16x32x12xf32>
    %57 = vector.shape_cast %56 : vector<16x32x12xf32> to vector<512x12xf32>
    %c0_80 = arith.constant 0 : index
    %c96 = arith.constant 96 : index
    %58 = vector.load %arg13[%c0_80, %c96] : memref<512x108xf32, #tpu.memory_space<vmem>>, vector<512x12xf32>
    tpu.vector_store %arg13[%c0_80, %c96], %57 {strides = array<i32>} : memref<512x108xf32, #tpu.memory_space<vmem>>, vector<512x12xf32>,
    %c0_81 = arith.constant 0 : index
    %c0_82 = arith.constant 0 : index
    %59 = vector.load %arg13[%c0_81, %c0_82] : memref<512x108xf32, #tpu.memory_space<vmem>>, vector<512x108xf32>
    %c0_83 = arith.constant 0 : index
    %c0_84 = arith.constant 0 : index
    %60 = vector.load %arg8[%c0_83, %c0_84] : memref<108x128xf32, #tpu.memory_space<vmem>>, vector<108x128xf32>
    %cst_85 = arith.constant dense<0.000000e+00> : vector<512x128xf32>
    %61 = tpu.matmul %59, %60, %cst_85 {dimension_numbers = #tpu.dot_dimension_numbers<[1], [0], [0], [1], [0, 0, 1, 1], [], []>} : vector<512x108xf32>, vector<108x128xf32>, vector<512x128xf32> -> vector<512x128xf32>
    %c0_86 = arith.constant 0 : index
    %c0_87 = arith.constant 0 : index
    %62 = vector.load %arg9[%c0_86, %c0_87] : memref<1x128xf32, #tpu.memory_space<vmem>>, vector<1x128xf32>
    %63 = vector.shape_cast %62 : vector<1x128xf32> to vector<128xf32>
    %64 = vector.shape_cast %63 : vector<128xf32> to vector<1x128xf32>
    %65 = vector.broadcast %64 : vector<1x128xf32> to vector<512x128xf32>
    %66 = arith.mulf %61, %65 : vector<512x128xf32>
    %c0_88 = arith.constant 0 : index
    %c0_89 = arith.constant 0 : index
    %67 = vector.load %arg10[%c0_88, %c0_89] : memref<1x128xf32, #tpu.memory_space<vmem>>, vector<1x128xf32>
    %68 = vector.shape_cast %67 : vector<1x128xf32> to vector<128xf32>
    %69 = vector.shape_cast %68 : vector<128xf32> to vector<1x128xf32>
    %70 = vector.broadcast %69 : vector<1x128xf32> to vector<512x128xf32>
    %71 = arith.addf %66, %70 : vector<512x128xf32>
    %cst_90 = arith.constant 0.000000e+00 : f32
    %72 = vector.broadcast %cst_90 : f32 to vector<512x128xf32>
    %73 = arith.maximumf %71, %72 : vector<512x128xf32>
    %c0_91 = arith.constant 0 : index
    %c0_92 = arith.constant 0 : index
    %c0_93 = arith.constant 0 : index
    %74 = vector.load %arg11[%c0_91, %c0_92, %c0_93] : memref<1x512x128xf32, #tpu.memory_space<vmem>>, vector<1x512x128xf32>
    %75 = vector.shape_cast %74 : vector<1x512x128xf32> to vector<512x128xf32>
    %76 = vector.shape_cast %73 : vector<512x128xf32> to vector<1x512x128xf32>
    tpu.vector_store %arg11[%c0_91, %c0_92, %c0_93], %76 {strides = array<i32>} : memref<1x512x128xf32, #tpu.memory_space<vmem>>, vector<1x512x128xf32>,
    return
  }
  func.func @transform_0(%arg0: i32, %arg1: i32) -> (i32, i32, i32, i32) {
    %c0_i32 = arith.constant 0 : i32
    %c0_i32_0 = arith.constant 0 : i32
    %c0_i32_1 = arith.constant 0 : i32
    return %arg0, %arg1, %c0_i32, %c0_i32_0 : i32, i32, i32, i32
  }
  func.func @transform_1(%arg0: i32, %arg1: i32) -> (i32, i32, i32, i32) {
    %c16_i32 = arith.constant 16 : i32
    %0 = arith.muli %arg1, %c16_i32 : i32
    %c1_i32 = arith.constant 1 : i32
    %1 = arith.subi %0, %c1_i32 : i32
    %c0_i32 = arith.constant 0 : i32
    %2 = arith.maxsi %1, %c0_i32 : i32
    %c0_i32_0 = arith.constant 0 : i32
    %c0_i32_1 = arith.constant 0 : i32
    %c0_i32_2 = arith.constant 0 : i32
    return %arg0, %2, %c0_i32_0, %c0_i32_1 : i32, i32, i32, i32
  }
  func.func @transform_2(%arg0: i32, %arg1: i32) -> (i32, i32, i32, i32) {
    %c1_i32 = arith.constant 1 : i32
    %0 = arith.addi %arg1, %c1_i32 : i32
    %c16_i32 = arith.constant 16 : i32
    %1 = arith.muli %0, %c16_i32 : i32
    %c31_i32 = arith.constant 31 : i32
    %2 = arith.minsi %1, %c31_i32 : i32
    %c0_i32 = arith.constant 0 : i32
    %c0_i32_0 = arith.constant 0 : i32
    %c0_i32_1 = arith.constant 0 : i32
    return %arg0, %2, %c0_i32, %c0_i32_0 : i32, i32, i32, i32
  }
  func.func @transform_3(%arg0: i32, %arg1: i32) -> (i32, i32, i32, i32) {
    %c0_i32 = arith.constant 0 : i32
    %c0_i32_0 = arith.constant 0 : i32
    %c0_i32_1 = arith.constant 0 : i32
    return %arg0, %arg1, %c0_i32, %c0_i32_0 : i32, i32, i32, i32
  }
  func.func @transform_4(%arg0: i32, %arg1: i32) -> (i32, i32, i32, i32) {
    %c16_i32 = arith.constant 16 : i32
    %0 = arith.muli %arg1, %c16_i32 : i32
    %c1_i32 = arith.constant 1 : i32
    %1 = arith.subi %0, %c1_i32 : i32
    %c0_i32 = arith.constant 0 : i32
    %2 = arith.maxsi %1, %c0_i32 : i32
    %c0_i32_0 = arith.constant 0 : i32
    %c0_i32_1 = arith.constant 0 : i32
    %c0_i32_2 = arith.constant 0 : i32
    return %arg0, %2, %c0_i32_0, %c0_i32_1 : i32, i32, i32, i32
  }
  func.func @transform_5(%arg0: i32, %arg1: i32) -> (i32, i32, i32, i32) {
    %c1_i32 = arith.constant 1 : i32
    %0 = arith.addi %arg1, %c1_i32 : i32
    %c16_i32 = arith.constant 16 : i32
    %1 = arith.muli %0, %c16_i32 : i32
    %c31_i32 = arith.constant 31 : i32
    %2 = arith.minsi %1, %c31_i32 : i32
    %c0_i32 = arith.constant 0 : i32
    %c0_i32_0 = arith.constant 0 : i32
    %c0_i32_1 = arith.constant 0 : i32
    return %arg0, %2, %c0_i32, %c0_i32_0 : i32, i32, i32, i32
  }
  func.func @transform_6(%arg0: i32, %arg1: i32) -> (i32, i32) {
    %c0_i32 = arith.constant 0 : i32
    %c0_i32_0 = arith.constant 0 : i32
    %c0_i32_1 = arith.constant 0 : i32
    return %c0_i32, %c0_i32_0 : i32, i32
  }
  func.func @transform_7(%arg0: i32, %arg1: i32) -> (i32, i32) {
    %c0_i32 = arith.constant 0 : i32
    %c0_i32_0 = arith.constant 0 : i32
    %c0_i32_1 = arith.constant 0 : i32
    return %c0_i32, %c0_i32_0 : i32, i32
  }
  func.func @transform_8(%arg0: i32, %arg1: i32) -> (i32, i32) {
    %c0_i32 = arith.constant 0 : i32
    %c0_i32_0 = arith.constant 0 : i32
    %c0_i32_1 = arith.constant 0 : i32
    return %c0_i32, %c0_i32_0 : i32, i32
  }
  func.func @transform_9(%arg0: i32, %arg1: i32) -> (i32, i32, i32) {
    %c0_i32 = arith.constant 0 : i32
    %c0_i32_0 = arith.constant 0 : i32
    return %arg0, %arg1, %c0_i32 : i32, i32, i32
  }
}

</mosaic_0001>

<llo_original>
// kernel: tpu_custom_call.1
$region0: #{tpu_custom_call.1}
  #allocation0 [shape = 'u32[]', space=smem, size = 0x4, offset = 0x4, fixed_abs, tag = 'smem constant byte address 0x4 - core index']
  #allocation1 [shape = 'u32[144,128]{1,0:T(1,128)}', space=vmem, size = 0x12000, scoped, tag = 'internal scratch']
  #allocation2 [shape = 'f32[18,34,12]{2,1,0:T(8,128)}', space=vmem, size = 0x5a000, scoped, tag = 'scratch operand']
  #allocation3 [shape = 'f32[512,108]{1,0:T(8,128)}', space=vmem, size = 0x40000, scoped, tag = 'scratch operand']
  %s0 = inlined_call_operand.vmem [shape: f32[2,32,32,4], index: 0, kind: input, shape index: {}]
  %s1 = inlined_call_operand.vmem [shape: f32[2,32,32,4], index: 1, kind: input, shape index: {}]
  %s2 = inlined_call_operand.vmem [shape: f32[2,32,32,4], index: 2, kind: input, shape index: {}]
  %s3 = inlined_call_operand.vmem [shape: f32[2,32,32,8], index: 3, kind: input, shape index: {}]
  %s4 = inlined_call_operand.vmem [shape: f32[2,32,32,8], index: 4, kind: input, shape index: {}]
  %s5 = inlined_call_operand.vmem [shape: f32[2,32,32,8], index: 5, kind: input, shape index: {}]
  %s6 = inlined_call_operand.vmem [shape: f32[108,128], index: 6, kind: input, shape index: {}]
  %s7 = inlined_call_operand.vmem [shape: f32[1,128], index: 7, kind: input, shape index: {}]
  %s8 = inlined_call_operand.vmem [shape: f32[1,128], index: 8, kind: input, shape index: {}]
  %s9 = inlined_call_operand.hbm [shape: f32[2,1024,128], index: 9, kind: output, shape index: {}]
  %s10 = sld [smem:[#allocation0]]
  $region69: #{tpu_custom_call.1} parent=0
    _
  %s12 = ssub.s32 1, %s10
  %s13 = scalar_select 0, %s12, %s10
  $region1: #{tpu_custom_call.1} parent=0
    #allocation4 [shape = 'u8[524288]{0}', space=vmem, size = 0x80000, scoped, tag = 'output window, operand 0']
    #allocation5 [shape = 's32[2]{0}', space=sflag, size = 0x8, scoped, tag = 'scoped memory for tpu_custom_call.1']
    %14 = vsyncpa [#allocation5], 0
    %s15 = scalar_lea.sflag [#allocation5], 1
    %16 = vsyncpa %s15, 0
    loop: start=0, step=1, limit=6
    $region2: #{tpu_custom_call.1} parent=1 // loop_pre_header
      _
    $region3: #{tpu_custom_call.1} parent=1 // loop_header
      %s18 = sphi 0, %s22
      %p19 = scmp.ge.s32.totalorder %s18, 6
      %s25 = sphi 0, %s37
      %s26 = sphi 0, %s33
      %s27 = sphi 0, %s25
      %s28 = sphi 0, %s26
      %s29 = sphi 0, %s27
      %s30 = sphi 0, %s28
      %s42 = sphi 0, %s44
      %s45 = sphi 0, %s42
      %s46 = sphi 0, %s45
      %s62 = sphi 0, %s46
      %s78 = sphi 0, %s80
      %s81 = sphi 0, %s78
      %s82 = sphi 0, %s81
      %s98 = sphi 0, %s82
      %s114 = sphi 0, %s116
      %s117 = sphi 0, %s114
      %s118 = sphi 0, %s117
      %s134 = sphi 0, %s118
      %s142 = sphi 0, %s144
      %s145 = sphi 0, %s142
      %s146 = sphi 0, %s145
      %s162 = sphi 0, %s146
      %s178 = sphi 0, %s180
      %s181 = sphi 0, %s178
      %s182 = sphi 0, %s181
      %s198 = sphi 0, %s182
      %s214 = sphi 0, %s216
      %s217 = sphi 0, %s214
      %s218 = sphi 0, %s217
      %s234 = sphi 0, %s218
      %s238 = sphi 0, %s238
      %s240 = sphi 0, %s238
      %s241 = sphi 0, %s240
      %s255 = sphi 0, %s241
      %s259 = sphi 0, %s259
      %s261 = sphi 0, %s259
      %s262 = sphi 0, %s261
      %s276 = sphi 0, %s262
      %s280 = sphi 0, %s280
      %s282 = sphi 0, %s280
      %s283 = sphi 0, %s282
      %s297 = sphi 0, %s283
      %s305 = sphi 0, %s307
      %s308 = sphi 0, %s305
      %s309 = sphi 0, %s308
      %s325 = sphi 0, %s309
    $region4: #{tpu_custom_call.1} parent=1 // loop_header_branch
      %21 = sbr.rel (%p19) target = $region8
    $region5: #{tpu_custom_call.1} parent=1 // loop_body
      %s23 = ssub.s32 %s18, 1
      %s24 = ssub.s32 %s18, 2
      %s31 = sadd.s32 1, %s26
      %p32 = scmp.ge.s32.totalorder %s31, 2
      %s33 = scalar_select %p32, 0, %s31
      %s34 = sadd.s32 1, %s25
      %s35 = scalar_select %p32, %s34, %s25
      %p36 = scmp.ge.s32.totalorder %s35, 2
      %s37 = scalar_select %p36, 0, %s35
      %s38 = ssub.s32 %s25, %s37
      %s39 = ssub.s32 %s26, %s33
      %s40 = sor.u32 %s38, %s39
      %p41 = scmp.eq.s32.totalorder %s40, 0
      %s43 = sadd.s32 %s42, 1
      %s44 = scalar_select %p41, %s42, %s43
      %p47 = pneg %p41
      %p48 = scmp.eq.s32.totalorder %s18, 3
      %p49 = por %p47, %p48
      %p50 = scmp.ne.s32.totalorder %s42, %s45
      %p51 = scmp.eq.s32.totalorder %s18, 0
      %p52 = por %p50, %p51
      %p53 = scmp.ne.s32.totalorder %s42, %s45
      %p54 = scmp.eq.s32.totalorder %s23, 3
      %p55 = por %p53, %p54
      %p56 = scmp.ne.s32.totalorder %s45, %s46
      %p57 = scmp.eq.s32.totalorder %s23, 0
      %p58 = por %p56, %p57
      %p59 = scmp.ne.s32.totalorder %s45, %s46
      %p60 = scmp.eq.s32.totalorder %s24, 3
      %p61 = por %p59, %p60
      %p63 = scmp.ne.s32.totalorder %s46, %s62
      %p64 = scmp.eq.s32.totalorder %s24, 0
      %p65 = por %p63, %p64
      %s66 = smul.u32 %s26, 16
      %s67 = ssub.s32 %s66, 1
      %p68 = scmp.gt.s32.totalorder %s67, 0
      %s69 = scalar_select %p68, %s67, 0
      %s70 = smul.u32 %s33, 16
      %s71 = ssub.s32 %s70, 1
      %p72 = scmp.gt.s32.totalorder %s71, 0
      %s73 = scalar_select %p72, %s71, 0
      %s74 = ssub.s32 %s25, %s37
      %s75 = ssub.s32 %s69, %s73
      %s76 = sor.u32 %s74, %s75
      %p77 = scmp.eq.s32.totalorder %s76, 0
      %s79 = sadd.s32 %s78, 1
      %s80 = scalar_select %p77, %s78, %s79
      %p83 = pneg %p77
      %p84 = scmp.eq.s32.totalorder %s18, 3
      %p85 = por %p83, %p84
      %p86 = scmp.ne.s32.totalorder %s78, %s81
      %p87 = scmp.eq.s32.totalorder %s18, 0
      %p88 = por %p86, %p87
      %p89 = scmp.ne.s32.totalorder %s78, %s81
      %p90 = scmp.eq.s32.totalorder %s23, 3
      %p91 = por %p89, %p90
      %p92 = scmp.ne.s32.totalorder %s81, %s82
      %p93 = scmp.eq.s32.totalorder %s23, 0
      %p94 = por %p92, %p93
      %p95 = scmp.ne.s32.totalorder %s81, %s82
      %p96 = scmp.eq.s32.totalorder %s24, 3
      %p97 = por %p95, %p96
      %p99 = scmp.ne.s32.totalorder %s82, %s98
      %p100 = scmp.eq.s32.totalorder %s24, 0
      %p101 = por %p99, %p100
      %s102 = sadd.s32 %s26, 1
      %s103 = smul.u32 %s102, 16
      %p104 = scmp.lt.s32.totalorder %s103, 31
      %s105 = scalar_select %p104, %s103, 31
      %s106 = sadd.s32 %s33, 1
      %s107 = smul.u32 %s106, 16
      %p108 = scmp.lt.s32.totalorder %s107, 31
      %s109 = scalar_select %p108, %s107, 31
      %s110 = ssub.s32 %s25, %s37
      %s111 = ssub.s32 %s105, %s109
      %s112 = sor.u32 %s110, %s111
      %p113 = scmp.eq.s32.totalorder %s112, 0
      %s115 = sadd.s32 %s114, 1
      %s116 = scalar_select %p113, %s114, %s115
      %p119 = pneg %p113
      %p120 = scmp.eq.s32.totalorder %s18, 3
      %p121 = por %p119, %p120
      %p122 = scmp.ne.s32.totalorder %s114, %s117
      %p123 = scmp.eq.s32.totalorder %s18, 0
      %p124 = por %p122, %p123
      %p125 = scmp.ne.s32.totalorder %s114, %s117
      %p126 = scmp.eq.s32.totalorder %s23, 3
      %p127 = por %p125, %p126
      %p128 = scmp.ne.s32.totalorder %s117, %s118
      %p129 = scmp.eq.s32.totalorder %s23, 0
      %p130 = por %p128, %p129
      %p131 = scmp.ne.s32.totalorder %s117, %s118
      %p132 = scmp.eq.s32.totalorder %s24, 3
      %p133 = por %p131, %p132
      %p135 = scmp.ne.s32.totalorder %s118, %s134
      %p136 = scmp.eq.s32.totalorder %s24, 0
      %p137 = por %p135, %p136
      %s138 = ssub.s32 %s25, %s37
      %s139 = ssub.s32 %s26, %s33
      %s140 = sor.u32 %s138, %s139
      %p141 = scmp.eq.s32.totalorder %s140, 0
      %s143 = sadd.s32 %s142, 1
      %s144 = scalar_select %p141, %s142, %s143
      %p147 = pneg %p141
      %p148 = scmp.eq.s32.totalorder %s18, 3
      %p149 = por %p147, %p148
      %p150 = scmp.ne.s32.totalorder %s142, %s145
      %p151 = scmp.eq.s32.totalorder %s18, 0
      %p152 = por %p150, %p151
      %p153 = scmp.ne.s32.totalorder %s142, %s145
      %p154 = scmp.eq.s32.totalorder %s23, 3
      %p155 = por %p153, %p154
      %p156 = scmp.ne.s32.totalorder %s145, %s146
      %p157 = scmp.eq.s32.totalorder %s23, 0
      %p158 = por %p156, %p157
      %p159 = scmp.ne.s32.totalorder %s145, %s146
      %p160 = scmp.eq.s32.totalorder %s24, 3
      %p161 = por %p159, %p160
      %p163 = scmp.ne.s32.totalorder %s146, %s162
      %p164 = scmp.eq.s32.totalorder %s24, 0
      %p165 = por %p163, %p164
      %s166 = smul.u32 %s26, 16
      %s167 = ssub.s32 %s166, 1
      %p168 = scmp.gt.s32.totalorder %s167, 0
      %s169 = scalar_select %p168, %s167, 0
      %s170 = smul.u32 %s33, 16
      %s171 = ssub.s32 %s170, 1
      %p172 = scmp.gt.s32.totalorder %s171, 0
      %s173 = scalar_select %p172, %s171, 0
      %s174 = ssub.s32 %s25, %s37
      %s175 = ssub.s32 %s169, %s173
      %s176 = sor.u32 %s174, %s175
      %p177 = scmp.eq.s32.totalorder %s176, 0
      %s179 = sadd.s32 %s178, 1
      %s180 = scalar_select %p177, %s178, %s179
      %p183 = pneg %p177
      %p184 = scmp.eq.s32.totalorder %s18, 3
      %p185 = por %p183, %p184
      %p186 = scmp.ne.s32.totalorder %s178, %s181
      %p187 = scmp.eq.s32.totalorder %s18, 0
      %p188 = por %p186, %p187
      %p189 = scmp.ne.s32.totalorder %s178, %s181
      %p190 = scmp.eq.s32.totalorder %s23, 3
      %p191 = por %p189, %p190
      %p192 = scmp.ne.s32.totalorder %s181, %s182
      %p193 = scmp.eq.s32.totalorder %s23, 0
      %p194 = por %p192, %p193
      %p195 = scmp.ne.s32.totalorder %s181, %s182
      %p196 = scmp.eq.s32.totalorder %s24, 3
      %p197 = por %p195, %p196
      %p199 = scmp.ne.s32.totalorder %s182, %s198
      %p200 = scmp.eq.s32.totalorder %s24, 0
      %p201 = por %p199, %p200
      %s202 = sadd.s32 %s26, 1
      %s203 = smul.u32 %s202, 16
      %p204 = scmp.lt.s32.totalorder %s203, 31
      %s205 = scalar_select %p204, %s203, 31
      %s206 = sadd.s32 %s33, 1
      %s207 = smul.u32 %s206, 16
      %p208 = scmp.lt.s32.totalorder %s207, 31
      %s209 = scalar_select %p208, %s207, 31
      %s210 = ssub.s32 %s25, %s37
      %s211 = ssub.s32 %s205, %s209
      %s212 = sor.u32 %s210, %s211
      %p213 = scmp.eq.s32.totalorder %s212, 0
      %s215 = sadd.s32 %s214, 1
      %s216 = scalar_select %p213, %s214, %s215
      %p219 = pneg %p213
      %p220 = scmp.eq.s32.totalorder %s18, 3
      %p221 = por %p219, %p220
      %p222 = scmp.ne.s32.totalorder %s214, %s217
      %p223 = scmp.eq.s32.totalorder %s18, 0
      %p224 = por %p222, %p223
      %p225 = scmp.ne.s32.totalorder %s214, %s217
      %p226 = scmp.eq.s32.totalorder %s23, 3
      %p227 = por %p225, %p226
      %p228 = scmp.ne.s32.totalorder %s217, %s218
      %p229 = scmp.eq.s32.totalorder %s23, 0
      %p230 = por %p228, %p229
      %p231 = scmp.ne.s32.totalorder %s217, %s218
      %p232 = scmp.eq.s32.totalorder %s24, 3
      %p233 = por %p231, %p232
      %p235 = scmp.ne.s32.totalorder %s218, %s234
      %p236 = scmp.eq.s32.totalorder %s24, 0
      %p237 = por %p235, %p236
      %s239 = sadd.s32 %s238, 1
      %p242 = scmp.eq.s32.totalorder %s18, 3
      %p243 = scmp.ne.s32.totalorder %s238, %s240
      %p244 = scmp.eq.s32.totalorder %s18, 0
      %p245 = por %p243, %p244
      %p246 = scmp.ne.s32.totalorder %s238, %s240
      %p247 = scmp.eq.s32.totalorder %s23, 3
      %p248 = por %p246, %p247
      %p249 = scmp.ne.s32.totalorder %s240, %s241
      %p250 = scmp.eq.s32.totalorder %s23, 0
      %p251 = por %p249, %p250
      %p252 = scmp.ne.s32.totalorder %s240, %s241
      %p253 = scmp.eq.s32.totalorder %s24, 3
      %p254 = por %p252, %p253
      %p256 = scmp.ne.s32.totalorder %s241, %s255
      %p257 = scmp.eq.s32.totalorder %s24, 0
      %p258 = por %p256, %p257
      %s260 = sadd.s32 %s259, 1
      %p263 = scmp.eq.s32.totalorder %s18, 3
      %p264 = scmp.ne.s32.totalorder %s259, %s261
      %p265 = scmp.eq.s32.totalorder %s18, 0
      %p266 = por %p264, %p265
      %p267 = scmp.ne.s32.totalorder %s259, %s261
      %p268 = scmp.eq.s32.totalorder %s23, 3
      %p269 = por %p267, %p268
      %p270 = scmp.ne.s32.totalorder %s261, %s262
      %p271 = scmp.eq.s32.totalorder %s23, 0
      %p272 = por %p270, %p271
      %p273 = scmp.ne.s32.totalorder %s261, %s262
      %p274 = scmp.eq.s32.totalorder %s24, 3
      %p275 = por %p273, %p274
      %p277 = scmp.ne.s32.totalorder %s262, %s276
      %p278 = scmp.eq.s32.totalorder %s24, 0
      %p279 = por %p277, %p278
      %s281 = sadd.s32 %s280, 1
      %p284 = scmp.eq.s32.totalorder %s18, 3
      %p285 = scmp.ne.s32.totalorder %s280, %s282
      %p286 = scmp.eq.s32.totalorder %s18, 0
      %p287 = por %p285, %p286
      %p288 = scmp.ne.s32.totalorder %s280, %s282
      %p289 = scmp.eq.s32.totalorder %s23, 3
      %p290 = por %p288, %p289
      %p291 = scmp.ne.s32.totalorder %s282, %s283
      %p292 = scmp.eq.s32.totalorder %s23, 0
      %p293 = por %p291, %p292
      %p294 = scmp.ne.s32.totalorder %s282, %s283
      %p295 = scmp.eq.s32.totalorder %s24, 3
      %p296 = por %p294, %p295
      %p298 = scmp.ne.s32.totalorder %s283, %s297
      %p299 = scmp.eq.s32.totalorder %s24, 0
      %p300 = por %p298, %p299
      %s301 = ssub.s32 %s25, %s37
      %s302 = ssub.s32 %s26, %s33
      %s303 = sor.u32 %s301, %s302
      %p304 = scmp.eq.s32.totalorder %s303, 0
      %s306 = sadd.s32 %s305, 1
      %s307 = scalar_select %p304, %s305, %s306
      %p310 = pneg %p304
      %p311 = scmp.eq.s32.totalorder %s18, 3
      %p312 = por %p310, %p311
      %p313 = scmp.ne.s32.totalorder %s305, %s308
      %p314 = scmp.eq.s32.totalorder %s18, 0
      %p315 = por %p313, %p314
      %p316 = scmp.ne.s32.totalorder %s305, %s308
      %p317 = scmp.eq.s32.totalorder %s23, 3
      %p318 = por %p316, %p317
      %p319 = scmp.ne.s32.totalorder %s308, %s309
      %p320 = scmp.eq.s32.totalorder %s23, 0
      %p321 = por %p319, %p320
      %p322 = scmp.ne.s32.totalorder %s308, %s309
      %p323 = scmp.eq.s32.totalorder %s24, 3
      %p324 = por %p322, %p323
      %p326 = scmp.ne.s32.totalorder %s309, %s325
      %p327 = scmp.eq.s32.totalorder %s24, 0
      %p328 = por %p326, %p327
      %p329 = scmp.le.s32.totalorder 1, %s18
      %p330 = scmp.lt.s32.totalorder %s18, 5
      %p331 = pnand %p329, %p330
      %p332 = pneg %p331
      // Predicated region
      $region9: #{tpu_custom_call.1} parent=5 // pred_check
        _
      $region10: #{tpu_custom_call.1} parent=5 // pred_check_branch
        %334 = sbr.rel (%p331) target = $region12
      $region11: #{tpu_custom_call.1} parent=5 // pred_region
        %s335 = ssub.s32 %s18, 1
        // Predicated region
        $region13: #{tpu_custom_call.1} parent=11 // pred_check
          %p336 = pneg %p251
        $region14: #{tpu_custom_call.1} parent=11 // pred_check_branch
          %338 = sbr.rel (%p336) target = $region16
        $region15: #{tpu_custom_call.1} parent=11 // pred_region
          _
        $region16: #{tpu_custom_call.1} parent=11 // pred_fallthru
          _
        // Predicated region
        $region17: #{tpu_custom_call.1} parent=11 // pred_check
          %p339 = pneg %p272
        $region18: #{tpu_custom_call.1} parent=11 // pred_check_branch
          %341 = sbr.rel (%p339) target = $region20
        $region19: #{tpu_custom_call.1} parent=11 // pred_region
          _
        $region20: #{tpu_custom_call.1} parent=11 // pred_fallthru
          _
        // Predicated region
        $region21: #{tpu_custom_call.1} parent=11 // pred_check
          %p342 = pneg %p293
        $region22: #{tpu_custom_call.1} parent=11 // pred_check_branch
          %344 = sbr.rel (%p342) target = $region24
        $region23: #{tpu_custom_call.1} parent=11 // pred_region
          _
        $region24: #{tpu_custom_call.1} parent=11 // pred_fallthru
          _
      $region12: #{tpu_custom_call.1} parent=5 // pred_fallthru
        _
      %p345 = scmp.lt.s32.totalorder %s18, 4
      // Predicated region
      $region25: #{tpu_custom_call.1} parent=5 // pred_check
        %p346 = pneg %p345
      $region26: #{tpu_custom_call.1} parent=5 // pred_check_branch
        %348 = sbr.rel (%p346) target = $region28
      $region27: #{tpu_custom_call.1} parent=5 // pred_region
        // Predicated region
        $region29: #{tpu_custom_call.1} parent=27 // pred_check
          %p349 = pneg %p52
        $region30: #{tpu_custom_call.1} parent=27 // pred_check_branch
          %351 = sbr.rel (%p349) target = $region32
        $region31: #{tpu_custom_call.1} parent=27 // pred_region
          %s352 = smul.u32 16, %s26
          %p353 = scmp.lt.s32.totalorder %s25, 1
          %s354 = scalar_select %p353, %s25, 1
          %p355 = scmp.lt.s32.totalorder %s352, 31
          %s356 = scalar_select %p355, %s352, 31
          %s357 = smul.addr %s356, 4
          %s358 = smul.addr %s354, 128
          %s359 = sadd.s32 %s357, %s358
          %s360 = smul.addr %s359, 8
          %s361 = scalar_lea.vmem %s0, %s360
          %s362 = smul.u32 16, %s26
        $region32: #{tpu_custom_call.1} parent=27 // pred_fallthru
          _
        // Predicated region
        $region33: #{tpu_custom_call.1} parent=27 // pred_check
          %p363 = pneg %p88
        $region34: #{tpu_custom_call.1} parent=27 // pred_check_branch
          %365 = sbr.rel (%p363) target = $region36
        $region35: #{tpu_custom_call.1} parent=27 // pred_region
          %s366 = smul.u32 %s26, 16
          %s367 = ssub.s32 %s366, 1
          %p368 = scmp.gt.s32.totalorder %s367, 0
          %s369 = scalar_select %p368, %s367, 0
          %p370 = scmp.lt.s32.totalorder %s25, 1
          %s371 = scalar_select %p370, %s25, 1
          %p372 = scmp.lt.s32.totalorder %s369, 31
          %s373 = scalar_select %p372, %s369, 31
          %s374 = smul.addr %s373, 4
          %s375 = smul.addr %s371, 128
          %s376 = sadd.s32 %s374, %s375
          %s377 = smul.addr %s376, 8
          %s378 = scalar_lea.vmem %s1, %s377
          %s379 = smul.u32 %s26, 16
          %s380 = ssub.s32 %s379, 1
          %p381 = scmp.gt.s32.totalorder %s380, 0
          %s382 = scalar_select %p381, %s380, 0
        $region36: #{tpu_custom_call.1} parent=27 // pred_fallthru
          _
        // Predicated region
        $region37: #{tpu_custom_call.1} parent=27 // pred_check
          %p383 = pneg %p124
        $region38: #{tpu_custom_call.1} parent=27 // pred_check_branch
          %385 = sbr.rel (%p383) target = $region40
        $region39: #{tpu_custom_call.1} parent=27 // pred_region
          %s386 = sadd.s32 %s26, 1
          %s387 = smul.u32 %s386, 16
          %p388 = scmp.lt.s32.totalorder %s387, 31
          %s389 = scalar_select %p388, %s387, 31
          %p390 = scmp.lt.s32.totalorder %s25, 1
          %s391 = scalar_select %p390, %s25, 1
          %p392 = scmp.lt.s32.totalorder %s389, 31
          %s393 = scalar_select %p392, %s389, 31
          %s394 = smul.addr %s393, 4
          %s395 = smul.addr %s391, 128
          %s396 = sadd.s32 %s394, %s395
          %s397 = smul.addr %s396, 8
          %s398 = scalar_lea.vmem %s2, %s397
          %s399 = sadd.s32 %s26, 1
          %s400 = smul.u32 %s399, 16
          %p401 = scmp.lt.s32.totalorder %s400, 31
          %s402 = scalar_select %p401, %s400, 31
        $region40: #{tpu_custom_call.1} parent=27 // pred_fallthru
          _
        // Predicated region
        $region41: #{tpu_custom_call.1} parent=27 // pred_check
          %p403 = pneg %p152
        $region42: #{tpu_custom_call.1} parent=27 // pred_check_branch
          %405 = sbr.rel (%p403) target = $region44
        $region43: #{tpu_custom_call.1} parent=27 // pred_region
          %s406 = smul.u32 16, %s26
          %p407 = scmp.lt.s32.totalorder %s25, 1
          %s408 = scalar_select %p407, %s25, 1
          %p409 = scmp.lt.s32.totalorder %s406, 31
          %s410 = scalar_select %p409, %s406, 31
          %s411 = smul.addr %s410, 4
          %s412 = smul.addr %s408, 128
          %s413 = sadd.s32 %s411, %s412
          %s414 = smul.addr %s413, 8
          %s415 = scalar_lea.vmem %s3, %s414
          %s416 = smul.u32 16, %s26
        $region44: #{tpu_custom_call.1} parent=27 // pred_fallthru
          _
        // Predicated region
        $region45: #{tpu_custom_call.1} parent=27 // pred_check
          %p417 = pneg %p188
        $region46: #{tpu_custom_call.1} parent=27 // pred_check_branch
          %419 = sbr.rel (%p417) target = $region48
        $region47: #{tpu_custom_call.1} parent=27 // pred_region
          %s420 = smul.u32 %s26, 16
          %s421 = ssub.s32 %s420, 1
          %p422 = scmp.gt.s32.totalorder %s421, 0
          %s423 = scalar_select %p422, %s421, 0
          %p424 = scmp.lt.s32.totalorder %s25, 1
          %s425 = scalar_select %p424, %s25, 1
          %p426 = scmp.lt.s32.totalorder %s423, 31
          %s427 = scalar_select %p426, %s423, 31
          %s428 = smul.addr %s427, 4
          %s429 = smul.addr %s425, 128
          %s430 = sadd.s32 %s428, %s429
          %s431 = smul.addr %s430, 8
          %s432 = scalar_lea.vmem %s4, %s431
          %s433 = smul.u32 %s26, 16
          %s434 = ssub.s32 %s433, 1
          %p435 = scmp.gt.s32.totalorder %s434, 0
          %s436 = scalar_select %p435, %s434, 0
        $region48: #{tpu_custom_call.1} parent=27 // pred_fallthru
          _
        // Predicated region
        $region49: #{tpu_custom_call.1} parent=27 // pred_check
          %p437 = pneg %p224
        $region50: #{tpu_custom_call.1} parent=27 // pred_check_branch
          %439 = sbr.rel (%p437) target = $region52
        $region51: #{tpu_custom_call.1} parent=27 // pred_region
          %s440 = sadd.s32 %s26, 1
          %s441 = smul.u32 %s440, 16
          %p442 = scmp.lt.s32.totalorder %s441, 31
          %s443 = scalar_select %p442, %s441, 31
          %p444 = scmp.lt.s32.totalorder %s25, 1
          %s445 = scalar_select %p444, %s25, 1
          %p446 = scmp.lt.s32.totalorder %s443, 31
          %s447 = scalar_select %p446, %s443, 31
          %s448 = smul.addr %s447, 4
          %s449 = smul.addr %s445, 128
          %s450 = sadd.s32 %s448, %s449
          %s451 = smul.addr %s450, 8
          %s452 = scalar_lea.vmem %s5, %s451
          %s453 = sadd.s32 %s26, 1
          %s454 = smul.u32 %s453, 16
          %p455 = scmp.lt.s32.totalorder %s454, 31
          %s456 = scalar_select %p455, %s454, 31
        $region52: #{tpu_custom_call.1} parent=27 // pred_fallthru
          _
      $region28: #{tpu_custom_call.1} parent=5 // pred_fallthru
        _
      %p457 = scmp.le.s32.totalorder 1, %s18
      %p458 = scmp.lt.s32.totalorder %s18, 5
      %p459 = pnand %p457, %p458
      %p460 = pneg %p459
      // Predicated region
      $region53: #{tpu_custom_call.1} parent=5 // pred_check
        _
      $region54: #{tpu_custom_call.1} parent=5 // pred_check_branch
        %462 = sbr.rel (%p459) target = $region56
      $region55: #{tpu_custom_call.1} parent=5 // pred_region
        %s463 = ssub.s32 %s18, 1
        %s464 = smul.u32 16, %s28
        %p465 = scmp.lt.s32.totalorder %s27, 1
        %s466 = scalar_select %p465, %s27, 1
        %p467 = scmp.lt.s32.totalorder %s464, 31
        %s468 = scalar_select %p467, %s464, 31
        %s469 = smul.addr %s468, 4
        %s470 = smul.addr %s466, 128
        %s471 = sadd.s32 %s469, %s470
        %s472 = smul.addr %s471, 8
        %s473 = scalar_lea.vmem %s0, %s472
        %p474 = pneg %p58
        %p475 = pneg %p55
        %s476 = smul.u32 %s28, 16
        %s477 = ssub.s32 %s476, 1
        %p478 = scmp.gt.s32.totalorder %s477, 0
        %s479 = scalar_select %p478, %s477, 0
        %p480 = scmp.lt.s32.totalorder %s27, 1
        %s481 = scalar_select %p480, %s27, 1
        %p482 = scmp.lt.s32.totalorder %s479, 31
        %s483 = scalar_select %p482, %s479, 31
        %s484 = smul.addr %s483, 4
        %s485 = smul.addr %s481, 128
        %s486 = sadd.s32 %s484, %s485
        %s487 = smul.addr %s486, 8
        %s488 = scalar_lea.vmem %s1, %s487
        %p489 = pneg %p94
        %p490 = pneg %p91
        %s491 = sadd.s32 %s28, 1
        %s492 = smul.u32 %s491, 16
        %p493 = scmp.lt.s32.totalorder %s492, 31
        %s494 = scalar_select %p493, %s492, 31
        %p495 = scmp.lt.s32.totalorder %s27, 1
        %s496 = scalar_select %p495, %s27, 1
        %p497 = scmp.lt.s32.totalorder %s494, 31
        %s498 = scalar_select %p497, %s494, 31
        %s499 = smul.addr %s498, 4
        %s500 = smul.addr %s496, 128
        %s501 = sadd.s32 %s499, %s500
        %s502 = smul.addr %s501, 8
        %s503 = scalar_lea.vmem %s2, %s502
        %p504 = pneg %p130
        %p505 = pneg %p127
        %s506 = smul.u32 16, %s28
        %p507 = scmp.lt.s32.totalorder %s27, 1
        %s508 = scalar_select %p507, %s27, 1
        %p509 = scmp.lt.s32.totalorder %s506, 31
        %s510 = scalar_select %p509, %s506, 31
        %s511 = smul.addr %s510, 4
        %s512 = smul.addr %s508, 128
        %s513 = sadd.s32 %s511, %s512
        %s514 = smul.addr %s513, 8
        %s515 = scalar_lea.vmem %s3, %s514
        %p516 = pneg %p158
        %p517 = pneg %p155
        %s518 = smul.u32 %s28, 16
        %s519 = ssub.s32 %s518, 1
        %p520 = scmp.gt.s32.totalorder %s519, 0
        %s521 = scalar_select %p520, %s519, 0
        %p522 = scmp.lt.s32.totalorder %s27, 1
        %s523 = scalar_select %p522, %s27, 1
        %p524 = scmp.lt.s32.totalorder %s521, 31
        %s525 = scalar_select %p524, %s521, 31
        %s526 = smul.addr %s525, 4
        %s527 = smul.addr %s523, 128
        %s528 = sadd.s32 %s526, %s527
        %s529 = smul.addr %s528, 8
        %s530 = scalar_lea.vmem %s4, %s529
        %p531 = pneg %p194
        %p532 = pneg %p191
        %s533 = sadd.s32 %s28, 1
        %s534 = smul.u32 %s533, 16
        %p535 = scmp.lt.s32.totalorder %s534, 31
        %s536 = scalar_select %p535, %s534, 31
        %p537 = scmp.lt.s32.totalorder %s27, 1
        %s538 = scalar_select %p537, %s27, 1
        %p539 = scmp.lt.s32.totalorder %s536, 31
        %s540 = scalar_select %p539, %s536, 31
        %s541 = smul.addr %s540, 4
        %s542 = smul.addr %s538, 128
        %s543 = sadd.s32 %s541, %s542
        %s544 = smul.addr %s543, 8
        %s545 = scalar_lea.vmem %s5, %s544
        %p546 = pneg %p230
        %p547 = pneg %p227
        %p548 = pneg %p251
        %p549 = pneg %p248
        %p550 = pneg %p272
        %p551 = pneg %p269
        %p552 = pneg %p293
        %p553 = pneg %p290
        %p554 = pneg %p321
        %p555 = pneg %p318
        %s556 = sand.u32 %s308, 1
        %s557 = scalar_lea.sflag [#allocation5], %s556
        %s558 = sand.u32 %s308, 1
        %s559 = smul.addr %s558, 512
        %s560 = scalar_lea.vmem [#allocation4], %s559
        %s561 = smul.u32 16, %s28
        %p562 = scmp.lt.s32.totalorder %s27, 1
        %s563 = scalar_select %p562, %s27, 1
        %p564 = scmp.lt.s32.totalorder %s561, 31
        %s565 = scalar_select %p564, %s561, 31
        %s566 = smul.addr %s565, 4
        %s567 = smul.addr %s563, 128
        %s568 = sadd.s32 %s566, %s567
        %s569 = smul.addr %s568, 8
        %s570 = scalar_lea.vmem %s0, %s569
        %s571 = smul.u32 16, %s28
        %s572 = smul.u32 %s28, 16
        %s573 = ssub.s32 %s572, 1
        %p574 = scmp.gt.s32.totalorder %s573, 0
        %s575 = scalar_select %p574, %s573, 0
        %p576 = scmp.lt.s32.totalorder %s27, 1
        %s577 = scalar_select %p576, %s27, 1
        %p578 = scmp.lt.s32.totalorder %s575, 31
        %s579 = scalar_select %p578, %s575, 31
        %s580 = smul.addr %s579, 4
        %s581 = smul.addr %s577, 128
        %s582 = sadd.s32 %s580, %s581
        %s583 = smul.addr %s582, 8
        %s584 = scalar_lea.vmem %s1, %s583
        %s585 = smul.u32 %s28, 16
        %s586 = ssub.s32 %s585, 1
        %p587 = scmp.gt.s32.totalorder %s586, 0
        %s588 = scalar_select %p587, %s586, 0
        %s589 = sadd.s32 %s28, 1
        %s590 = smul.u32 %s589, 16
        %p591 = scmp.lt.s32.totalorder %s590, 31
        %s592 = scalar_select %p591, %s590, 31
        %p593 = scmp.lt.s32.totalorder %s27, 1
        %s594 = scalar_select %p593, %s27, 1
        %p595 = scmp.lt.s32.totalorder %s592, 31
        %s596 = scalar_select %p595, %s592, 31
        %s597 = smul.addr %s596, 4
        %s598 = smul.addr %s594, 128
        %s599 = sadd.s32 %s597, %s598
        %s600 = smul.addr %s599, 8
        %s601 = scalar_lea.vmem %s2, %s600
        %s602 = sadd.s32 %s28, 1
        %s603 = smul.u32 %s602, 16
        %p604 = scmp.lt.s32.totalorder %s603, 31
        %s605 = scalar_select %p604, %s603, 31
        %s606 = smul.u32 16, %s28
        %p607 = scmp.lt.s32.totalorder %s27, 1
        %s608 = scalar_select %p607, %s27, 1
        %p609 = scmp.lt.s32.totalorder %s606, 31
        %s610 = scalar_select %p609, %s606, 31
        %s611 = smul.addr %s610, 4
        %s612 = smul.addr %s608, 128
        %s613 = sadd.s32 %s611, %s612
        %s614 = smul.addr %s613, 8
        %s615 = scalar_lea.vmem %s3, %s614
        %s616 = smul.u32 16, %s28
        %s617 = smul.u32 %s28, 16
        %s618 = ssub.s32 %s617, 1
        %p619 = scmp.gt.s32.totalorder %s618, 0
        %s620 = scalar_select %p619, %s618, 0
        %p621 = scmp.lt.s32.totalorder %s27, 1
        %s622 = scalar_select %p621, %s27, 1
        %p623 = scmp.lt.s32.totalorder %s620, 31
        %s624 = scalar_select %p623, %s620, 31
        %s625 = smul.addr %s624, 4
        %s626 = smul.addr %s622, 128
        %s627 = sadd.s32 %s625, %s626
        %s628 = smul.addr %s627, 8
        %s629 = scalar_lea.vmem %s4, %s628
        %s630 = smul.u32 %s28, 16
        %s631 = ssub.s32 %s630, 1
        %p632 = scmp.gt.s32.totalorder %s631, 0
        %s633 = scalar_select %p632, %s631, 0
        %s634 = sadd.s32 %s28, 1
        %s635 = smul.u32 %s634, 16
        %p636 = scmp.lt.s32.totalorder %s635, 31
        %s637 = scalar_select %p636, %s635, 31
        %p638 = scmp.lt.s32.totalorder %s27, 1
        %s639 = scalar_select %p638, %s27, 1
        %p640 = scmp.lt.s32.totalorder %s637, 31
        %s641 = scalar_select %p640, %s637, 31
        %s642 = smul.addr %s641, 4
        %s643 = smul.addr %s639, 128
        %s644 = sadd.s32 %s642, %s643
        %s645 = smul.addr %s644, 8
        %s646 = scalar_lea.vmem %s5, %s645
        %s647 = sadd.s32 %s28, 1
        %s648 = smul.u32 %s647, 16
        %p649 = scmp.lt.s32.totalorder %s648, 31
        %s650 = scalar_select %p649, %s648, 31
        %s651 = smul.u32 64, %s28
        %p652 = scmp.gt.s32.totalorder %s28, 0
        %s653 = scalar_select %p652, 1.0, 0.0
        %p654 = scmp.lt.s32.totalorder %s28, 1
        %s655 = scalar_select %p654, 1.0, 0.0
        %vm656 = vcmask 97280
        %657 = vst.msk [vmem:[#allocation2] sm:$0xff] %vm656, 0.0
        %658 = vst.msk [vmem:[#allocation2 + $0x8] sm:$0xff] %vm656, 0.0
        %659 = vst.msk [vmem:[#allocation2 + $0x10] sm:$0xff] %vm656, 0.0
        %660 = vst.msk [vmem:[#allocation2 + $0x18] sm:$0xff] %vm656, 0.0
        %vm661 = vcmask 91136
        %662 = vst.msk [vmem:[#allocation2 + $0x20] sm:$0x3] %vm661, 0.0
        %663 = vst.msk [vmem:[#allocation2 + $0x28] sm:$0xff] %vm656, 0.0
        %664 = vst.msk [vmem:[#allocation2 + $0x30] sm:$0xff] %vm656, 0.0
        %665 = vst.msk [vmem:[#allocation2 + $0x38] sm:$0xff] %vm656, 0.0
        %666 = vst.msk [vmem:[#allocation2 + $0x40] sm:$0xff] %vm656, 0.0
        %667 = vst.msk [vmem:[#allocation2 + $0x48] sm:$0x3] %vm661, 0.0
        %668 = vst.msk [vmem:[#allocation2 + $0x50] sm:$0xff] %vm656, 0.0
        %669 = vst.msk [vmem:[#allocation2 + $0x58] sm:$0xff] %vm656, 0.0
        %670 = vst.msk [vmem:[#allocation2 + $0x60] sm:$0xff] %vm656, 0.0
        %671 = vst.msk [vmem:[#allocation2 + $0x68] sm:$0xff] %vm656, 0.0
        %672 = vst.msk [vmem:[#allocation2 + $0x70] sm:$0x3] %vm661, 0.0
        %673 = vst.msk [vmem:[#allocation2 + $0x78] sm:$0xff] %vm656, 0.0
        %674 = vst.msk [vmem:[#allocation2 + $0x80] sm:$0xff] %vm656, 0.0
        %675 = vst.msk [vmem:[#allocation2 + $0x88] sm:$0xff] %vm656, 0.0
        %676 = vst.msk [vmem:[#allocation2 + $0x90] sm:$0xff] %vm656, 0.0
        %677 = vst.msk [vmem:[#allocation2 + $0x98] sm:$0x3] %vm661, 0.0
        %678 = vst.msk [vmem:[#allocation2 + $0xa0] sm:$0xff] %vm656, 0.0
        %679 = vst.msk [vmem:[#allocation2 + $0xa8] sm:$0xff] %vm656, 0.0
        %680 = vst.msk [vmem:[#allocation2 + $0xb0] sm:$0xff] %vm656, 0.0
        %681 = vst.msk [vmem:[#allocation2 + $0xb8] sm:$0xff] %vm656, 0.0
        %682 = vst.msk [vmem:[#allocation2 + $0xc0] sm:$0x3] %vm661, 0.0
        %683 = vst.msk [vmem:[#allocation2 + $0xc8] sm:$0xff] %vm656, 0.0
        %684 = vst.msk [vmem:[#allocation2 + $0xd0] sm:$0xff] %vm656, 0.0
        %685 = vst.msk [vmem:[#allocation2 + $0xd8] sm:$0xff] %vm656, 0.0
        %686 = vst.msk [vmem:[#allocation2 + $0xe0] sm:$0xff] %vm656, 0.0
        %687 = vst.msk [vmem:[#allocation2 + $0xe8] sm:$0x3] %vm661, 0.0
        %688 = vst.msk [vmem:[#allocation2 + $0xf0] sm:$0xff] %vm656, 0.0
        %689 = vst.msk [vmem:[#allocation2 + $0xf8] sm:$0xff] %vm656, 0.0
        %690 = vst.msk [vmem:[#allocation2 + $0x100] sm:$0xff] %vm656, 0.0
        %691 = vst.msk [vmem:[#allocation2 + $0x108] sm:$0xff] %vm656, 0.0
        %692 = vst.msk [vmem:[#allocation2 + $0x110] sm:$0x3] %vm661, 0.0
        %693 = vst.msk [vmem:[#allocation2 + $0x118] sm:$0xff] %vm656, 0.0
        %694 = vst.msk [vmem:[#allocation2 + $0x120] sm:$0xff] %vm656, 0.0
        %695 = vst.msk [vmem:[#allocation2 + $0x128] sm:$0xff] %vm656, 0.0
        %696 = vst.msk [vmem:[#allocation2 + $0x130] sm:$0xff] %vm656, 0.0
        %697 = vst.msk [vmem:[#allocation2 + $0x138] sm:$0x3] %vm661, 0.0
        %698 = vst.msk [vmem:[#allocation2 + $0x140] sm:$0xff] %vm656, 0.0
        %699 = vst.msk [vmem:[#allocation2 + $0x148] sm:$0xff] %vm656, 0.0
        %700 = vst.msk [vmem:[#allocation2 + $0x150] sm:$0xff] %vm656, 0.0
        %701 = vst.msk [vmem:[#allocation2 + $0x158] sm:$0xff] %vm656, 0.0
        %702 = vst.msk [vmem:[#allocation2 + $0x160] sm:$0x3] %vm661, 0.0
        %703 = vst.msk [vmem:[#allocation2 + $0x168] sm:$0xff] %vm656, 0.0
        %704 = vst.msk [vmem:[#allocation2 + $0x170] sm:$0xff] %vm656, 0.0
        %705 = vst.msk [vmem:[#allocation2 + $0x178] sm:$0xff] %vm656, 0.0
        %706 = vst.msk [vmem:[#allocation2 + $0x180] sm:$0xff] %vm656, 0.0
        %707 = vst.msk [vmem:[#allocation2 + $0x188] sm:$0x3] %vm661, 0.0
        %708 = vst.msk [vmem:[#allocation2 + $0x190] sm:$0xff] %vm656, 0.0
        %709 = vst.msk [vmem:[#allocation2 + $0x198] sm:$0xff] %vm656, 0.0
        %710 = vst.msk [vmem:[#allocation2 + $0x1a0] sm:$0xff] %vm656, 0.0
        %711 = vst.msk [vmem:[#allocation2 + $0x1a8] sm:$0xff] %vm656, 0.0
        %712 = vst.msk [vmem:[#allocation2 + $0x1b0] sm:$0x3] %vm661, 0.0
        %713 = vst.msk [vmem:[#allocation2 + $0x1b8] sm:$0xff] %vm656, 0.0
        %714 = vst.msk [vmem:[#allocation2 + $0x1c0] sm:$0xff] %vm656, 0.0
        %715 = vst.msk [vmem:[#allocation2 + $0x1c8] sm:$0xff] %vm656, 0.0
        %716 = vst.msk [vmem:[#allocation2 + $0x1d0] sm:$0xff] %vm656, 0.0
        %717 = vst.msk [vmem:[#allocation2 + $0x1d8] sm:$0x3] %vm661, 0.0
        %718 = vst.msk [vmem:[#allocation2 + $0x1e0] sm:$0xff] %vm656, 0.0
        %719 = vst.msk [vmem:[#allocation2 + $0x1e8] sm:$0xff] %vm656, 0.0
        %720 = vst.msk [vmem:[#allocation2 + $0x1f0] sm:$0xff] %vm656, 0.0
        %721 = vst.msk [vmem:[#allocation2 + $0x1f8] sm:$0xff] %vm656, 0.0
        %722 = vst.msk [vmem:[#allocation2 + $0x200] sm:$0x3] %vm661, 0.0
        %723 = vst.msk [vmem:[#allocation2 + $0x208] sm:$0xff] %vm656, 0.0
        %724 = vst.msk [vmem:[#allocation2 + $0x210] sm:$0xff] %vm656, 0.0
        %725 = vst.msk [vmem:[#allocation2 + $0x218] sm:$0xff] %vm656, 0.0
        %726 = vst.msk [vmem:[#allocation2 + $0x220] sm:$0xff] %vm656, 0.0
        %727 = vst.msk [vmem:[#allocation2 + $0x228] sm:$0x3] %vm661, 0.0
        %728 = vst.msk [vmem:[#allocation2 + $0x230] sm:$0xff] %vm656, 0.0
        %729 = vst.msk [vmem:[#allocation2 + $0x238] sm:$0xff] %vm656, 0.0
        %730 = vst.msk [vmem:[#allocation2 + $0x240] sm:$0xff] %vm656, 0.0
        %731 = vst.msk [vmem:[#allocation2 + $0x248] sm:$0xff] %vm656, 0.0
        %732 = vst.msk [vmem:[#allocation2 + $0x250] sm:$0x3] %vm661, 0.0
        %733 = vst.msk [vmem:[#allocation2 + $0x258] sm:$0xff] %vm656, 0.0
        %734 = vst.msk [vmem:[#allocation2 + $0x260] sm:$0xff] %vm656, 0.0
        %735 = vst.msk [vmem:[#allocation2 + $0x268] sm:$0xff] %vm656, 0.0
        %736 = vst.msk [vmem:[#allocation2 + $0x270] sm:$0xff] %vm656, 0.0
        %737 = vst.msk [vmem:[#allocation2 + $0x278] sm:$0x3] %vm661, 0.0
        %738 = vst.msk [vmem:[#allocation2 + $0x280] sm:$0xff] %vm656, 0.0
        %739 = vst.msk [vmem:[#allocation2 + $0x288] sm:$0xff] %vm656, 0.0
        %740 = vst.msk [vmem:[#allocation2 + $0x290] sm:$0xff] %vm656, 0.0
        %741 = vst.msk [vmem:[#allocation2 + $0x298] sm:$0xff] %vm656, 0.0
        %742 = vst.msk [vmem:[#allocation2 + $0x2a0] sm:$0x3] %vm661, 0.0
        %743 = vst.msk [vmem:[#allocation2 + $0x2a8] sm:$0xff] %vm656, 0.0
        %744 = vst.msk [vmem:[#allocation2 + $0x2b0] sm:$0xff] %vm656, 0.0
        %745 = vst.msk [vmem:[#allocation2 + $0x2b8] sm:$0xff] %vm656, 0.0
        %746 = vst.msk [vmem:[#allocation2 + $0x2c0] sm:$0xff] %vm656, 0.0
        %747 = vst.msk [vmem:[#allocation2 + $0x2c8] sm:$0x3] %vm661, 0.0
        %v748 = vld [vmem:[%s570] sm:$0xff]
        %v749 = vld [vmem:[%s570 + $0x8] sm:$0xff]
        %v750 = vld [vmem:[%s570 + $0x10] sm:$0xff]
        %v751 = vld [vmem:[%s570 + $0x18] sm:$0xff]
        %v752 = vld [vmem:[%s570 + $0x20] sm:$0xff]
        %v753 = vld [vmem:[%s570 + $0x28] sm:$0xff]
        %v754 = vld [vmem:[%s570 + $0x30] sm:$0xff]
        %v755 = vld [vmem:[%s570 + $0x38] sm:$0xff]
        %v756 = vld [vmem:[%s570 + $0x40] sm:$0xff]
        %v757 = vld [vmem:[%s570 + $0x48] sm:$0xff]
        %v758 = vld [vmem:[%s570 + $0x50] sm:$0xff]
        %v759 = vld [vmem:[%s570 + $0x58] sm:$0xff]
        %v760 = vld [vmem:[%s570 + $0x60] sm:$0xff]
        %v761 = vld [vmem:[%s570 + $0x68] sm:$0xff]
        %v762 = vld [vmem:[%s570 + $0x70] sm:$0xff]
        %v763 = vld [vmem:[%s570 + $0x78] sm:$0xff]
        %v764 = vld [vmem:[%s570 + $0x80] sm:$0xff]
        %v765 = vld [vmem:[%s570 + $0x88] sm:$0xff]
        %v766 = vld [vmem:[%s570 + $0x90] sm:$0xff]
        %v767 = vld [vmem:[%s570 + $0x98] sm:$0xff]
        %v768 = vld [vmem:[%s570 + $0xa0] sm:$0xff]
        %v769 = vld [vmem:[%s570 + $0xa8] sm:$0xff]
        %v770 = vld [vmem:[%s570 + $0xb0] sm:$0xff]
        %v771 = vld [vmem:[%s570 + $0xb8] sm:$0xff]
        %v772 = vld [vmem:[%s570 + $0xc0] sm:$0xff]
        %v773 = vld [vmem:[%s570 + $0xc8] sm:$0xff]
        %v774 = vld [vmem:[%s570 + $0xd0] sm:$0xff]
        %v775 = vld [vmem:[%s570 + $0xd8] sm:$0xff]
        %v776 = vld [vmem:[%s570 + $0xe0] sm:$0xff]
        %v777 = vld [vmem:[%s570 + $0xe8] sm:$0xff]
        %v778 = vld [vmem:[%s570 + $0xf0] sm:$0xff]
        %v779 = vld [vmem:[%s570 + $0xf8] sm:$0xff]
        %v780 = vld [vmem:[%s570 + $0x100] sm:$0xff]
        %v781 = vld [vmem:[%s570 + $0x108] sm:$0xff]
        %v782 = vld [vmem:[%s570 + $0x110] sm:$0xff]
        %v783 = vld [vmem:[%s570 + $0x118] sm:$0xff]
        %v784 = vld [vmem:[%s570 + $0x120] sm:$0xff]
        %v785 = vld [vmem:[%s570 + $0x128] sm:$0xff]
        %v786 = vld [vmem:[%s570 + $0x130] sm:$0xff]
        %v787 = vld [vmem:[%s570 + $0x138] sm:$0xff]
        %v788 = vld [vmem:[%s570 + $0x140] sm:$0xff]
        %v789 = vld [vmem:[%s570 + $0x148] sm:$0xff]
        %v790 = vld [vmem:[%s570 + $0x150] sm:$0xff]
        %v791 = vld [vmem:[%s570 + $0x158] sm:$0xff]
        %v792 = vld [vmem:[%s570 + $0x160] sm:$0xff]
        %v793 = vld [vmem:[%s570 + $0x168] sm:$0xff]
        %v794 = vld [vmem:[%s570 + $0x170] sm:$0xff]
        %v795 = vld [vmem:[%s570 + $0x178] sm:$0xff]
        %v796 = vld [vmem:[%s570 + $0x180] sm:$0xff]
        %v797 = vld [vmem:[%s570 + $0x188] sm:$0xff]
        %v798 = vld [vmem:[%s570 + $0x190] sm:$0xff]
        %v799 = vld [vmem:[%s570 + $0x198] sm:$0xff]
        %v800 = vld [vmem:[%s570 + $0x1a0] sm:$0xff]
        %v801 = vld [vmem:[%s570 + $0x1a8] sm:$0xff]
        %v802 = vld [vmem:[%s570 + $0x1b0] sm:$0xff]
        %v803 = vld [vmem:[%s570 + $0x1b8] sm:$0xff]
        %v804 = vld [vmem:[%s570 + $0x1c0] sm:$0xff]
        %v805 = vld [vmem:[%s570 + $0x1c8] sm:$0xff]
        %v806 = vld [vmem:[%s570 + $0x1d0] sm:$0xff]
        %v807 = vld [vmem:[%s570 + $0x1d8] sm:$0xff]
        %v808 = vld [vmem:[%s570 + $0x1e0] sm:$0xff]
        %v809 = vld [vmem:[%s570 + $0x1e8] sm:$0xff]
        %v810 = vld [vmem:[%s570 + $0x1f0] sm:$0xff]
        %v811 = vld [vmem:[%s570 + $0x1f8] sm:$0xff]
        %v812 = vld [vmem:[%s584] sm:$0xff]
        %v813 = vld [vmem:[%s584 + $0x8] sm:$0xff]
        %v814 = vld [vmem:[%s584 + $0x10] sm:$0xff]
        %v815 = vld [vmem:[%s584 + $0x18] sm:$0xff]
        %v816 = vstv %s653
        %v817 = vmul.f32 %v812, %v816
        %v818 = vmul.f32 %v813, %v816
        %v819 = vmul.f32 %v814, %v816
        %v820 = vmul.f32 %v815, %v816
        %v821 = vld [vmem:[%s601] sm:$0xff]
        %v822 = vld [vmem:[%s601 + $0x8] sm:$0xff]
        %v823 = vld [vmem:[%s601 + $0x10] sm:$0xff]
        %v824 = vld [vmem:[%s601 + $0x18] sm:$0xff]
        %v825 = vstv %s655
        %v826 = vmul.f32 %v821, %v825
        %v827 = vmul.f32 %v822, %v825
        %v828 = vmul.f32 %v823, %v825
        %v829 = vmul.f32 %v824, %v825
        %s830 = scalar_lea.vmem [#allocation2], 40
        %vm831 = vcmask 31744
        %832 = vst.msk [vmem:[%s830 + $0x1] sm:$0xff] %vm831, %v748
        %833 = vst.msk [vmem:[%s830 + $0x9] sm:$0xff] %vm831, %v749
        %834 = vst.msk [vmem:[%s830 + $0x11] sm:$0xff] %vm831, %v750
        %835 = vst.msk [vmem:[%s830 + $0x19] sm:$0xff] %vm831, %v751
        %836 = vst.msk [vmem:[%s830 + $0x29] sm:$0xff] %vm831, %v752
        %837 = vst.msk [vmem:[%s830 + $0x31] sm:$0xff] %vm831, %v753
        %838 = vst.msk [vmem:[%s830 + $0x39] sm:$0xff] %vm831, %v754
        %839 = vst.msk [vmem:[%s830 + $0x41] sm:$0xff] %vm831, %v755
        %840 = vst.msk [vmem:[%s830 + $0x51] sm:$0xff] %vm831, %v756
        %841 = vst.msk [vmem:[%s830 + $0x59] sm:$0xff] %vm831, %v757
        %842 = vst.msk [vmem:[%s830 + $0x61] sm:$0xff] %vm831, %v758
        %843 = vst.msk [vmem:[%s830 + $0x69] sm:$0xff] %vm831, %v759
        %844 = vst.msk [vmem:[%s830 + $0x79] sm:$0xff] %vm831, %v760
        %845 = vst.msk [vmem:[%s830 + $0x81] sm:$0xff] %vm831, %v761
        %846 = vst.msk [vmem:[%s830 + $0x89] sm:$0xff] %vm831, %v762
        %847 = vst.msk [vmem:[%s830 + $0x91] sm:$0xff] %vm831, %v763
        %848 = vst.msk [vmem:[%s830 + $0xa1] sm:$0xff] %vm831, %v764
        %849 = vst.msk [vmem:[%s830 + $0xa9] sm:$0xff] %vm831, %v765
        %850 = vst.msk [vmem:[%s830 + $0xb1] sm:$0xff] %vm831, %v766
        %851 = vst.msk [vmem:[%s830 + $0xb9] sm:$0xff] %vm831, %v767
        %852 = vst.msk [vmem:[%s830 + $0xc9] sm:$0xff] %vm831, %v768
        %853 = vst.msk [vmem:[%s830 + $0xd1] sm:$0xff] %vm831, %v769
        %854 = vst.msk [vmem:[%s830 + $0xd9] sm:$0xff] %vm831, %v770
        %855 = vst.msk [vmem:[%s830 + $0xe1] sm:$0xff] %vm831, %v771
        %856 = vst.msk [vmem:[%s830 + $0xf1] sm:$0xff] %vm831, %v772
        %857 = vst.msk [vmem:[%s830 + $0xf9] sm:$0xff] %vm831, %v773
        %858 = vst.msk [vmem:[%s830 + $0x101] sm:$0xff] %vm831, %v774
        %859 = vst.msk [vmem:[%s830 + $0x109] sm:$0xff] %vm831, %v775
        %860 = vst.msk [vmem:[%s830 + $0x119] sm:$0xff] %vm831, %v776
        %861 = vst.msk [vmem:[%s830 + $0x121] sm:$0xff] %vm831, %v777
        %862 = vst.msk [vmem:[%s830 + $0x129] sm:$0xff] %vm831, %v778
        %863 = vst.msk [vmem:[%s830 + $0x131] sm:$0xff] %vm831, %v779
        %864 = vst.msk [vmem:[%s830 + $0x141] sm:$0xff] %vm831, %v780
        %865 = vst.msk [vmem:[%s830 + $0x149] sm:$0xff] %vm831, %v781
        %866 = vst.msk [vmem:[%s830 + $0x151] sm:$0xff] %vm831, %v782
        %867 = vst.msk [vmem:[%s830 + $0x159] sm:$0xff] %vm831, %v783
        %868 = vst.msk [vmem:[%s830 + $0x169] sm:$0xff] %vm831, %v784
        %869 = vst.msk [vmem:[%s830 + $0x171] sm:$0xff] %vm831, %v785
        %870 = vst.msk [vmem:[%s830 + $0x179] sm:$0xff] %vm831, %v786
        %871 = vst.msk [vmem:[%s830 + $0x181] sm:$0xff] %vm831, %v787
        %872 = vst.msk [vmem:[%s830 + $0x191] sm:$0xff] %vm831, %v788
        %873 = vst.msk [vmem:[%s830 + $0x199] sm:$0xff] %vm831, %v789
        %874 = vst.msk [vmem:[%s830 + $0x1a1] sm:$0xff] %vm831, %v790
        %875 = vst.msk [vmem:[%s830 + $0x1a9] sm:$0xff] %vm831, %v791
        %876 = vst.msk [vmem:[%s830 + $0x1b9] sm:$0xff] %vm831, %v792
        %877 = vst.msk [vmem:[%s830 + $0x1c1] sm:$0xff] %vm831, %v793
        %878 = vst.msk [vmem:[%s830 + $0x1c9] sm:$0xff] %vm831, %v794
        %879 = vst.msk [vmem:[%s830 + $0x1d1] sm:$0xff] %vm831, %v795
        %880 = vst.msk [vmem:[%s830 + $0x1e1] sm:$0xff] %vm831, %v796
        %881 = vst.msk [vmem:[%s830 + $0x1e9] sm:$0xff] %vm831, %v797
        %882 = vst.msk [vmem:[%s830 + $0x1f1] sm:$0xff] %vm831, %v798
        %883 = vst.msk [vmem:[%s830 + $0x1f9] sm:$0xff] %vm831, %v799
        %884 = vst.msk [vmem:[%s830 + $0x209] sm:$0xff] %vm831, %v800
        %885 = vst.msk [vmem:[%s830 + $0x211] sm:$0xff] %vm831, %v801
        %886 = vst.msk [vmem:[%s830 + $0x219] sm:$0xff] %vm831, %v802
        %887 = vst.msk [vmem:[%s830 + $0x221] sm:$0xff] %vm831, %v803
        %888 = vst.msk [vmem:[%s830 + $0x231] sm:$0xff] %vm831, %v804
        %889 = vst.msk [vmem:[%s830 + $0x239] sm:$0xff] %vm831, %v805
        %890 = vst.msk [vmem:[%s830 + $0x241] sm:$0xff] %vm831, %v806
        %891 = vst.msk [vmem:[%s830 + $0x249] sm:$0xff] %vm831, %v807
        %892 = vst.msk [vmem:[%s830 + $0x259] sm:$0xff] %vm831, %v808
        %893 = vst.msk [vmem:[%s830 + $0x261] sm:$0xff] %vm831, %v809
        %894 = vst.msk [vmem:[%s830 + $0x269] sm:$0xff] %vm831, %v810
        %895 = vst.msk [vmem:[%s830 + $0x271] sm:$0xff] %vm831, %v811
        %896 = vst.msk [vmem:[#allocation2 + $0x1] sm:$0xff] %vm831, %v817
        %897 = vst.msk [vmem:[#allocation2 + $0x9] sm:$0xff] %vm831, %v818
        %898 = vst.msk [vmem:[#allocation2 + $0x11] sm:$0xff] %vm831, %v819
        %899 = vst.msk [vmem:[#allocation2 + $0x19] sm:$0xff] %vm831, %v820
        %s900 = scalar_lea.vmem [#allocation2], 680
        %901 = vst.msk [vmem:[%s900 + $0x1] sm:$0xff] %vm831, %v826
        %902 = vst.msk [vmem:[%s900 + $0x9] sm:$0xff] %vm831, %v827
        %903 = vst.msk [vmem:[%s900 + $0x11] sm:$0xff] %vm831, %v828
        %904 = vst.msk [vmem:[%s900 + $0x19] sm:$0xff] %vm831, %v829
        %v905 = vld [vmem:[%s615] sm:$0xff]
        %v906 = vld [vmem:[%s615 + $0x8] sm:$0xff]
        %v907 = vld [vmem:[%s615 + $0x10] sm:$0xff]
        %v908 = vld [vmem:[%s615 + $0x18] sm:$0xff]
        %v909 = vld [vmem:[%s615 + $0x20] sm:$0xff]
        %v910 = vld [vmem:[%s615 + $0x28] sm:$0xff]
        %v911 = vld [vmem:[%s615 + $0x30] sm:$0xff]
        %v912 = vld [vmem:[%s615 + $0x38] sm:$0xff]
        %v913 = vld [vmem:[%s615 + $0x40] sm:$0xff]
        %v914 = vld [vmem:[%s615 + $0x48] sm:$0xff]
        %v915 = vld [vmem:[%s615 + $0x50] sm:$0xff]
        %v916 = vld [vmem:[%s615 + $0x58] sm:$0xff]
        %v917 = vld [vmem:[%s615 + $0x60] sm:$0xff]
        %v918 = vld [vmem:[%s615 + $0x68] sm:$0xff]
        %v919 = vld [vmem:[%s615 + $0x70] sm:$0xff]
        %v920 = vld [vmem:[%s615 + $0x78] sm:$0xff]
        %v921 = vld [vmem:[%s615 + $0x80] sm:$0xff]
        %v922 = vld [vmem:[%s615 + $0x88] sm:$0xff]
        %v923 = vld [vmem:[%s615 + $0x90] sm:$0xff]
        %v924 = vld [vmem:[%s615 + $0x98] sm:$0xff]
        %v925 = vld [vmem:[%s615 + $0xa0] sm:$0xff]
        %v926 = vld [vmem:[%s615 + $0xa8] sm:$0xff]
        %v927 = vld [vmem:[%s615 + $0xb0] sm:$0xff]
        %v928 = vld [vmem:[%s615 + $0xb8] sm:$0xff]
        %v929 = vld [vmem:[%s615 + $0xc0] sm:$0xff]
        %v930 = vld [vmem:[%s615 + $0xc8] sm:$0xff]
        %v931 = vld [vmem:[%s615 + $0xd0] sm:$0xff]
        %v932 = vld [vmem:[%s615 + $0xd8] sm:$0xff]
        %v933 = vld [vmem:[%s615 + $0xe0] sm:$0xff]
        %v934 = vld [vmem:[%s615 + $0xe8] sm:$0xff]
        %v935 = vld [vmem:[%s615 + $0xf0] sm:$0xff]
        %v936 = vld [vmem:[%s615 + $0xf8] sm:$0xff]
        %v937 = vld [vmem:[%s615 + $0x100] sm:$0xff]
        %v938 = vld [vmem:[%s615 + $0x108] sm:$0xff]
        %v939 = vld [vmem:[%s615 + $0x110] sm:$0xff]
        %v940 = vld [vmem:[%s615 + $0x118] sm:$0xff]
        %v941 = vld [vmem:[%s615 + $0x120] sm:$0xff]
        %v942 = vld [vmem:[%s615 + $0x128] sm:$0xff]
        %v943 = vld [vmem:[%s615 + $0x130] sm:$0xff]
        %v944 = vld [vmem:[%s615 + $0x138] sm:$0xff]
        %v945 = vld [vmem:[%s615 + $0x140] sm:$0xff]
        %v946 = vld [vmem:[%s615 + $0x148] sm:$0xff]
        %v947 = vld [vmem:[%s615 + $0x150] sm:$0xff]
        %v948 = vld [vmem:[%s615 + $0x158] sm:$0xff]
        %v949 = vld [vmem:[%s615 + $0x160] sm:$0xff]
        %v950 = vld [vmem:[%s615 + $0x168] sm:$0xff]
        %v951 = vld [vmem:[%s615 + $0x170] sm:$0xff]
        %v952 = vld [vmem:[%s615 + $0x178] sm:$0xff]
        %v953 = vld [vmem:[%s615 + $0x180] sm:$0xff]
        %v954 = vld [vmem:[%s615 + $0x188] sm:$0xff]
        %v955 = vld [vmem:[%s615 + $0x190] sm:$0xff]
        %v956 = vld [vmem:[%s615 + $0x198] sm:$0xff]
        %v957 = vld [vmem:[%s615 + $0x1a0] sm:$0xff]
        %v958 = vld [vmem:[%s615 + $0x1a8] sm:$0xff]
        %v959 = vld [vmem:[%s615 + $0x1b0] sm:$0xff]
        %v960 = vld [vmem:[%s615 + $0x1b8] sm:$0xff]
        %v961 = vld [vmem:[%s615 + $0x1c0] sm:$0xff]
        %v962 = vld [vmem:[%s615 + $0x1c8] sm:$0xff]
        %v963 = vld [vmem:[%s615 + $0x1d0] sm:$0xff]
        %v964 = vld [vmem:[%s615 + $0x1d8] sm:$0xff]
        %v965 = vld [vmem:[%s615 + $0x1e0] sm:$0xff]
        %v966 = vld [vmem:[%s615 + $0x1e8] sm:$0xff]
        %v967 = vld [vmem:[%s615 + $0x1f0] sm:$0xff]
        %v968 = vld [vmem:[%s615 + $0x1f8] sm:$0xff]
        %v969 = vld [vmem:[%s629] sm:$0xff]
        %v970 = vld [vmem:[%s629 + $0x8] sm:$0xff]
        %v971 = vld [vmem:[%s629 + $0x10] sm:$0xff]
        %v972 = vld [vmem:[%s629 + $0x18] sm:$0xff]
        %v973 = vmul.f32 %v969, %v816
        %v974 = vmul.f32 %v970, %v816
        %v975 = vmul.f32 %v971, %v816
        %v976 = vmul.f32 %v972, %v816
        %v977 = vld [vmem:[%s646] sm:$0xff]
        %v978 = vld [vmem:[%s646 + $0x8] sm:$0xff]
        %v979 = vld [vmem:[%s646 + $0x10] sm:$0xff]
        %v980 = vld [vmem:[%s646 + $0x18] sm:$0xff]
        %v981 = vmul.f32 %v977, %v825
        %v982 = vmul.f32 %v978, %v825
        %v983 = vmul.f32 %v979, %v825
        %v984 = vmul.f32 %v980, %v825
        %1049 = vrot.lane.b32.xlu0 %v905, 4
        %v1050 = vpop.permute.xlu0 %1049
        %1051 = vrot.lane.b32.xlu0 %v906, 4
        %v1052 = vpop.permute.xlu0 %1051
        %1053 = vrot.lane.b32.xlu0 %v907, 4
        %v1054 = vpop.permute.xlu0 %1053
        %1055 = vrot.lane.b32.xlu0 %v908, 4
        %v1056 = vpop.permute.xlu0 %1055
        %1057 = vrot.lane.b32.xlu0 %v909, 4
        %v1058 = vpop.permute.xlu0 %1057
        %1059 = vrot.lane.b32.xlu0 %v910, 4
        %v1060 = vpop.permute.xlu0 %1059
        %1061 = vrot.lane.b32.xlu0 %v911, 4
        %v1062 = vpop.permute.xlu0 %1061
        %1063 = vrot.lane.b32.xlu0 %v912, 4
        %v1064 = vpop.permute.xlu0 %1063
        %1065 = vrot.lane.b32.xlu0 %v913, 4
        %v1066 = vpop.permute.xlu0 %1065
        %1067 = vrot.lane.b32.xlu0 %v914, 4
        %v1068 = vpop.permute.xlu0 %1067
        %1069 = vrot.lane.b32.xlu0 %v915, 4
        %v1070 = vpop.permute.xlu0 %1069
        %1071 = vrot.lane.b32.xlu0 %v916, 4
        %v1072 = vpop.permute.xlu0 %1071
        %1073 = vrot.lane.b32.xlu0 %v917, 4
        %v1074 = vpop.permute.xlu0 %1073
        %1075 = vrot.lane.b32.xlu0 %v918, 4
        %v1076 = vpop.permute.xlu0 %1075
        %1077 = vrot.lane.b32.xlu0 %v919, 4
        %v1078 = vpop.permute.xlu0 %1077
        %1079 = vrot.lane.b32.xlu0 %v920, 4
        %v1080 = vpop.permute.xlu0 %1079
        %1081 = vrot.lane.b32.xlu0 %v921, 4
        %v1082 = vpop.permute.xlu0 %1081
        %1083 = vrot.lane.b32.xlu0 %v922, 4
        %v1084 = vpop.permute.xlu0 %1083
        %1085 = vrot.lane.b32.xlu0 %v923, 4
        %v1086 = vpop.permute.xlu0 %1085
        %1087 = vrot.lane.b32.xlu0 %v924, 4
        %v1088 = vpop.permute.xlu0 %1087
        %1089 = vrot.lane.b32.xlu0 %v925, 4
        %v1090 = vpop.permute.xlu0 %1089
        %1091 = vrot.lane.b32.xlu0 %v926, 4
        %v1092 = vpop.permute.xlu0 %1091
        %1093 = vrot.lane.b32.xlu0 %v927, 4
        %v1094 = vpop.permute.xlu0 %1093
        %1095 = vrot.lane.b32.xlu0 %v928, 4
        %v1096 = vpop.permute.xlu0 %1095
        %1097 = vrot.lane.b32.xlu0 %v929, 4
        %v1098 = vpop.permute.xlu0 %1097
        %1099 = vrot.lane.b32.xlu0 %v930, 4
        %v1100 = vpop.permute.xlu0 %1099
        %1101 = vrot.lane.b32.xlu0 %v931, 4
        %v1102 = vpop.permute.xlu0 %1101
        %1103 = vrot.lane.b32.xlu0 %v932, 4
        %v1104 = vpop.permute.xlu0 %1103
        %1105 = vrot.lane.b32.xlu0 %v933, 4
        %v1106 = vpop.permute.xlu0 %1105
        %1107 = vrot.lane.b32.xlu0 %v934, 4
        %v1108 = vpop.permute.xlu0 %1107
        %1109 = vrot.lane.b32.xlu0 %v935, 4
        %v1110 = vpop.permute.xlu0 %1109
        %1111 = vrot.lane.b32.xlu0 %v936, 4
        %v1112 = vpop.permute.xlu0 %1111
        %1113 = vrot.lane.b32.xlu0 %v937, 4
        %v1114 = vpop.permute.xlu0 %1113
        %1115 = vrot.lane.b32.xlu0 %v938, 4
        %v1116 = vpop.permute.xlu0 %1115
        %1117 = vrot.lane.b32.xlu0 %v939, 4
        %v1118 = vpop.permute.xlu0 %1117
        %1119 = vrot.lane.b32.xlu0 %v940, 4
        %v1120 = vpop.permute.xlu0 %1119
        %1121 = vrot.lane.b32.xlu0 %v941, 4
        %v1122 = vpop.permute.xlu0 %1121
        %1123 = vrot.lane.b32.xlu0 %v942, 4
        %v1124 = vpop.permute.xlu0 %1123
        %1125 = vrot.lane.b32.xlu0 %v943, 4
        %v1126 = vpop.permute.xlu0 %1125
        %1127 = vrot.lane.b32.xlu0 %v944, 4
        %v1128 = vpop.permute.xlu0 %1127
        %1129 = vrot.lane.b32.xlu0 %v945, 4
        %v1130 = vpop.permute.xlu0 %1129
        %1131 = vrot.lane.b32.xlu0 %v946, 4
        %v1132 = vpop.permute.xlu0 %1131
        %1133 = vrot.lane.b32.xlu0 %v947, 4
        %v1134 = vpop.permute.xlu0 %1133
        %1135 = vrot.lane.b32.xlu0 %v948, 4
        %v1136 = vpop.permute.xlu0 %1135
        %1137 = vrot.lane.b32.xlu0 %v949, 4
        %v1138 = vpop.permute.xlu0 %1137
        %1139 = vrot.lane.b32.xlu0 %v950, 4
        %v1140 = vpop.permute.xlu0 %1139
        %1141 = vrot.lane.b32.xlu0 %v951, 4
        %v1142 = vpop.permute.xlu0 %1141
        %1143 = vrot.lane.b32.xlu0 %v952, 4
        %v1144 = vpop.permute.xlu0 %1143
        %1145 = vrot.lane.b32.xlu0 %v953, 4
        %v1146 = vpop.permute.xlu0 %1145
        %1147 = vrot.lane.b32.xlu0 %v954, 4
        %v1148 = vpop.permute.xlu0 %1147
        %1149 = vrot.lane.b32.xlu0 %v955, 4
        %v1150 = vpop.permute.xlu0 %1149
        %1151 = vrot.lane.b32.xlu0 %v956, 4
        %v1152 = vpop.permute.xlu0 %1151
        %1153 = vrot.lane.b32.xlu0 %v957, 4
        %v1154 = vpop.permute.xlu0 %1153
        %1155 = vrot.lane.b32.xlu0 %v958, 4
        %v1156 = vpop.permute.xlu0 %1155
        %1157 = vrot.lane.b32.xlu0 %v959, 4
        %v1158 = vpop.permute.xlu0 %1157
        %1159 = vrot.lane.b32.xlu0 %v960, 4
        %v1160 = vpop.permute.xlu0 %1159
        %1161 = vrot.lane.b32.xlu0 %v961, 4
        %v1162 = vpop.permute.xlu0 %1161
        %1163 = vrot.lane.b32.xlu0 %v962, 4
        %v1164 = vpop.permute.xlu0 %1163
        %1165 = vrot.lane.b32.xlu0 %v963, 4
        %v1166 = vpop.permute.xlu0 %1165
        %1167 = vrot.lane.b32.xlu0 %v964, 4
        %v1168 = vpop.permute.xlu0 %1167
        %1169 = vrot.lane.b32.xlu0 %v965, 4
        %v1170 = vpop.permute.xlu0 %1169
        %1171 = vrot.lane.b32.xlu0 %v966, 4
        %v1172 = vpop.permute.xlu0 %1171
        %1173 = vrot.lane.b32.xlu0 %v967, 4
        %v1174 = vpop.permute.xlu0 %1173
        %1175 = vrot.lane.b32.xlu0 %v968, 4
        %v1176 = vpop.permute.xlu0 %1175
        %vm1241 = vcmask 97312
        %1242 = vst.msk [vmem:[%s830 + $0x1] sm:$0xff] %vm1241, %v1050
        %1243 = vst.msk [vmem:[%s830 + $0x9] sm:$0xff] %vm1241, %v1052
        %1244 = vst.msk [vmem:[%s830 + $0x11] sm:$0xff] %vm1241, %v1054
        %1245 = vst.msk [vmem:[%s830 + $0x19] sm:$0xff] %vm1241, %v1056
        %1246 = vst.msk [vmem:[%s830 + $0x29] sm:$0xff] %vm1241, %v1058
        %1247 = vst.msk [vmem:[%s830 + $0x31] sm:$0xff] %vm1241, %v1060
        %1248 = vst.msk [vmem:[%s830 + $0x39] sm:$0xff] %vm1241, %v1062
        %1249 = vst.msk [vmem:[%s830 + $0x41] sm:$0xff] %vm1241, %v1064
        %1250 = vst.msk [vmem:[%s830 + $0x51] sm:$0xff] %vm1241, %v1066
        %1251 = vst.msk [vmem:[%s830 + $0x59] sm:$0xff] %vm1241, %v1068
        %1252 = vst.msk [vmem:[%s830 + $0x61] sm:$0xff] %vm1241, %v1070
        %1253 = vst.msk [vmem:[%s830 + $0x69] sm:$0xff] %vm1241, %v1072
        %1254 = vst.msk [vmem:[%s830 + $0x79] sm:$0xff] %vm1241, %v1074
        %1255 = vst.msk [vmem:[%s830 + $0x81] sm:$0xff] %vm1241, %v1076
        %1256 = vst.msk [vmem:[%s830 + $0x89] sm:$0xff] %vm1241, %v1078
        %1257 = vst.msk [vmem:[%s830 + $0x91] sm:$0xff] %vm1241, %v1080
        %1258 = vst.msk [vmem:[%s830 + $0xa1] sm:$0xff] %vm1241, %v1082
        %1259 = vst.msk [vmem:[%s830 + $0xa9] sm:$0xff] %vm1241, %v1084
        %1260 = vst.msk [vmem:[%s830 + $0xb1] sm:$0xff] %vm1241, %v1086
        %1261 = vst.msk [vmem:[%s830 + $0xb9] sm:$0xff] %vm1241, %v1088
        %1262 = vst.msk [vmem:[%s830 + $0xc9] sm:$0xff] %vm1241, %v1090
        %1263 = vst.msk [vmem:[%s830 + $0xd1] sm:$0xff] %vm1241, %v1092
        %1264 = vst.msk [vmem:[%s830 + $0xd9] sm:$0xff] %vm1241, %v1094
        %1265 = vst.msk [vmem:[%s830 + $0xe1] sm:$0xff] %vm1241, %v1096
        %1266 = vst.msk [vmem:[%s830 + $0xf1] sm:$0xff] %vm1241, %v1098
        %1267 = vst.msk [vmem:[%s830 + $0xf9] sm:$0xff] %vm1241, %v1100
        %1268 = vst.msk [vmem:[%s830 + $0x101] sm:$0xff] %vm1241, %v1102
        %1269 = vst.msk [vmem:[%s830 + $0x109] sm:$0xff] %vm1241, %v1104
        %1270 = vst.msk [vmem:[%s830 + $0x119] sm:$0xff] %vm1241, %v1106
        %1271 = vst.msk [vmem:[%s830 + $0x121] sm:$0xff] %vm1241, %v1108
        %1272 = vst.msk [vmem:[%s830 + $0x129] sm:$0xff] %vm1241, %v1110
        %1273 = vst.msk [vmem:[%s830 + $0x131] sm:$0xff] %vm1241, %v1112
        %1274 = vst.msk [vmem:[%s830 + $0x141] sm:$0xff] %vm1241, %v1114
        %1275 = vst.msk [vmem:[%s830 + $0x149] sm:$0xff] %vm1241, %v1116
        %1276 = vst.msk [vmem:[%s830 + $0x151] sm:$0xff] %vm1241, %v1118
        %1277 = vst.msk [vmem:[%s830 + $0x159] sm:$0xff] %vm1241, %v1120
        %1278 = vst.msk [vmem:[%s830 + $0x169] sm:$0xff] %vm1241, %v1122
        %1279 = vst.msk [vmem:[%s830 + $0x171] sm:$0xff] %vm1241, %v1124
        %1280 = vst.msk [vmem:[%s830 + $0x179] sm:$0xff] %vm1241, %v1126
        %1281 = vst.msk [vmem:[%s830 + $0x181] sm:$0xff] %vm1241, %v1128
        %1282 = vst.msk [vmem:[%s830 + $0x191] sm:$0xff] %vm1241, %v1130
        %1283 = vst.msk [vmem:[%s830 + $0x199] sm:$0xff] %vm1241, %v1132
        %1284 = vst.msk [vmem:[%s830 + $0x1a1] sm:$0xff] %vm1241, %v1134
        %1285 = vst.msk [vmem:[%s830 + $0x1a9] sm:$0xff] %vm1241, %v1136
        %1286 = vst.msk [vmem:[%s830 + $0x1b9] sm:$0xff] %vm1241, %v1138
        %1287 = vst.msk [vmem:[%s830 + $0x1c1] sm:$0xff] %vm1241, %v1140
        %1288 = vst.msk [vmem:[%s830 + $0x1c9] sm:$0xff] %vm1241, %v1142
        %1289 = vst.msk [vmem:[%s830 + $0x1d1] sm:$0xff] %vm1241, %v1144
        %1290 = vst.msk [vmem:[%s830 + $0x1e1] sm:$0xff] %vm1241, %v1146
        %1291 = vst.msk [vmem:[%s830 + $0x1e9] sm:$0xff] %vm1241, %v1148
        %1292 = vst.msk [vmem:[%s830 + $0x1f1] sm:$0xff] %vm1241, %v1150
        %1293 = vst.msk [vmem:[%s830 + $0x1f9] sm:$0xff] %vm1241, %v1152
        %1294 = vst.msk [vmem:[%s830 + $0x209] sm:$0xff] %vm1241, %v1154
        %1295 = vst.msk [vmem:[%s830 + $0x211] sm:$0xff] %vm1241, %v1156
        %1296 = vst.msk [vmem:[%s830 + $0x219] sm:$0xff] %vm1241, %v1158
        %1297 = vst.msk [vmem:[%s830 + $0x221] sm:$0xff] %vm1241, %v1160
        %1298 = vst.msk [vmem:[%s830 + $0x231] sm:$0xff] %vm1241, %v1162
        %1299 = vst.msk [vmem:[%s830 + $0x239] sm:$0xff] %vm1241, %v1164
        %1300 = vst.msk [vmem:[%s830 + $0x241] sm:$0xff] %vm1241, %v1166
        %1301 = vst.msk [vmem:[%s830 + $0x249] sm:$0xff] %vm1241, %v1168
        %1302 = vst.msk [vmem:[%s830 + $0x259] sm:$0xff] %vm1241, %v1170
        %1303 = vst.msk [vmem:[%s830 + $0x261] sm:$0xff] %vm1241, %v1172
        %1304 = vst.msk [vmem:[%s830 + $0x269] sm:$0xff] %vm1241, %v1174
        %1305 = vst.msk [vmem:[%s830 + $0x271] sm:$0xff] %vm1241, %v1176
        %1310 = vrot.lane.b32.xlu0 %v973, 4
        %v1311 = vpop.permute.xlu0 %1310
        %1312 = vrot.lane.b32.xlu0 %v974, 4
        %v1313 = vpop.permute.xlu0 %1312
        %1314 = vrot.lane.b32.xlu0 %v975, 4
        %v1315 = vpop.permute.xlu0 %1314
        %1316 = vrot.lane.b32.xlu0 %v976, 4
        %v1317 = vpop.permute.xlu0 %1316
        %1322 = vst.msk [vmem:[#allocation2 + $0x1] sm:$0xff] %vm1241, %v1311
        %1323 = vst.msk [vmem:[#allocation2 + $0x9] sm:$0xff] %vm1241, %v1313
        %1324 = vst.msk [vmem:[#allocation2 + $0x11] sm:$0xff] %vm1241, %v1315
        %1325 = vst.msk [vmem:[#allocation2 + $0x19] sm:$0xff] %vm1241, %v1317
        %1330 = vrot.lane.b32.xlu0 %v981, 4
        %v1331 = vpop.permute.xlu0 %1330
        %1332 = vrot.lane.b32.xlu0 %v982, 4
        %v1333 = vpop.permute.xlu0 %1332
        %1334 = vrot.lane.b32.xlu0 %v983, 4
        %v1335 = vpop.permute.xlu0 %1334
        %1336 = vrot.lane.b32.xlu0 %v984, 4
        %v1337 = vpop.permute.xlu0 %1336
        %1342 = vst.msk [vmem:[%s900 + $0x1] sm:$0xff] %vm1241, %v1331
        %1343 = vst.msk [vmem:[%s900 + $0x9] sm:$0xff] %vm1241, %v1333
        %1344 = vst.msk [vmem:[%s900 + $0x11] sm:$0xff] %vm1241, %v1335
        %1345 = vst.msk [vmem:[%s900 + $0x19] sm:$0xff] %vm1241, %v1337
        %v1346 = vld [vmem:[#allocation2] sm:$0xff]
        %v1347 = vld [vmem:[#allocation2 + $0x8] sm:$0xff]
        %v1348 = vld [vmem:[#allocation2 + $0x10] sm:$0xff]
        %v1349 = vld [vmem:[#allocation2 + $0x18] sm:$0xff]
        %v1350 = vld [vmem:[#allocation2 + $0x28] sm:$0xff]
        %v1351 = vld [vmem:[#allocation2 + $0x30] sm:$0xff]
        %v1352 = vld [vmem:[#allocation2 + $0x38] sm:$0xff]
        %v1353 = vld [vmem:[#allocation2 + $0x40] sm:$0xff]
        %v1354 = vld [vmem:[#allocation2 + $0x50] sm:$0xff]
        %v1355 = vld [vmem:[#allocation2 + $0x58] sm:$0xff]
        %v1356 = vld [vmem:[#allocation2 + $0x60] sm:$0xff]
        %v1357 = vld [vmem:[#allocation2 + $0x68] sm:$0xff]
        %v1358 = vld [vmem:[#allocation2 + $0x78] sm:$0xff]
        %v1359 = vld [vmem:[#allocation2 + $0x80] sm:$0xff]
        %v1360 = vld [vmem:[#allocation2 + $0x88] sm:$0xff]
        %v1361 = vld [vmem:[#allocation2 + $0x90] sm:$0xff]
        %v1362 = vld [vmem:[#allocation2 + $0xa0] sm:$0xff]
        %v1363 = vld [vmem:[#allocation2 + $0xa8] sm:$0xff]
        %v1364 = vld [vmem:[#allocation2 + $0xb0] sm:$0xff]
        %v1365 = vld [vmem:[#allocation2 + $0xb8] sm:$0xff]
        %v1366 = vld [vmem:[#allocation2 + $0xc8] sm:$0xff]
        %v1367 = vld [vmem:[#allocation2 + $0xd0] sm:$0xff]
        %v1368 = vld [vmem:[#allocation2 + $0xd8] sm:$0xff]
        %v1369 = vld [vmem:[#allocation2 + $0xe0] sm:$0xff]
        %v1370 = vld [vmem:[#allocation2 + $0xf0] sm:$0xff]
        %v1371 = vld [vmem:[#allocation2 + $0xf8] sm:$0xff]
        %v1372 = vld [vmem:[#allocation2 + $0x100] sm:$0xff]
        %v1373 = vld [vmem:[#allocation2 + $0x108] sm:$0xff]
        %v1374 = vld [vmem:[#allocation2 + $0x118] sm:$0xff]
        %v1375 = vld [vmem:[#allocation2 + $0x120] sm:$0xff]
        %v1376 = vld [vmem:[#allocation2 + $0x128] sm:$0xff]
        %v1377 = vld [vmem:[#allocation2 + $0x130] sm:$0xff]
        %v1378 = vld [vmem:[#allocation2 + $0x140] sm:$0xff]
        %v1379 = vld [vmem:[#allocation2 + $0x148] sm:$0xff]
        %v1380 = vld [vmem:[#allocation2 + $0x150] sm:$0xff]
        %v1381 = vld [vmem:[#allocation2 + $0x158] sm:$0xff]
        %v1382 = vld [vmem:[#allocation2 + $0x168] sm:$0xff]
        %v1383 = vld [vmem:[#allocation2 + $0x170] sm:$0xff]
        %v1384 = vld [vmem:[#allocation2 + $0x178] sm:$0xff]
        %v1385 = vld [vmem:[#allocation2 + $0x180] sm:$0xff]
        %v1386 = vld [vmem:[#allocation2 + $0x190] sm:$0xff]
        %v1387 = vld [vmem:[#allocation2 + $0x198] sm:$0xff]
        %v1388 = vld [vmem:[#allocation2 + $0x1a0] sm:$0xff]
        %v1389 = vld [vmem:[#allocation2 + $0x1a8] sm:$0xff]
        %v1390 = vld [vmem:[#allocation2 + $0x1b8] sm:$0xff]
        %v1391 = vld [vmem:[#allocation2 + $0x1c0] sm:$0xff]
        %v1392 = vld [vmem:[#allocation2 + $0x1c8] sm:$0xff]
        %v1393 = vld [vmem:[#allocation2 + $0x1d0] sm:$0xff]
        %v1394 = vld [vmem:[#allocation2 + $0x1e0] sm:$0xff]
        %v1395 = vld [vmem:[#allocation2 + $0x1e8] sm:$0xff]
        %v1396 = vld [vmem:[#allocation2 + $0x1f0] sm:$0xff]
        %v1397 = vld [vmem:[#allocation2 + $0x1f8] sm:$0xff]
        %v1398 = vld [vmem:[#allocation2 + $0x208] sm:$0xff]
        %v1399 = vld [vmem:[#allocation2 + $0x210] sm:$0xff]
        %v1400 = vld [vmem:[#allocation2 + $0x218] sm:$0xff]
        %v1401 = vld [vmem:[#allocation2 + $0x220] sm:$0xff]
        %v1402 = vld [vmem:[#allocation2 + $0x230] sm:$0xff]
        %v1403 = vld [vmem:[#allocation2 + $0x238] sm:$0xff]
        %v1404 = vld [vmem:[#allocation2 + $0x240] sm:$0xff]
        %v1405 = vld [vmem:[#allocation2 + $0x248] sm:$0xff]
        %v1406 = vld [vmem:[#allocation2 + $0x258] sm:$0xff]
        %v1407 = vld [vmem:[#allocation2 + $0x260] sm:$0xff]
        %v1408 = vld [vmem:[#allocation2 + $0x268] sm:$0xff]
        %v1409 = vld [vmem:[#allocation2 + $0x270] sm:$0xff]
        %1410 = vst.msk [vmem:[#allocation3] sm:$0xff] %vm656, %v1346
        %1411 = vst.msk [vmem:[#allocation3 + $0x8] sm:$0xff] %vm656, %v1347
        %1412 = vst.msk [vmem:[#allocation3 + $0x10] sm:$0xff] %vm656, %v1348
        %1413 = vst.msk [vmem:[#allocation3 + $0x18] sm:$0xff] %vm656, %v1349
        %1414 = vst.msk [vmem:[#allocation3 + $0x20] sm:$0xff] %vm656, %v1350
        %1415 = vst.msk [vmem:[#allocation3 + $0x28] sm:$0xff] %vm656, %v1351
        %1416 = vst.msk [vmem:[#allocation3 + $0x30] sm:$0xff] %vm656, %v1352
        %1417 = vst.msk [vmem:[#allocation3 + $0x38] sm:$0xff] %vm656, %v1353
        %1418 = vst.msk [vmem:[#allocation3 + $0x40] sm:$0xff] %vm656, %v1354
        %1419 = vst.msk [vmem:[#allocation3 + $0x48] sm:$0xff] %vm656, %v1355
        %1420 = vst.msk [vmem:[#allocation3 + $0x50] sm:$0xff] %vm656, %v1356
        %1421 = vst.msk [vmem:[#allocation3 + $0x58] sm:$0xff] %vm656, %v1357
        %1422 = vst.msk [vmem:[#allocation3 + $0x60] sm:$0xff] %vm656, %v1358
        %1423 = vst.msk [vmem:[#allocation3 + $0x68] sm:$0xff] %vm656, %v1359
        %1424 = vst.msk [vmem:[#allocation3 + $0x70] sm:$0xff] %vm656, %v1360
        %1425 = vst.msk [vmem:[#allocation3 + $0x78] sm:$0xff] %vm656, %v1361
        %1426 = vst.msk [vmem:[#allocation3 + $0x80] sm:$0xff] %vm656, %v1362
        %1427 = vst.msk [vmem:[#allocation3 + $0x88] sm:$0xff] %vm656, %v1363
        %1428 = vst.msk [vmem:[#allocation3 + $0x90] sm:$0xff] %vm656, %v1364
        %1429 = vst.msk [vmem:[#allocation3 + $0x98] sm:$0xff] %vm656, %v1365
        %1430 = vst.msk [vmem:[#allocation3 + $0xa0] sm:$0xff] %vm656, %v1366
        %1431 = vst.msk [vmem:[#allocation3 + $0xa8] sm:$0xff] %vm656, %v1367
        %1432 = vst.msk [vmem:[#allocation3 + $0xb0] sm:$0xff] %vm656, %v1368
        %1433 = vst.msk [vmem:[#allocation3 + $0xb8] sm:$0xff] %vm656, %v1369
        %1434 = vst.msk [vmem:[#allocation3 + $0xc0] sm:$0xff] %vm656, %v1370
        %1435 = vst.msk [vmem:[#allocation3 + $0xc8] sm:$0xff] %vm656, %v1371
        %1436 = vst.msk [vmem:[#allocation3 + $0xd0] sm:$0xff] %vm656, %v1372
        %1437 = vst.msk [vmem:[#allocation3 + $0xd8] sm:$0xff] %vm656, %v1373
        %1438 = vst.msk [vmem:[#allocation3 + $0xe0] sm:$0xff] %vm656, %v1374
        %1439 = vst.msk [vmem:[#allocation3 + $0xe8] sm:$0xff] %vm656, %v1375
        %1440 = vst.msk [vmem:[#allocation3 + $0xf0] sm:$0xff] %vm656, %v1376
        %1441 = vst.msk [vmem:[#allocation3 + $0xf8] sm:$0xff] %vm656, %v1377
        %1442 = vst.msk [vmem:[#allocation3 + $0x100] sm:$0xff] %vm656, %v1378
        %1443 = vst.msk [vmem:[#allocation3 + $0x108] sm:$0xff] %vm656, %v1379
        %1444 = vst.msk [vmem:[#allocation3 + $0x110] sm:$0xff] %vm656, %v1380
        %1445 = vst.msk [vmem:[#allocation3 + $0x118] sm:$0xff] %vm656, %v1381
        %1446 = vst.msk [vmem:[#allocation3 + $0x120] sm:$0xff] %vm656, %v1382
        %1447 = vst.msk [vmem:[#allocation3 + $0x128] sm:$0xff] %vm656, %v1383
        %1448 = vst.msk [vmem:[#allocation3 + $0x130] sm:$0xff] %vm656, %v1384
        %1449 = vst.msk [vmem:[#allocation3 + $0x138] sm:$0xff] %vm656, %v1385
        %1450 = vst.msk [vmem:[#allocation3 + $0x140] sm:$0xff] %vm656, %v1386
        %1451 = vst.msk [vmem:[#allocation3 + $0x148] sm:$0xff] %vm656, %v1387
        %1452 = vst.msk [vmem:[#allocation3 + $0x150] sm:$0xff] %vm656, %v1388
        %1453 = vst.msk [vmem:[#allocation3 + $0x158] sm:$0xff] %vm656, %v1389
        %1454 = vst.msk [vmem:[#allocation3 + $0x160] sm:$0xff] %vm656, %v1390
        %1455 = vst.msk [vmem:[#allocation3 + $0x168] sm:$0xff] %vm656, %v1391
        %1456 = vst.msk [vmem:[#allocation3 + $0x170] sm:$0xff] %vm656, %v1392
        %1457 = vst.msk [vmem:[#allocation3 + $0x178] sm:$0xff] %vm656, %v1393
        %1458 = vst.msk [vmem:[#allocation3 + $0x180] sm:$0xff] %vm656, %v1394
        %1459 = vst.msk [vmem:[#allocation3 + $0x188] sm:$0xff] %vm656, %v1395
        %1460 = vst.msk [vmem:[#allocation3 + $0x190] sm:$0xff] %vm656, %v1396
        %1461 = vst.msk [vmem:[#allocation3 + $0x198] sm:$0xff] %vm656, %v1397
        %1462 = vst.msk [vmem:[#allocation3 + $0x1a0] sm:$0xff] %vm656, %v1398
        %1463 = vst.msk [vmem:[#allocation3 + $0x1a8] sm:$0xff] %vm656, %v1399
        %1464 = vst.msk [vmem:[#allocation3 + $0x1b0] sm:$0xff] %vm656, %v1400
        %1465 = vst.msk [vmem:[#allocation3 + $0x1b8] sm:$0xff] %vm656, %v1401
        %1466 = vst.msk [vmem:[#allocation3 + $0x1c0] sm:$0xff] %vm656, %v1402
        %1467 = vst.msk [vmem:[#allocation3 + $0x1c8] sm:$0xff] %vm656, %v1403
        %1468 = vst.msk [vmem:[#allocation3 + $0x1d0] sm:$0xff] %vm656, %v1404
        %1469 = vst.msk [vmem:[#allocation3 + $0x1d8] sm:$0xff] %vm656, %v1405
        %1470 = vst.msk [vmem:[#allocation3 + $0x1e0] sm:$0xff] %vm656, %v1406
        %1471 = vst.msk [vmem:[#allocation3 + $0x1e8] sm:$0xff] %vm656, %v1407
        %1472 = vst.msk [vmem:[#allocation3 + $0x1f0] sm:$0xff] %vm656, %v1408
        %1473 = vst.msk [vmem:[#allocation3 + $0x1f8] sm:$0xff] %vm656, %v1409
        %v1474 = vld [vmem:[#allocation2 + $0x1] sm:$0xff]
        %v1475 = vld [vmem:[#allocation2 + $0x9] sm:$0xff]
        %v1476 = vld [vmem:[#allocation2 + $0x11] sm:$0xff]
        %v1477 = vld [vmem:[#allocation2 + $0x19] sm:$0xff]
        %v1478 = vld [vmem:[#allocation2 + $0x29] sm:$0xff]
        %v1479 = vld [vmem:[#allocation2 + $0x31] sm:$0xff]
        %v1480 = vld [vmem:[#allocation2 + $0x39] sm:$0xff]
        %v1481 = vld [vmem:[#allocation2 + $0x41] sm:$0xff]
        %v1482 = vld [vmem:[#allocation2 + $0x51] sm:$0xff]
        %v1483 = vld [vmem:[#allocation2 + $0x59] sm:$0xff]
        %v1484 = vld [vmem:[#allocation2 + $0x61] sm:$0xff]
        %v1485 = vld [vmem:[#allocation2 + $0x69] sm:$0xff]
        %v1486 = vld [vmem:[#allocation2 + $0x79] sm:$0xff]
        %v1487 = vld [vmem:[#allocation2 + $0x81] sm:$0xff]
        %v1488 = vld [vmem:[#allocation2 + $0x89] sm:$0xff]
        %v1489 = vld [vmem:[#allocation2 + $0x91] sm:$0xff]
        %v1490 = vld [vmem:[#allocation2 + $0xa1] sm:$0xff]
        %v1491 = vld [vmem:[#allocation2 + $0xa9] sm:$0xff]
        %v1492 = vld [vmem:[#allocation2 + $0xb1] sm:$0xff]
        %v1493 = vld [vmem:[#allocation2 + $0xb9] sm:$0xff]
        %v1494 = vld [vmem:[#allocation2 + $0xc9] sm:$0xff]
        %v1495 = vld [vmem:[#allocation2 + $0xd1] sm:$0xff]
        %v1496 = vld [vmem:[#allocation2 + $0xd9] sm:$0xff]
        %v1497 = vld [vmem:[#allocation2 + $0xe1] sm:$0xff]
        %v1498 = vld [vmem:[#allocation2 + $0xf1] sm:$0xff]
        %v1499 = vld [vmem:[#allocation2 + $0xf9] sm:$0xff]
        %v1500 = vld [vmem:[#allocation2 + $0x101] sm:$0xff]
        %v1501 = vld [vmem:[#allocation2 + $0x109] sm:$0xff]
        %v1502 = vld [vmem:[#allocation2 + $0x119] sm:$0xff]
        %v1503 = vld [vmem:[#allocation2 + $0x121] sm:$0xff]
        %v1504 = vld [vmem:[#allocation2 + $0x129] sm:$0xff]
        %v1505 = vld [vmem:[#allocation2 + $0x131] sm:$0xff]
        %v1506 = vld [vmem:[#allocation2 + $0x141] sm:$0xff]
        %v1507 = vld [vmem:[#allocation2 + $0x149] sm:$0xff]
        %v1508 = vld [vmem:[#allocation2 + $0x151] sm:$0xff]
        %v1509 = vld [vmem:[#allocation2 + $0x159] sm:$0xff]
        %v1510 = vld [vmem:[#allocation2 + $0x169] sm:$0xff]
        %v1511 = vld [vmem:[#allocation2 + $0x171] sm:$0xff]
        %v1512 = vld [vmem:[#allocation2 + $0x179] sm:$0xff]
        %v1513 = vld [vmem:[#allocation2 + $0x181] sm:$0xff]
        %v1514 = vld [vmem:[#allocation2 + $0x191] sm:$0xff]
        %v1515 = vld [vmem:[#allocation2 + $0x199] sm:$0xff]
        %v1516 = vld [vmem:[#allocation2 + $0x1a1] sm:$0xff]
        %v1517 = vld [vmem:[#allocation2 + $0x1a9] sm:$0xff]
        %v1518 = vld [vmem:[#allocation2 + $0x1b9] sm:$0xff]
        %v1519 = vld [vmem:[#allocation2 + $0x1c1] sm:$0xff]
        %v1520 = vld [vmem:[#allocation2 + $0x1c9] sm:$0xff]
        %v1521 = vld [vmem:[#allocation2 + $0x1d1] sm:$0xff]
        %v1522 = vld [vmem:[#allocation2 + $0x1e1] sm:$0xff]
        %v1523 = vld [vmem:[#allocation2 + $0x1e9] sm:$0xff]
        %v1524 = vld [vmem:[#allocation2 + $0x1f1] sm:$0xff]
        %v1525 = vld [vmem:[#allocation2 + $0x1f9] sm:$0xff]
        %v1526 = vld [vmem:[#allocation2 + $0x209] sm:$0xff]
        %v1527 = vld [vmem:[#allocation2 + $0x211] sm:$0xff]
        %v1528 = vld [vmem:[#allocation2 + $0x219] sm:$0xff]
        %v1529 = vld [vmem:[#allocation2 + $0x221] sm:$0xff]
        %v1530 = vld [vmem:[#allocation2 + $0x231] sm:$0xff]
        %v1531 = vld [vmem:[#allocation2 + $0x239] sm:$0xff]
        %v1532 = vld [vmem:[#allocation2 + $0x241] sm:$0xff]
        %v1533 = vld [vmem:[#allocation2 + $0x249] sm:$0xff]
        %v1534 = vld [vmem:[#allocation2 + $0x259] sm:$0xff]
        %v1535 = vld [vmem:[#allocation2 + $0x261] sm:$0xff]
        %v1536 = vld [vmem:[#allocation2 + $0x269] sm:$0xff]
        %v1537 = vld [vmem:[#allocation2 + $0x271] sm:$0xff]
        %1602 = vrot.lane.b32.xlu0 %v1474, 12
        %v1603 = vpop.permute.xlu0 %1602
        %1604 = vrot.lane.b32.xlu0 %v1475, 12
        %v1605 = vpop.permute.xlu0 %1604
        %1606 = vrot.lane.b32.xlu0 %v1476, 12
        %v1607 = vpop.permute.xlu0 %1606
        %1608 = vrot.lane.b32.xlu0 %v1477, 12
        %v1609 = vpop.permute.xlu0 %1608
        %1610 = vrot.lane.b32.xlu0 %v1478, 12
        %v1611 = vpop.permute.xlu0 %1610
        %1612 = vrot.lane.b32.xlu0 %v1479, 12
        %v1613 = vpop.permute.xlu0 %1612
        %1614 = vrot.lane.b32.xlu0 %v1480, 12
        %v1615 = vpop.permute.xlu0 %1614
        %1616 = vrot.lane.b32.xlu0 %v1481, 12
        %v1617 = vpop.permute.xlu0 %1616
        %1618 = vrot.lane.b32.xlu0 %v1482, 12
        %v1619 = vpop.permute.xlu0 %1618
        %1620 = vrot.lane.b32.xlu0 %v1483, 12
        %v1621 = vpop.permute.xlu0 %1620
        %1622 = vrot.lane.b32.xlu0 %v1484, 12
        %v1623 = vpop.permute.xlu0 %1622
        %1624 = vrot.lane.b32.xlu0 %v1485, 12
        %v1625 = vpop.permute.xlu0 %1624
        %1626 = vrot.lane.b32.xlu0 %v1486, 12
        %v1627 = vpop.permute.xlu0 %1626
        %1628 = vrot.lane.b32.xlu0 %v1487, 12
        %v1629 = vpop.permute.xlu0 %1628
        %1630 = vrot.lane.b32.xlu0 %v1488, 12
        %v1631 = vpop.permute.xlu0 %1630
        %1632 = vrot.lane.b32.xlu0 %v1489, 12
        %v1633 = vpop.permute.xlu0 %1632
        %1634 = vrot.lane.b32.xlu0 %v1490, 12
        %v1635 = vpop.permute.xlu0 %1634
        %1636 = vrot.lane.b32.xlu0 %v1491, 12
        %v1637 = vpop.permute.xlu0 %1636
        %1638 = vrot.lane.b32.xlu0 %v1492, 12
        %v1639 = vpop.permute.xlu0 %1638
        %1640 = vrot.lane.b32.xlu0 %v1493, 12
        %v1641 = vpop.permute.xlu0 %1640
        %1642 = vrot.lane.b32.xlu0 %v1494, 12
        %v1643 = vpop.permute.xlu0 %1642
        %1644 = vrot.lane.b32.xlu0 %v1495, 12
        %v1645 = vpop.permute.xlu0 %1644
        %1646 = vrot.lane.b32.xlu0 %v1496, 12
        %v1647 = vpop.permute.xlu0 %1646
        %1648 = vrot.lane.b32.xlu0 %v1497, 12
        %v1649 = vpop.permute.xlu0 %1648
        %1650 = vrot.lane.b32.xlu0 %v1498, 12
        %v1651 = vpop.permute.xlu0 %1650
        %1652 = vrot.lane.b32.xlu0 %v1499, 12
        %v1653 = vpop.permute.xlu0 %1652
        %1654 = vrot.lane.b32.xlu0 %v1500, 12
        %v1655 = vpop.permute.xlu0 %1654
        %1656 = vrot.lane.b32.xlu0 %v1501, 12
        %v1657 = vpop.permute.xlu0 %1656
        %1658 = vrot.lane.b32.xlu0 %v1502, 12
        %v1659 = vpop.permute.xlu0 %1658
        %1660 = vrot.lane.b32.xlu0 %v1503, 12
        %v1661 = vpop.permute.xlu0 %1660
        %1662 = vrot.lane.b32.xlu0 %v1504, 12
        %v1663 = vpop.permute.xlu0 %1662
        %1664 = vrot.lane.b32.xlu0 %v1505, 12
        %v1665 = vpop.permute.xlu0 %1664
        %1666 = vrot.lane.b32.xlu0 %v1506, 12
        %v1667 = vpop.permute.xlu0 %1666
        %1668 = vrot.lane.b32.xlu0 %v1507, 12
        %v1669 = vpop.permute.xlu0 %1668
        %1670 = vrot.lane.b32.xlu0 %v1508, 12
        %v1671 = vpop.permute.xlu0 %1670
        %1672 = vrot.lane.b32.xlu0 %v1509, 12
        %v1673 = vpop.permute.xlu0 %1672
        %1674 = vrot.lane.b32.xlu0 %v1510, 12
        %v1675 = vpop.permute.xlu0 %1674
        %1676 = vrot.lane.b32.xlu0 %v1511, 12
        %v1677 = vpop.permute.xlu0 %1676
        %1678 = vrot.lane.b32.xlu0 %v1512, 12
        %v1679 = vpop.permute.xlu0 %1678
        %1680 = vrot.lane.b32.xlu0 %v1513, 12
        %v1681 = vpop.permute.xlu0 %1680
        %1682 = vrot.lane.b32.xlu0 %v1514, 12
        %v1683 = vpop.permute.xlu0 %1682
        %1684 = vrot.lane.b32.xlu0 %v1515, 12
        %v1685 = vpop.permute.xlu0 %1684
        %1686 = vrot.lane.b32.xlu0 %v1516, 12
        %v1687 = vpop.permute.xlu0 %1686
        %1688 = vrot.lane.b32.xlu0 %v1517, 12
        %v1689 = vpop.permute.xlu0 %1688
        %1690 = vrot.lane.b32.xlu0 %v1518, 12
        %v1691 = vpop.permute.xlu0 %1690
        %1692 = vrot.lane.b32.xlu0 %v1519, 12
        %v1693 = vpop.permute.xlu0 %1692
        %1694 = vrot.lane.b32.xlu0 %v1520, 12
        %v1695 = vpop.permute.xlu0 %1694
        %1696 = vrot.lane.b32.xlu0 %v1521, 12
        %v1697 = vpop.permute.xlu0 %1696
        %1698 = vrot.lane.b32.xlu0 %v1522, 12
        %v1699 = vpop.permute.xlu0 %1698
        %1700 = vrot.lane.b32.xlu0 %v1523, 12
        %v1701 = vpop.permute.xlu0 %1700
        %1702 = vrot.lane.b32.xlu0 %v1524, 12
        %v1703 = vpop.permute.xlu0 %1702
        %1704 = vrot.lane.b32.xlu0 %v1525, 12
        %v1705 = vpop.permute.xlu0 %1704
        %1706 = vrot.lane.b32.xlu0 %v1526, 12
        %v1707 = vpop.permute.xlu0 %1706
        %1708 = vrot.lane.b32.xlu0 %v1527, 12
        %v1709 = vpop.permute.xlu0 %1708
        %1710 = vrot.lane.b32.xlu0 %v1528, 12
        %v1711 = vpop.permute.xlu0 %1710
        %1712 = vrot.lane.b32.xlu0 %v1529, 12
        %v1713 = vpop.permute.xlu0 %1712
        %1714 = vrot.lane.b32.xlu0 %v1530, 12
        %v1715 = vpop.permute.xlu0 %1714
        %1716 = vrot.lane.b32.xlu0 %v1531, 12
        %v1717 = vpop.permute.xlu0 %1716
        %1718 = vrot.lane.b32.xlu0 %v1532, 12
        %v1719 = vpop.permute.xlu0 %1718
        %1720 = vrot.lane.b32.xlu0 %v1533, 12
        %v1721 = vpop.permute.xlu0 %1720
        %1722 = vrot.lane.b32.xlu0 %v1534, 12
        %v1723 = vpop.permute.xlu0 %1722
        %1724 = vrot.lane.b32.xlu0 %v1535, 12
        %v1725 = vpop.permute.xlu0 %1724
        %1726 = vrot.lane.b32.xlu0 %v1536, 12
        %v1727 = vpop.permute.xlu0 %1726
        %1728 = vrot.lane.b32.xlu0 %v1537, 12
        %v1729 = vpop.permute.xlu0 %1728
        %vm1794 = vcmask 195680
        %1795 = vst.msk [vmem:[#allocation3] sm:$0xff] %vm1794, %v1603
        %1796 = vst.msk [vmem:[#allocation3 + $0x8] sm:$0xff] %vm1794, %v1605
        %1797 = vst.msk [vmem:[#allocation3 + $0x10] sm:$0xff] %vm1794, %v1607
        %1798 = vst.msk [vmem:[#allocation3 + $0x18] sm:$0xff] %vm1794, %v1609
        %1799 = vst.msk [vmem:[#allocation3 + $0x20] sm:$0xff] %vm1794, %v1611
        %1800 = vst.msk [vmem:[#allocation3 + $0x28] sm:$0xff] %vm1794, %v1613
        %1801 = vst.msk [vmem:[#allocation3 + $0x30] sm:$0xff] %vm1794, %v1615
        %1802 = vst.msk [vmem:[#allocation3 + $0x38] sm:$0xff] %vm1794, %v1617
        %1803 = vst.msk [vmem:[#allocation3 + $0x40] sm:$0xff] %vm1794, %v1619
        %1804 = vst.msk [vmem:[#allocation3 + $0x48] sm:$0xff] %vm1794, %v1621
        %1805 = vst.msk [vmem:[#allocation3 + $0x50] sm:$0xff] %vm1794, %v1623
        %1806 = vst.msk [vmem:[#allocation3 + $0x58] sm:$0xff] %vm1794, %v1625
        %1807 = vst.msk [vmem:[#allocation3 + $0x60] sm:$0xff] %vm1794, %v1627
        %1808 = vst.msk [vmem:[#allocation3 + $0x68] sm:$0xff] %vm1794, %v1629
        %1809 = vst.msk [vmem:[#allocation3 + $0x70] sm:$0xff] %vm1794, %v1631
        %1810 = vst.msk [vmem:[#allocation3 + $0x78] sm:$0xff] %vm1794, %v1633
        %1811 = vst.msk [vmem:[#allocation3 + $0x80] sm:$0xff] %vm1794, %v1635
        %1812 = vst.msk [vmem:[#allocation3 + $0x88] sm:$0xff] %vm1794, %v1637
        %1813 = vst.msk [vmem:[#allocation3 + $0x90] sm:$0xff] %vm1794, %v1639
        %1814 = vst.msk [vmem:[#allocation3 + $0x98] sm:$0xff] %vm1794, %v1641
        %1815 = vst.msk [vmem:[#allocation3 + $0xa0] sm:$0xff] %vm1794, %v1643
        %1816 = vst.msk [vmem:[#allocation3 + $0xa8] sm:$0xff] %vm1794, %v1645
        %1817 = vst.msk [vmem:[#allocation3 + $0xb0] sm:$0xff] %vm1794, %v1647
        %1818 = vst.msk [vmem:[#allocation3 + $0xb8] sm:$0xff] %vm1794, %v1649
        %1819 = vst.msk [vmem:[#allocation3 + $0xc0] sm:$0xff] %vm1794, %v1651
        %1820 = vst.msk [vmem:[#allocation3 + $0xc8] sm:$0xff] %vm1794, %v1653
        %1821 = vst.msk [vmem:[#allocation3 + $0xd0] sm:$0xff] %vm1794, %v1655
        %1822 = vst.msk [vmem:[#allocation3 + $0xd8] sm:$0xff] %vm1794, %v1657
        %1823 = vst.msk [vmem:[#allocation3 + $0xe0] sm:$0xff] %vm1794, %v1659
        %1824 = vst.msk [vmem:[#allocation3 + $0xe8] sm:$0xff] %vm1794, %v1661
        %1825 = vst.msk [vmem:[#allocation3 + $0xf0] sm:$0xff] %vm1794, %v1663
        %1826 = vst.msk [vmem:[#allocation3 + $0xf8] sm:$0xff] %vm1794, %v1665
        %1827 = vst.msk [vmem:[#allocation3 + $0x100] sm:$0xff] %vm1794, %v1667
        %1828 = vst.msk [vmem:[#allocation3 + $0x108] sm:$0xff] %vm1794, %v1669
        %1829 = vst.msk [vmem:[#allocation3 + $0x110] sm:$0xff] %vm1794, %v1671
        %1830 = vst.msk [vmem:[#allocation3 + $0x118] sm:$0xff] %vm1794, %v1673
        %1831 = vst.msk [vmem:[#allocation3 + $0x120] sm:$0xff] %vm1794, %v1675
        %1832 = vst.msk [vmem:[#allocation3 + $0x128] sm:$0xff] %vm1794, %v1677
        %1833 = vst.msk [vmem:[#allocation3 + $0x130] sm:$0xff] %vm1794, %v1679
        %1834 = vst.msk [vmem:[#allocation3 + $0x138] sm:$0xff] %vm1794, %v1681
        %1835 = vst.msk [vmem:[#allocation3 + $0x140] sm:$0xff] %vm1794, %v1683
        %1836 = vst.msk [vmem:[#allocation3 + $0x148] sm:$0xff] %vm1794, %v1685
        %1837 = vst.msk [vmem:[#allocation3 + $0x150] sm:$0xff] %vm1794, %v1687
        %1838 = vst.msk [vmem:[#allocation3 + $0x158] sm:$0xff] %vm1794, %v1689
        %1839 = vst.msk [vmem:[#allocation3 + $0x160] sm:$0xff] %vm1794, %v1691
        %1840 = vst.msk [vmem:[#allocation3 + $0x168] sm:$0xff] %vm1794, %v1693
        %1841 = vst.msk [vmem:[#allocation3 + $0x170] sm:$0xff] %vm1794, %v1695
        %1842 = vst.msk [vmem:[#allocation3 + $0x178] sm:$0xff] %vm1794, %v1697
        %1843 = vst.msk [vmem:[#allocation3 + $0x180] sm:$0xff] %vm1794, %v1699
        %1844 = vst.msk [vmem:[#allocation3 + $0x188] sm:$0xff] %vm1794, %v1701
        %1845 = vst.msk [vmem:[#allocation3 + $0x190] sm:$0xff] %vm1794, %v1703
        %1846 = vst.msk [vmem:[#allocation3 + $0x198] sm:$0xff] %vm1794, %v1705
        %1847 = vst.msk [vmem:[#allocation3 + $0x1a0] sm:$0xff] %vm1794, %v1707
        %1848 = vst.msk [vmem:[#allocation3 + $0x1a8] sm:$0xff] %vm1794, %v1709
        %1849 = vst.msk [vmem:[#allocation3 + $0x1b0] sm:$0xff] %vm1794, %v1711
        %1850 = vst.msk [vmem:[#allocation3 + $0x1b8] sm:$0xff] %vm1794, %v1713
        %1851 = vst.msk [vmem:[#allocation3 + $0x1c0] sm:$0xff] %vm1794, %v1715
        %1852 = vst.msk [vmem:[#allocation3 + $0x1c8] sm:$0xff] %vm1794, %v1717
        %1853 = vst.msk [vmem:[#allocation3 + $0x1d0] sm:$0xff] %vm1794, %v1719
        %1854 = vst.msk [vmem:[#allocation3 + $0x1d8] sm:$0xff] %vm1794, %v1721
        %1855 = vst.msk [vmem:[#allocation3 + $0x1e0] sm:$0xff] %vm1794, %v1723
        %1856 = vst.msk [vmem:[#allocation3 + $0x1e8] sm:$0xff] %vm1794, %v1725
        %1857 = vst.msk [vmem:[#allocation3 + $0x1f0] sm:$0xff] %vm1794, %v1727
        %1858 = vst.msk [vmem:[#allocation3 + $0x1f8] sm:$0xff] %vm1794, %v1729
        %v1859 = vld [vmem:[#allocation2 + $0x2] sm:$0xff]
        %v1860 = vld [vmem:[#allocation2 + $0xa] sm:$0xff]
        %v1861 = vld [vmem:[#allocation2 + $0x12] sm:$0xff]
        %v1862 = vld [vmem:[#allocation2 + $0x1a] sm:$0xff]
        %v1863 = vld [vmem:[#allocation2 + $0x2a] sm:$0xff]
        %v1864 = vld [vmem:[#allocation2 + $0x32] sm:$0xff]
        %v1865 = vld [vmem:[#allocation2 + $0x3a] sm:$0xff]
        %v1866 = vld [vmem:[#allocation2 + $0x42] sm:$0xff]
        %v1867 = vld [vmem:[#allocation2 + $0x52] sm:$0xff]
        %v1868 = vld [vmem:[#allocation2 + $0x5a] sm:$0xff]
        %v1869 = vld [vmem:[#allocation2 + $0x62] sm:$0xff]
        %v1870 = vld [vmem:[#allocation2 + $0x6a] sm:$0xff]
        %v1871 = vld [vmem:[#allocation2 + $0x7a] sm:$0xff]
        %v1872 = vld [vmem:[#allocation2 + $0x82] sm:$0xff]
        %v1873 = vld [vmem:[#allocation2 + $0x8a] sm:$0xff]
        %v1874 = vld [vmem:[#allocation2 + $0x92] sm:$0xff]
        %v1875 = vld [vmem:[#allocation2 + $0xa2] sm:$0xff]
        %v1876 = vld [vmem:[#allocation2 + $0xaa] sm:$0xff]
        %v1877 = vld [vmem:[#allocation2 + $0xb2] sm:$0xff]
        %v1878 = vld [vmem:[#allocation2 + $0xba] sm:$0xff]
        %v1879 = vld [vmem:[#allocation2 + $0xca] sm:$0xff]
        %v1880 = vld [vmem:[#allocation2 + $0xd2] sm:$0xff]
        %v1881 = vld [vmem:[#allocation2 + $0xda] sm:$0xff]
        %v1882 = vld [vmem:[#allocation2 + $0xe2] sm:$0xff]
        %v1883 = vld [vmem:[#allocation2 + $0xf2] sm:$0xff]
        %v1884 = vld [vmem:[#allocation2 + $0xfa] sm:$0xff]
        %v1885 = vld [vmem:[#allocation2 + $0x102] sm:$0xff]
        %v1886 = vld [vmem:[#allocation2 + $0x10a] sm:$0xff]
        %v1887 = vld [vmem:[#allocation2 + $0x11a] sm:$0xff]
        %v1888 = vld [vmem:[#allocation2 + $0x122] sm:$0xff]
        %v1889 = vld [vmem:[#allocation2 + $0x12a] sm:$0xff]
        %v1890 = vld [vmem:[#allocation2 + $0x132] sm:$0xff]
        %v1891 = vld [vmem:[#allocation2 + $0x142] sm:$0xff]
        %v1892 = vld [vmem:[#allocation2 + $0x14a] sm:$0xff]
        %v1893 = vld [vmem:[#allocation2 + $0x152] sm:$0xff]
        %v1894 = vld [vmem:[#allocation2 + $0x15a] sm:$0xff]
        %v1895 = vld [vmem:[#allocation2 + $0x16a] sm:$0xff]
        %v1896 = vld [vmem:[#allocation2 + $0x172] sm:$0xff]
        %v1897 = vld [vmem:[#allocation2 + $0x17a] sm:$0xff]
        %v1898 = vld [vmem:[#allocation2 + $0x182] sm:$0xff]
        %v1899 = vld [vmem:[#allocation2 + $0x192] sm:$0xff]
        %v1900 = vld [vmem:[#allocation2 + $0x19a] sm:$0xff]
        %v1901 = vld [vmem:[#allocation2 + $0x1a2] sm:$0xff]
        %v1902 = vld [vmem:[#allocation2 + $0x1aa] sm:$0xff]
        %v1903 = vld [vmem:[#allocation2 + $0x1ba] sm:$0xff]
        %v1904 = vld [vmem:[#allocation2 + $0x1c2] sm:$0xff]
        %v1905 = vld [vmem:[#allocation2 + $0x1ca] sm:$0xff]
        %v1906 = vld [vmem:[#allocation2 + $0x1d2] sm:$0xff]
        %v1907 = vld [vmem:[#allocation2 + $0x1e2] sm:$0xff]
        %v1908 = vld [vmem:[#allocation2 + $0x1ea] sm:$0xff]
        %v1909 = vld [vmem:[#allocation2 + $0x1f2] sm:$0xff]
        %v1910 = vld [vmem:[#allocation2 + $0x1fa] sm:$0xff]
        %v1911 = vld [vmem:[#allocation2 + $0x20a] sm:$0xff]
        %v1912 = vld [vmem:[#allocation2 + $0x212] sm:$0xff]
        %v1913 = vld [vmem:[#allocation2 + $0x21a] sm:$0xff]
        %v1914 = vld [vmem:[#allocation2 + $0x222] sm:$0xff]
        %v1915 = vld [vmem:[#allocation2 + $0x232] sm:$0xff]
        %v1916 = vld [vmem:[#allocation2 + $0x23a] sm:$0xff]
        %v1917 = vld [vmem:[#allocation2 + $0x242] sm:$0xff]
        %v1918 = vld [vmem:[#allocation2 + $0x24a] sm:$0xff]
        %v1919 = vld [vmem:[#allocation2 + $0x25a] sm:$0xff]
        %v1920 = vld [vmem:[#allocation2 + $0x262] sm:$0xff]
        %v1921 = vld [vmem:[#allocation2 + $0x26a] sm:$0xff]
        %v1922 = vld [vmem:[#allocation2 + $0x272] sm:$0xff]
        %1987 = vrot.lane.b32.xlu0 %v1859, 24
        %v1988 = vpop.permute.xlu0 %1987
        %1989 = vrot.lane.b32.xlu0 %v1860, 24
        %v1990 = vpop.permute.xlu0 %1989
        %1991 = vrot.lane.b32.xlu0 %v1861, 24
        %v1992 = vpop.permute.xlu0 %1991
        %1993 = vrot.lane.b32.xlu0 %v1862, 24
        %v1994 = vpop.permute.xlu0 %1993
        %1995 = vrot.lane.b32.xlu0 %v1863, 24
        %v1996 = vpop.permute.xlu0 %1995
        %1997 = vrot.lane.b32.xlu0 %v1864, 24
        %v1998 = vpop.permute.xlu0 %1997
        %1999 = vrot.lane.b32.xlu0 %v1865, 24
        %v2000 = vpop.permute.xlu0 %1999
        %2001 = vrot.lane.b32.xlu0 %v1866, 24
        %v2002 = vpop.permute.xlu0 %2001
        %2003 = vrot.lane.b32.xlu0 %v1867, 24
        %v2004 = vpop.permute.xlu0 %2003
        %2005 = vrot.lane.b32.xlu0 %v1868, 24
        %v2006 = vpop.permute.xlu0 %2005
        %2007 = vrot.lane.b32.xlu0 %v1869, 24
        %v2008 = vpop.permute.xlu0 %2007
        %2009 = vrot.lane.b32.xlu0 %v1870, 24
        %v2010 = vpop.permute.xlu0 %2009
        %2011 = vrot.lane.b32.xlu0 %v1871, 24
        %v2012 = vpop.permute.xlu0 %2011
        %2013 = vrot.lane.b32.xlu0 %v1872, 24
        %v2014 = vpop.permute.xlu0 %2013
        %2015 = vrot.lane.b32.xlu0 %v1873, 24
        %v2016 = vpop.permute.xlu0 %2015
        %2017 = vrot.lane.b32.xlu0 %v1874, 24
        %v2018 = vpop.permute.xlu0 %2017
        %2019 = vrot.lane.b32.xlu0 %v1875, 24
        %v2020 = vpop.permute.xlu0 %2019
        %2021 = vrot.lane.b32.xlu0 %v1876, 24
        %v2022 = vpop.permute.xlu0 %2021
        %2023 = vrot.lane.b32.xlu0 %v1877, 24
        %v2024 = vpop.permute.xlu0 %2023
        %2025 = vrot.lane.b32.xlu0 %v1878, 24
        %v2026 = vpop.permute.xlu0 %2025
        %2027 = vrot.lane.b32.xlu0 %v1879, 24
        %v2028 = vpop.permute.xlu0 %2027
        %2029 = vrot.lane.b32.xlu0 %v1880, 24
        %v2030 = vpop.permute.xlu0 %2029
        %2031 = vrot.lane.b32.xlu0 %v1881, 24
        %v2032 = vpop.permute.xlu0 %2031
        %2033 = vrot.lane.b32.xlu0 %v1882, 24
        %v2034 = vpop.permute.xlu0 %2033
        %2035 = vrot.lane.b32.xlu0 %v1883, 24
        %v2036 = vpop.permute.xlu0 %2035
        %2037 = vrot.lane.b32.xlu0 %v1884, 24
        %v2038 = vpop.permute.xlu0 %2037
        %2039 = vrot.lane.b32.xlu0 %v1885, 24
        %v2040 = vpop.permute.xlu0 %2039
        %2041 = vrot.lane.b32.xlu0 %v1886, 24
        %v2042 = vpop.permute.xlu0 %2041
        %2043 = vrot.lane.b32.xlu0 %v1887, 24
        %v2044 = vpop.permute.xlu0 %2043
        %2045 = vrot.lane.b32.xlu0 %v1888, 24
        %v2046 = vpop.permute.xlu0 %2045
        %2047 = vrot.lane.b32.xlu0 %v1889, 24
        %v2048 = vpop.permute.xlu0 %2047
        %2049 = vrot.lane.b32.xlu0 %v1890, 24
        %v2050 = vpop.permute.xlu0 %2049
        %2051 = vrot.lane.b32.xlu0 %v1891, 24
        %v2052 = vpop.permute.xlu0 %2051
        %2053 = vrot.lane.b32.xlu0 %v1892, 24
        %v2054 = vpop.permute.xlu0 %2053
        %2055 = vrot.lane.b32.xlu0 %v1893, 24
        %v2056 = vpop.permute.xlu0 %2055
        %2057 = vrot.lane.b32.xlu0 %v1894, 24
        %v2058 = vpop.permute.xlu0 %2057
        %2059 = vrot.lane.b32.xlu0 %v1895, 24
        %v2060 = vpop.permute.xlu0 %2059
        %2061 = vrot.lane.b32.xlu0 %v1896, 24
        %v2062 = vpop.permute.xlu0 %2061
        %2063 = vrot.lane.b32.xlu0 %v1897, 24
        %v2064 = vpop.permute.xlu0 %2063
        %2065 = vrot.lane.b32.xlu0 %v1898, 24
        %v2066 = vpop.permute.xlu0 %2065
        %2067 = vrot.lane.b32.xlu0 %v1899, 24
        %v2068 = vpop.permute.xlu0 %2067
        %2069 = vrot.lane.b32.xlu0 %v1900, 24
        %v2070 = vpop.permute.xlu0 %2069
        %2071 = vrot.lane.b32.xlu0 %v1901, 24
        %v2072 = vpop.permute.xlu0 %2071
        %2073 = vrot.lane.b32.xlu0 %v1902, 24
        %v2074 = vpop.permute.xlu0 %2073
        %2075 = vrot.lane.b32.xlu0 %v1903, 24
        %v2076 = vpop.permute.xlu0 %2075
        %2077 = vrot.lane.b32.xlu0 %v1904, 24
        %v2078 = vpop.permute.xlu0 %2077
        %2079 = vrot.lane.b32.xlu0 %v1905, 24
        %v2080 = vpop.permute.xlu0 %2079
        %2081 = vrot.lane.b32.xlu0 %v1906, 24
        %v2082 = vpop.permute.xlu0 %2081
        %2083 = vrot.lane.b32.xlu0 %v1907, 24
        %v2084 = vpop.permute.xlu0 %2083
        %2085 = vrot.lane.b32.xlu0 %v1908, 24
        %v2086 = vpop.permute.xlu0 %2085
        %2087 = vrot.lane.b32.xlu0 %v1909, 24
        %v2088 = vpop.permute.xlu0 %2087
        %2089 = vrot.lane.b32.xlu0 %v1910, 24
        %v2090 = vpop.permute.xlu0 %2089
        %2091 = vrot.lane.b32.xlu0 %v1911, 24
        %v2092 = vpop.permute.xlu0 %2091
        %2093 = vrot.lane.b32.xlu0 %v1912, 24
        %v2094 = vpop.permute.xlu0 %2093
        %2095 = vrot.lane.b32.xlu0 %v1913, 24
        %v2096 = vpop.permute.xlu0 %2095
        %2097 = vrot.lane.b32.xlu0 %v1914, 24
        %v2098 = vpop.permute.xlu0 %2097
        %2099 = vrot.lane.b32.xlu0 %v1915, 24
        %v2100 = vpop.permute.xlu0 %2099
        %2101 = vrot.lane.b32.xlu0 %v1916, 24
        %v2102 = vpop.permute.xlu0 %2101
        %2103 = vrot.lane.b32.xlu0 %v1917, 24
        %v2104 = vpop.permute.xlu0 %2103
        %2105 = vrot.lane.b32.xlu0 %v1918, 24
        %v2106 = vpop.permute.xlu0 %2105
        %2107 = vrot.lane.b32.xlu0 %v1919, 24
        %v2108 = vpop.permute.xlu0 %2107
        %2109 = vrot.lane.b32.xlu0 %v1920, 24
        %v2110 = vpop.permute.xlu0 %2109
        %2111 = vrot.lane.b32.xlu0 %v1921, 24
        %v2112 = vpop.permute.xlu0 %2111
        %2113 = vrot.lane.b32.xlu0 %v1922, 24
        %v2114 = vpop.permute.xlu0 %2113
        %vm2179 = vcmask 294080
        %2180 = vst.msk [vmem:[#allocation3] sm:$0xff] %vm2179, %v1988
        %2181 = vst.msk [vmem:[#allocation3 + $0x8] sm:$0xff] %vm2179, %v1990
        %2182 = vst.msk [vmem:[#allocation3 + $0x10] sm:$0xff] %vm2179, %v1992
        %2183 = vst.msk [vmem:[#allocation3 + $0x18] sm:$0xff] %vm2179, %v1994
        %2184 = vst.msk [vmem:[#allocation3 + $0x20] sm:$0xff] %vm2179, %v1996
        %2185 = vst.msk [vmem:[#allocation3 + $0x28] sm:$0xff] %vm2179, %v1998
        %2186 = vst.msk [vmem:[#allocation3 + $0x30] sm:$0xff] %vm2179, %v2000
        %2187 = vst.msk [vmem:[#allocation3 + $0x38] sm:$0xff] %vm2179, %v2002
        %2188 = vst.msk [vmem:[#allocation3 + $0x40] sm:$0xff] %vm2179, %v2004
        %2189 = vst.msk [vmem:[#allocation3 + $0x48] sm:$0xff] %vm2179, %v2006
        %2190 = vst.msk [vmem:[#allocation3 + $0x50] sm:$0xff] %vm2179, %v2008
        %2191 = vst.msk [vmem:[#allocation3 + $0x58] sm:$0xff] %vm2179, %v2010
        %2192 = vst.msk [vmem:[#allocation3 + $0x60] sm:$0xff] %vm2179, %v2012
        %2193 = vst.msk [vmem:[#allocation3 + $0x68] sm:$0xff] %vm2179, %v2014
        %2194 = vst.msk [vmem:[#allocation3 + $0x70] sm:$0xff] %vm2179, %v2016
        %2195 = vst.msk [vmem:[#allocation3 + $0x78] sm:$0xff] %vm2179, %v2018
        %2196 = vst.msk [vmem:[#allocation3 + $0x80] sm:$0xff] %vm2179, %v2020
        %2197 = vst.msk [vmem:[#allocation3 + $0x88] sm:$0xff] %vm2179, %v2022
        %2198 = vst.msk [vmem:[#allocation3 + $0x90] sm:$0xff] %vm2179, %v2024
        %2199 = vst.msk [vmem:[#allocation3 + $0x98] sm:$0xff] %vm2179, %v2026
        %2200 = vst.msk [vmem:[#allocation3 + $0xa0] sm:$0xff] %vm2179, %v2028
        %2201 = vst.msk [vmem:[#allocation3 + $0xa8] sm:$0xff] %vm2179, %v2030
        %2202 = vst.msk [vmem:[#allocation3 + $0xb0] sm:$0xff] %vm2179, %v2032
        %2203 = vst.msk [vmem:[#allocation3 + $0xb8] sm:$0xff] %vm2179, %v2034
        %2204 = vst.msk [vmem:[#allocation3 + $0xc0] sm:$0xff] %vm2179, %v2036
        %2205 = vst.msk [vmem:[#allocation3 + $0xc8] sm:$0xff] %vm2179, %v2038
        %2206 = vst.msk [vmem:[#allocation3 + $0xd0] sm:$0xff] %vm2179, %v2040
        %2207 = vst.msk [vmem:[#allocation3 + $0xd8] sm:$0xff] %vm2179, %v2042
        %2208 = vst.msk [vmem:[#allocation3 + $0xe0] sm:$0xff] %vm2179, %v2044
        %2209 = vst.msk [vmem:[#allocation3 + $0xe8] sm:$0xff] %vm2179, %v2046
        %2210 = vst.msk [vmem:[#allocation3 + $0xf0] sm:$0xff] %vm2179, %v2048
        %2211 = vst.msk [vmem:[#allocation3 + $0xf8] sm:$0xff] %vm2179, %v2050
        %2212 = vst.msk [vmem:[#allocation3 + $0x100] sm:$0xff] %vm2179, %v2052
        %2213 = vst.msk [vmem:[#allocation3 + $0x108] sm:$0xff] %vm2179, %v2054
        %2214 = vst.msk [vmem:[#allocation3 + $0x110] sm:$0xff] %vm2179, %v2056
        %2215 = vst.msk [vmem:[#allocation3 + $0x118] sm:$0xff] %vm2179, %v2058
        %2216 = vst.msk [vmem:[#allocation3 + $0x120] sm:$0xff] %vm2179, %v2060
        %2217 = vst.msk [vmem:[#allocation3 + $0x128] sm:$0xff] %vm2179, %v2062
        %2218 = vst.msk [vmem:[#allocation3 + $0x130] sm:$0xff] %vm2179, %v2064
        %2219 = vst.msk [vmem:[#allocation3 + $0x138] sm:$0xff] %vm2179, %v2066
        %2220 = vst.msk [vmem:[#allocation3 + $0x140] sm:$0xff] %vm2179, %v2068
        %2221 = vst.msk [vmem:[#allocation3 + $0x148] sm:$0xff] %vm2179, %v2070
        %2222 = vst.msk [vmem:[#allocation3 + $0x150] sm:$0xff] %vm2179, %v2072
        %2223 = vst.msk [vmem:[#allocation3 + $0x158] sm:$0xff] %vm2179, %v2074
        %2224 = vst.msk [vmem:[#allocation3 + $0x160] sm:$0xff] %vm2179, %v2076
        %2225 = vst.msk [vmem:[#allocation3 + $0x168] sm:$0xff] %vm2179, %v2078
        %2226 = vst.msk [vmem:[#allocation3 + $0x170] sm:$0xff] %vm2179, %v2080
        %2227 = vst.msk [vmem:[#allocation3 + $0x178] sm:$0xff] %vm2179, %v2082
        %2228 = vst.msk [vmem:[#allocation3 + $0x180] sm:$0xff] %vm2179, %v2084
        %2229 = vst.msk [vmem:[#allocation3 + $0x188] sm:$0xff] %vm2179, %v2086
        %2230 = vst.msk [vmem:[#allocation3 + $0x190] sm:$0xff] %vm2179, %v2088
        %2231 = vst.msk [vmem:[#allocation3 + $0x198] sm:$0xff] %vm2179, %v2090
        %2232 = vst.msk [vmem:[#allocation3 + $0x1a0] sm:$0xff] %vm2179, %v2092
        %2233 = vst.msk [vmem:[#allocation3 + $0x1a8] sm:$0xff] %vm2179, %v2094
        %2234 = vst.msk [vmem:[#allocation3 + $0x1b0] sm:$0xff] %vm2179, %v2096
        %2235 = vst.msk [vmem:[#allocation3 + $0x1b8] sm:$0xff] %vm2179, %v2098
        %2236 = vst.msk [vmem:[#allocation3 + $0x1c0] sm:$0xff] %vm2179, %v2100
        %2237 = vst.msk [vmem:[#allocation3 + $0x1c8] sm:$0xff] %vm2179, %v2102
        %2238 = vst.msk [vmem:[#allocation3 + $0x1d0] sm:$0xff] %vm2179, %v2104
        %2239 = vst.msk [vmem:[#allocation3 + $0x1d8] sm:$0xff] %vm2179, %v2106
        %2240 = vst.msk [vmem:[#allocation3 + $0x1e0] sm:$0xff] %vm2179, %v2108
        %2241 = vst.msk [vmem:[#allocation3 + $0x1e8] sm:$0xff] %vm2179, %v2110
        %2242 = vst.msk [vmem:[#allocation3 + $0x1f0] sm:$0xff] %vm2179, %v2112
        %2243 = vst.msk [vmem:[#allocation3 + $0x1f8] sm:$0xff] %vm2179, %v2114
        %v2244 = vld [vmem:[%s830] sm:$0xff]
        %v2245 = vld [vmem:[%s830 + $0x8] sm:$0xff]
        %v2246 = vld [vmem:[%s830 + $0x10] sm:$0xff]
        %v2247 = vld [vmem:[%s830 + $0x18] sm:$0xff]
        %v2248 = vld [vmem:[%s830 + $0x28] sm:$0xff]
        %v2249 = vld [vmem:[%s830 + $0x30] sm:$0xff]
        %v2250 = vld [vmem:[%s830 + $0x38] sm:$0xff]
        %v2251 = vld [vmem:[%s830 + $0x40] sm:$0xff]
        %v2252 = vld [vmem:[%s830 + $0x50] sm:$0xff]
        %v2253 = vld [vmem:[%s830 + $0x58] sm:$0xff]
        %v2254 = vld [vmem:[%s830 + $0x60] sm:$0xff]
        %v2255 = vld [vmem:[%s830 + $0x68] sm:$0xff]
        %v2256 = vld [vmem:[%s830 + $0x78] sm:$0xff]
        %v2257 = vld [vmem:[%s830 + $0x80] sm:$0xff]
        %v2258 = vld [vmem:[%s830 + $0x88] sm:$0xff]
        %v2259 = vld [vmem:[%s830 + $0x90] sm:$0xff]
        %v2260 = vld [vmem:[%s830 + $0xa0] sm:$0xff]
        %v2261 = vld [vmem:[%s830 + $0xa8] sm:$0xff]
        %v2262 = vld [vmem:[%s830 + $0xb0] sm:$0xff]
        %v2263 = vld [vmem:[%s830 + $0xb8] sm:$0xff]
        %v2264 = vld [vmem:[%s830 + $0xc8] sm:$0xff]
        %v2265 = vld [vmem:[%s830 + $0xd0] sm:$0xff]
        %v2266 = vld [vmem:[%s830 + $0xd8] sm:$0xff]
        %v2267 = vld [vmem:[%s830 + $0xe0] sm:$0xff]
        %v2268 = vld [vmem:[%s830 + $0xf0] sm:$0xff]
        %v2269 = vld [vmem:[%s830 + $0xf8] sm:$0xff]
        %v2270 = vld [vmem:[%s830 + $0x100] sm:$0xff]
        %v2271 = vld [vmem:[%s830 + $0x108] sm:$0xff]
        %v2272 = vld [vmem:[%s830 + $0x118] sm:$0xff]
        %v2273 = vld [vmem:[%s830 + $0x120] sm:$0xff]
        %v2274 = vld [vmem:[%s830 + $0x128] sm:$0xff]
        %v2275 = vld [vmem:[%s830 + $0x130] sm:$0xff]
        %v2276 = vld [vmem:[%s830 + $0x140] sm:$0xff]
        %v2277 = vld [vmem:[%s830 + $0x148] sm:$0xff]
        %v2278 = vld [vmem:[%s830 + $0x150] sm:$0xff]
        %v2279 = vld [vmem:[%s830 + $0x158] sm:$0xff]
        %v2280 = vld [vmem:[%s830 + $0x168] sm:$0xff]
        %v2281 = vld [vmem:[%s830 + $0x170] sm:$0xff]
        %v2282 = vld [vmem:[%s830 + $0x178] sm:$0xff]
        %v2283 = vld [vmem:[%s830 + $0x180] sm:$0xff]
        %v2284 = vld [vmem:[%s830 + $0x190] sm:$0xff]
        %v2285 = vld [vmem:[%s830 + $0x198] sm:$0xff]
        %v2286 = vld [vmem:[%s830 + $0x1a0] sm:$0xff]
        %v2287 = vld [vmem:[%s830 + $0x1a8] sm:$0xff]
        %v2288 = vld [vmem:[%s830 + $0x1b8] sm:$0xff]
        %v2289 = vld [vmem:[%s830 + $0x1c0] sm:$0xff]
        %v2290 = vld [vmem:[%s830 + $0x1c8] sm:$0xff]
        %v2291 = vld [vmem:[%s830 + $0x1d0] sm:$0xff]
        %v2292 = vld [vmem:[%s830 + $0x1e0] sm:$0xff]
        %v2293 = vld [vmem:[%s830 + $0x1e8] sm:$0xff]
        %v2294 = vld [vmem:[%s830 + $0x1f0] sm:$0xff]
        %v2295 = vld [vmem:[%s830 + $0x1f8] sm:$0xff]
        %v2296 = vld [vmem:[%s830 + $0x208] sm:$0xff]
        %v2297 = vld [vmem:[%s830 + $0x210] sm:$0xff]
        %v2298 = vld [vmem:[%s830 + $0x218] sm:$0xff]
        %v2299 = vld [vmem:[%s830 + $0x220] sm:$0xff]
        %v2300 = vld [vmem:[%s830 + $0x230] sm:$0xff]
        %v2301 = vld [vmem:[%s830 + $0x238] sm:$0xff]
        %v2302 = vld [vmem:[%s830 + $0x240] sm:$0xff]
        %v2303 = vld [vmem:[%s830 + $0x248] sm:$0xff]
        %v2304 = vld [vmem:[%s830 + $0x258] sm:$0xff]
        %v2305 = vld [vmem:[%s830 + $0x260] sm:$0xff]
        %v2306 = vld [vmem:[%s830 + $0x268] sm:$0xff]
        %v2307 = vld [vmem:[%s830 + $0x270] sm:$0xff]
        %2372 = vrot.lane.b32.xlu0 %v2244, 36
        %v2373 = vpop.permute.xlu0 %2372
        %2374 = vrot.lane.b32.xlu0 %v2245, 36
        %v2375 = vpop.permute.xlu0 %2374
        %2376 = vrot.lane.b32.xlu0 %v2246, 36
        %v2377 = vpop.permute.xlu0 %2376
        %2378 = vrot.lane.b32.xlu0 %v2247, 36
        %v2379 = vpop.permute.xlu0 %2378
        %2380 = vrot.lane.b32.xlu0 %v2248, 36
        %v2381 = vpop.permute.xlu0 %2380
        %2382 = vrot.lane.b32.xlu0 %v2249, 36
        %v2383 = vpop.permute.xlu0 %2382
        %2384 = vrot.lane.b32.xlu0 %v2250, 36
        %v2385 = vpop.permute.xlu0 %2384
        %2386 = vrot.lane.b32.xlu0 %v2251, 36
        %v2387 = vpop.permute.xlu0 %2386
        %2388 = vrot.lane.b32.xlu0 %v2252, 36
        %v2389 = vpop.permute.xlu0 %2388
        %2390 = vrot.lane.b32.xlu0 %v2253, 36
        %v2391 = vpop.permute.xlu0 %2390
        %2392 = vrot.lane.b32.xlu0 %v2254, 36
        %v2393 = vpop.permute.xlu0 %2392
        %2394 = vrot.lane.b32.xlu0 %v2255, 36
        %v2395 = vpop.permute.xlu0 %2394
        %2396 = vrot.lane.b32.xlu0 %v2256, 36
        %v2397 = vpop.permute.xlu0 %2396
        %2398 = vrot.lane.b32.xlu0 %v2257, 36
        %v2399 = vpop.permute.xlu0 %2398
        %2400 = vrot.lane.b32.xlu0 %v2258, 36
        %v2401 = vpop.permute.xlu0 %2400
        %2402 = vrot.lane.b32.xlu0 %v2259, 36
        %v2403 = vpop.permute.xlu0 %2402
        %2404 = vrot.lane.b32.xlu0 %v2260, 36
        %v2405 = vpop.permute.xlu0 %2404
        %2406 = vrot.lane.b32.xlu0 %v2261, 36
        %v2407 = vpop.permute.xlu0 %2406
        %2408 = vrot.lane.b32.xlu0 %v2262, 36
        %v2409 = vpop.permute.xlu0 %2408
        %2410 = vrot.lane.b32.xlu0 %v2263, 36
        %v2411 = vpop.permute.xlu0 %2410
        %2412 = vrot.lane.b32.xlu0 %v2264, 36
        %v2413 = vpop.permute.xlu0 %2412
        %2414 = vrot.lane.b32.xlu0 %v2265, 36
        %v2415 = vpop.permute.xlu0 %2414
        %2416 = vrot.lane.b32.xlu0 %v2266, 36
        %v2417 = vpop.permute.xlu0 %2416
        %2418 = vrot.lane.b32.xlu0 %v2267, 36
        %v2419 = vpop.permute.xlu0 %2418
        %2420 = vrot.lane.b32.xlu0 %v2268, 36
        %v2421 = vpop.permute.xlu0 %2420
        %2422 = vrot.lane.b32.xlu0 %v2269, 36
        %v2423 = vpop.permute.xlu0 %2422
        %2424 = vrot.lane.b32.xlu0 %v2270, 36
        %v2425 = vpop.permute.xlu0 %2424
        %2426 = vrot.lane.b32.xlu0 %v2271, 36
        %v2427 = vpop.permute.xlu0 %2426
        %2428 = vrot.lane.b32.xlu0 %v2272, 36
        %v2429 = vpop.permute.xlu0 %2428
        %2430 = vrot.lane.b32.xlu0 %v2273, 36
        %v2431 = vpop.permute.xlu0 %2430
        %2432 = vrot.lane.b32.xlu0 %v2274, 36
        %v2433 = vpop.permute.xlu0 %2432
        %2434 = vrot.lane.b32.xlu0 %v2275, 36
        %v2435 = vpop.permute.xlu0 %2434
        %2436 = vrot.lane.b32.xlu0 %v2276, 36
        %v2437 = vpop.permute.xlu0 %2436
        %2438 = vrot.lane.b32.xlu0 %v2277, 36
        %v2439 = vpop.permute.xlu0 %2438
        %2440 = vrot.lane.b32.xlu0 %v2278, 36
        %v2441 = vpop.permute.xlu0 %2440
        %2442 = vrot.lane.b32.xlu0 %v2279, 36
        %v2443 = vpop.permute.xlu0 %2442
        %2444 = vrot.lane.b32.xlu0 %v2280, 36
        %v2445 = vpop.permute.xlu0 %2444
        %2446 = vrot.lane.b32.xlu0 %v2281, 36
        %v2447 = vpop.permute.xlu0 %2446
        %2448 = vrot.lane.b32.xlu0 %v2282, 36
        %v2449 = vpop.permute.xlu0 %2448
        %2450 = vrot.lane.b32.xlu0 %v2283, 36
        %v2451 = vpop.permute.xlu0 %2450
        %2452 = vrot.lane.b32.xlu0 %v2284, 36
        %v2453 = vpop.permute.xlu0 %2452
        %2454 = vrot.lane.b32.xlu0 %v2285, 36
        %v2455 = vpop.permute.xlu0 %2454
        %2456 = vrot.lane.b32.xlu0 %v2286, 36
        %v2457 = vpop.permute.xlu0 %2456
        %2458 = vrot.lane.b32.xlu0 %v2287, 36
        %v2459 = vpop.permute.xlu0 %2458
        %2460 = vrot.lane.b32.xlu0 %v2288, 36
        %v2461 = vpop.permute.xlu0 %2460
        %2462 = vrot.lane.b32.xlu0 %v2289, 36
        %v2463 = vpop.permute.xlu0 %2462
        %2464 = vrot.lane.b32.xlu0 %v2290, 36
        %v2465 = vpop.permute.xlu0 %2464
        %2466 = vrot.lane.b32.xlu0 %v2291, 36
        %v2467 = vpop.permute.xlu0 %2466
        %2468 = vrot.lane.b32.xlu0 %v2292, 36
        %v2469 = vpop.permute.xlu0 %2468
        %2470 = vrot.lane.b32.xlu0 %v2293, 36
        %v2471 = vpop.permute.xlu0 %2470
        %2472 = vrot.lane.b32.xlu0 %v2294, 36
        %v2473 = vpop.permute.xlu0 %2472
        %2474 = vrot.lane.b32.xlu0 %v2295, 36
        %v2475 = vpop.permute.xlu0 %2474
        %2476 = vrot.lane.b32.xlu0 %v2296, 36
        %v2477 = vpop.permute.xlu0 %2476
        %2478 = vrot.lane.b32.xlu0 %v2297, 36
        %v2479 = vpop.permute.xlu0 %2478
        %2480 = vrot.lane.b32.xlu0 %v2298, 36
        %v2481 = vpop.permute.xlu0 %2480
        %2482 = vrot.lane.b32.xlu0 %v2299, 36
        %v2483 = vpop.permute.xlu0 %2482
        %2484 = vrot.lane.b32.xlu0 %v2300, 36
        %v2485 = vpop.permute.xlu0 %2484
        %2486 = vrot.lane.b32.xlu0 %v2301, 36
        %v2487 = vpop.permute.xlu0 %2486
        %2488 = vrot.lane.b32.xlu0 %v2302, 36
        %v2489 = vpop.permute.xlu0 %2488
        %2490 = vrot.lane.b32.xlu0 %v2303, 36
        %v2491 = vpop.permute.xlu0 %2490
        %2492 = vrot.lane.b32.xlu0 %v2304, 36
        %v2493 = vpop.permute.xlu0 %2492
        %2494 = vrot.lane.b32.xlu0 %v2305, 36
        %v2495 = vpop.permute.xlu0 %2494
        %2496 = vrot.lane.b32.xlu0 %v2306, 36
        %v2497 = vpop.permute.xlu0 %2496
        %2498 = vrot.lane.b32.xlu0 %v2307, 36
        %v2499 = vpop.permute.xlu0 %2498
        %vm2564 = vcmask 392480
        %2565 = vst.msk [vmem:[#allocation3] sm:$0xff] %vm2564, %v2373
        %2566 = vst.msk [vmem:[#allocation3 + $0x8] sm:$0xff] %vm2564, %v2375
        %2567 = vst.msk [vmem:[#allocation3 + $0x10] sm:$0xff] %vm2564, %v2377
        %2568 = vst.msk [vmem:[#allocation3 + $0x18] sm:$0xff] %vm2564, %v2379
        %2569 = vst.msk [vmem:[#allocation3 + $0x20] sm:$0xff] %vm2564, %v2381
        %2570 = vst.msk [vmem:[#allocation3 + $0x28] sm:$0xff] %vm2564, %v2383
        %2571 = vst.msk [vmem:[#allocation3 + $0x30] sm:$0xff] %vm2564, %v2385
        %2572 = vst.msk [vmem:[#allocation3 + $0x38] sm:$0xff] %vm2564, %v2387
        %2573 = vst.msk [vmem:[#allocation3 + $0x40] sm:$0xff] %vm2564, %v2389
        %2574 = vst.msk [vmem:[#allocation3 + $0x48] sm:$0xff] %vm2564, %v2391
        %2575 = vst.msk [vmem:[#allocation3 + $0x50] sm:$0xff] %vm2564, %v2393
        %2576 = vst.msk [vmem:[#allocation3 + $0x58] sm:$0xff] %vm2564, %v2395
        %2577 = vst.msk [vmem:[#allocation3 + $0x60] sm:$0xff] %vm2564, %v2397
        %2578 = vst.msk [vmem:[#allocation3 + $0x68] sm:$0xff] %vm2564, %v2399
        %2579 = vst.msk [vmem:[#allocation3 + $0x70] sm:$0xff] %vm2564, %v2401
        %2580 = vst.msk [vmem:[#allocation3 + $0x78] sm:$0xff] %vm2564, %v2403
        %2581 = vst.msk [vmem:[#allocation3 + $0x80] sm:$0xff] %vm2564, %v2405
        %2582 = vst.msk [vmem:[#allocation3 + $0x88] sm:$0xff] %vm2564, %v2407
        %2583 = vst.msk [vmem:[#allocation3 + $0x90] sm:$0xff] %vm2564, %v2409
        %2584 = vst.msk [vmem:[#allocation3 + $0x98] sm:$0xff] %vm2564, %v2411
        %2585 = vst.msk [vmem:[#allocation3 + $0xa0] sm:$0xff] %vm2564, %v2413
        %2586 = vst.msk [vmem:[#allocation3 + $0xa8] sm:$0xff] %vm2564, %v2415
        %2587 = vst.msk [vmem:[#allocation3 + $0xb0] sm:$0xff] %vm2564, %v2417
        %2588 = vst.msk [vmem:[#allocation3 + $0xb8] sm:$0xff] %vm2564, %v2419
        %2589 = vst.msk [vmem:[#allocation3 + $0xc0] sm:$0xff] %vm2564, %v2421
        %2590 = vst.msk [vmem:[#allocation3 + $0xc8] sm:$0xff] %vm2564, %v2423
        %2591 = vst.msk [vmem:[#allocation3 + $0xd0] sm:$0xff] %vm2564, %v2425
        %2592 = vst.msk [vmem:[#allocation3 + $0xd8] sm:$0xff] %vm2564, %v2427
        %2593 = vst.msk [vmem:[#allocation3 + $0xe0] sm:$0xff] %vm2564, %v2429
        %2594 = vst.msk [vmem:[#allocation3 + $0xe8] sm:$0xff] %vm2564, %v2431
        %2595 = vst.msk [vmem:[#allocation3 + $0xf0] sm:$0xff] %vm2564, %v2433
        %2596 = vst.msk [vmem:[#allocation3 + $0xf8] sm:$0xff] %vm2564, %v2435
        %2597 = vst.msk [vmem:[#allocation3 + $0x100] sm:$0xff] %vm2564, %v2437
        %2598 = vst.msk [vmem:[#allocation3 + $0x108] sm:$0xff] %vm2564, %v2439
        %2599 = vst.msk [vmem:[#allocation3 + $0x110] sm:$0xff] %vm2564, %v2441
        %2600 = vst.msk [vmem:[#allocation3 + $0x118] sm:$0xff] %vm2564, %v2443
        %2601 = vst.msk [vmem:[#allocation3 + $0x120] sm:$0xff] %vm2564, %v2445
        %2602 = vst.msk [vmem:[#allocation3 + $0x128] sm:$0xff] %vm2564, %v2447
        %2603 = vst.msk [vmem:[#allocation3 + $0x130] sm:$0xff] %vm2564, %v2449
        %2604 = vst.msk [vmem:[#allocation3 + $0x138] sm:$0xff] %vm2564, %v2451
        %2605 = vst.msk [vmem:[#allocation3 + $0x140] sm:$0xff] %vm2564, %v2453
        %2606 = vst.msk [vmem:[#allocation3 + $0x148] sm:$0xff] %vm2564, %v2455
        %2607 = vst.msk [vmem:[#allocation3 + $0x150] sm:$0xff] %vm2564, %v2457
        %2608 = vst.msk [vmem:[#allocation3 + $0x158] sm:$0xff] %vm2564, %v2459
        %2609 = vst.msk [vmem:[#allocation3 + $0x160] sm:$0xff] %vm2564, %v2461
        %2610 = vst.msk [vmem:[#allocation3 + $0x168] sm:$0xff] %vm2564, %v2463
        %2611 = vst.msk [vmem:[#allocation3 + $0x170] sm:$0xff] %vm2564, %v2465
        %2612 = vst.msk [vmem:[#allocation3 + $0x178] sm:$0xff] %vm2564, %v2467
        %2613 = vst.msk [vmem:[#allocation3 + $0x180] sm:$0xff] %vm2564, %v2469
        %2614 = vst.msk [vmem:[#allocation3 + $0x188] sm:$0xff] %vm2564, %v2471
        %2615 = vst.msk [vmem:[#allocation3 + $0x190] sm:$0xff] %vm2564, %v2473
        %2616 = vst.msk [vmem:[#allocation3 + $0x198] sm:$0xff] %vm2564, %v2475
        %2617 = vst.msk [vmem:[#allocation3 + $0x1a0] sm:$0xff] %vm2564, %v2477
        %2618 = vst.msk [vmem:[#allocation3 + $0x1a8] sm:$0xff] %vm2564, %v2479
        %2619 = vst.msk [vmem:[#allocation3 + $0x1b0] sm:$0xff] %vm2564, %v2481
        %2620 = vst.msk [vmem:[#allocation3 + $0x1b8] sm:$0xff] %vm2564, %v2483
        %2621 = vst.msk [vmem:[#allocation3 + $0x1c0] sm:$0xff] %vm2564, %v2485
        %2622 = vst.msk [vmem:[#allocation3 + $0x1c8] sm:$0xff] %vm2564, %v2487
        %2623 = vst.msk [vmem:[#allocation3 + $0x1d0] sm:$0xff] %vm2564, %v2489
        %2624 = vst.msk [vmem:[#allocation3 + $0x1d8] sm:$0xff] %vm2564, %v2491
        %2625 = vst.msk [vmem:[#allocation3 + $0x1e0] sm:$0xff] %vm2564, %v2493
        %2626 = vst.msk [vmem:[#allocation3 + $0x1e8] sm:$0xff] %vm2564, %v2495
        %2627 = vst.msk [vmem:[#allocation3 + $0x1f0] sm:$0xff] %vm2564, %v2497
        %2628 = vst.msk [vmem:[#allocation3 + $0x1f8] sm:$0xff] %vm2564, %v2499
        %v2629 = vld [vmem:[%s830 + $0x1] sm:$0xff]
        %v2630 = vld [vmem:[%s830 + $0x9] sm:$0xff]
        %v2631 = vld [vmem:[%s830 + $0x11] sm:$0xff]
        %v2632 = vld [vmem:[%s830 + $0x19] sm:$0xff]
        %v2633 = vld [vmem:[%s830 + $0x29] sm:$0xff]
        %v2634 = vld [vmem:[%s830 + $0x31] sm:$0xff]
        %v2635 = vld [vmem:[%s830 + $0x39] sm:$0xff]
        %v2636 = vld [vmem:[%s830 + $0x41] sm:$0xff]
        %v2637 = vld [vmem:[%s830 + $0x51] sm:$0xff]
        %v2638 = vld [vmem:[%s830 + $0x59] sm:$0xff]
        %v2639 = vld [vmem:[%s830 + $0x61] sm:$0xff]
        %v2640 = vld [vmem:[%s830 + $0x69] sm:$0xff]
        %v2641 = vld [vmem:[%s830 + $0x79] sm:$0xff]
        %v2642 = vld [vmem:[%s830 + $0x81] sm:$0xff]
        %v2643 = vld [vmem:[%s830 + $0x89] sm:$0xff]
        %v2644 = vld [vmem:[%s830 + $0x91] sm:$0xff]
        %v2645 = vld [vmem:[%s830 + $0xa1] sm:$0xff]
        %v2646 = vld [vmem:[%s830 + $0xa9] sm:$0xff]
        %v2647 = vld [vmem:[%s830 + $0xb1] sm:$0xff]
        %v2648 = vld [vmem:[%s830 + $0xb9] sm:$0xff]
        %v2649 = vld [vmem:[%s830 + $0xc9] sm:$0xff]
        %v2650 = vld [vmem:[%s830 + $0xd1] sm:$0xff]
        %v2651 = vld [vmem:[%s830 + $0xd9] sm:$0xff]
        %v2652 = vld [vmem:[%s830 + $0xe1] sm:$0xff]
        %v2653 = vld [vmem:[%s830 + $0xf1] sm:$0xff]
        %v2654 = vld [vmem:[%s830 + $0xf9] sm:$0xff]
        %v2655 = vld [vmem:[%s830 + $0x101] sm:$0xff]
        %v2656 = vld [vmem:[%s830 + $0x109] sm:$0xff]
        %v2657 = vld [vmem:[%s830 + $0x119] sm:$0xff]
        %v2658 = vld [vmem:[%s830 + $0x121] sm:$0xff]
        %v2659 = vld [vmem:[%s830 + $0x129] sm:$0xff]
        %v2660 = vld [vmem:[%s830 + $0x131] sm:$0xff]
        %v2661 = vld [vmem:[%s830 + $0x141] sm:$0xff]
        %v2662 = vld [vmem:[%s830 + $0x149] sm:$0xff]
        %v2663 = vld [vmem:[%s830 + $0x151] sm:$0xff]
        %v2664 = vld [vmem:[%s830 + $0x159] sm:$0xff]
        %v2665 = vld [vmem:[%s830 + $0x169] sm:$0xff]
        %v2666 = vld [vmem:[%s830 + $0x171] sm:$0xff]
        %v2667 = vld [vmem:[%s830 + $0x179] sm:$0xff]
        %v2668 = vld [vmem:[%s830 + $0x181] sm:$0xff]
        %v2669 = vld [vmem:[%s830 + $0x191] sm:$0xff]
        %v2670 = vld [vmem:[%s830 + $0x199] sm:$0xff]
        %v2671 = vld [vmem:[%s830 + $0x1a1] sm:$0xff]
        %v2672 = vld [vmem:[%s830 + $0x1a9] sm:$0xff]
        %v2673 = vld [vmem:[%s830 + $0x1b9] sm:$0xff]
        %v2674 = vld [vmem:[%s830 + $0x1c1] sm:$0xff]
        %v2675 = vld [vmem:[%s830 + $0x1c9] sm:$0xff]
        %v2676 = vld [vmem:[%s830 + $0x1d1] sm:$0xff]
        %v2677 = vld [vmem:[%s830 + $0x1e1] sm:$0xff]
        %v2678 = vld [vmem:[%s830 + $0x1e9] sm:$0xff]
        %v2679 = vld [vmem:[%s830 + $0x1f1] sm:$0xff]
        %v2680 = vld [vmem:[%s830 + $0x1f9] sm:$0xff]
        %v2681 = vld [vmem:[%s830 + $0x209] sm:$0xff]
        %v2682 = vld [vmem:[%s830 + $0x211] sm:$0xff]
        %v2683 = vld [vmem:[%s830 + $0x219] sm:$0xff]
        %v2684 = vld [vmem:[%s830 + $0x221] sm:$0xff]
        %v2685 = vld [vmem:[%s830 + $0x231] sm:$0xff]
        %v2686 = vld [vmem:[%s830 + $0x239] sm:$0xff]
        %v2687 = vld [vmem:[%s830 + $0x241] sm:$0xff]
        %v2688 = vld [vmem:[%s830 + $0x249] sm:$0xff]
        %v2689 = vld [vmem:[%s830 + $0x259] sm:$0xff]
        %v2690 = vld [vmem:[%s830 + $0x261] sm:$0xff]
        %v2691 = vld [vmem:[%s830 + $0x269] sm:$0xff]
        %v2692 = vld [vmem:[%s830 + $0x271] sm:$0xff]
        %2757 = vrot.lane.b32.xlu0 %v2629, 48
        %v2758 = vpop.permute.xlu0 %2757
        %2759 = vrot.lane.b32.xlu0 %v2630, 48
        %v2760 = vpop.permute.xlu0 %2759
        %2761 = vrot.lane.b32.xlu0 %v2631, 48
        %v2762 = vpop.permute.xlu0 %2761
        %2763 = vrot.lane.b32.xlu0 %v2632, 48
        %v2764 = vpop.permute.xlu0 %2763
        %2765 = vrot.lane.b32.xlu0 %v2633, 48
        %v2766 = vpop.permute.xlu0 %2765
        %2767 = vrot.lane.b32.xlu0 %v2634, 48
        %v2768 = vpop.permute.xlu0 %2767
        %2769 = vrot.lane.b32.xlu0 %v2635, 48
        %v2770 = vpop.permute.xlu0 %2769
        %2771 = vrot.lane.b32.xlu0 %v2636, 48
        %v2772 = vpop.permute.xlu0 %2771
        %2773 = vrot.lane.b32.xlu0 %v2637, 48
        %v2774 = vpop.permute.xlu0 %2773
        %2775 = vrot.lane.b32.xlu0 %v2638, 48
        %v2776 = vpop.permute.xlu0 %2775
        %2777 = vrot.lane.b32.xlu0 %v2639, 48
        %v2778 = vpop.permute.xlu0 %2777
        %2779 = vrot.lane.b32.xlu0 %v2640, 48
        %v2780 = vpop.permute.xlu0 %2779
        %2781 = vrot.lane.b32.xlu0 %v2641, 48
        %v2782 = vpop.permute.xlu0 %2781
        %2783 = vrot.lane.b32.xlu0 %v2642, 48
        %v2784 = vpop.permute.xlu0 %2783
        %2785 = vrot.lane.b32.xlu0 %v2643, 48
        %v2786 = vpop.permute.xlu0 %2785
        %2787 = vrot.lane.b32.xlu0 %v2644, 48
        %v2788 = vpop.permute.xlu0 %2787
        %2789 = vrot.lane.b32.xlu0 %v2645, 48
        %v2790 = vpop.permute.xlu0 %2789
        %2791 = vrot.lane.b32.xlu0 %v2646, 48
        %v2792 = vpop.permute.xlu0 %2791
        %2793 = vrot.lane.b32.xlu0 %v2647, 48
        %v2794 = vpop.permute.xlu0 %2793
        %2795 = vrot.lane.b32.xlu0 %v2648, 48
        %v2796 = vpop.permute.xlu0 %2795
        %2797 = vrot.lane.b32.xlu0 %v2649, 48
        %v2798 = vpop.permute.xlu0 %2797
        %2799 = vrot.lane.b32.xlu0 %v2650, 48
        %v2800 = vpop.permute.xlu0 %2799
        %2801 = vrot.lane.b32.xlu0 %v2651, 48
        %v2802 = vpop.permute.xlu0 %2801
        %2803 = vrot.lane.b32.xlu0 %v2652, 48
        %v2804 = vpop.permute.xlu0 %2803
        %2805 = vrot.lane.b32.xlu0 %v2653, 48
        %v2806 = vpop.permute.xlu0 %2805
        %2807 = vrot.lane.b32.xlu0 %v2654, 48
        %v2808 = vpop.permute.xlu0 %2807
        %2809 = vrot.lane.b32.xlu0 %v2655, 48
        %v2810 = vpop.permute.xlu0 %2809
        %2811 = vrot.lane.b32.xlu0 %v2656, 48
        %v2812 = vpop.permute.xlu0 %2811
        %2813 = vrot.lane.b32.xlu0 %v2657, 48
        %v2814 = vpop.permute.xlu0 %2813
        %2815 = vrot.lane.b32.xlu0 %v2658, 48
        %v2816 = vpop.permute.xlu0 %2815
        %2817 = vrot.lane.b32.xlu0 %v2659, 48
        %v2818 = vpop.permute.xlu0 %2817
        %2819 = vrot.lane.b32.xlu0 %v2660, 48
        %v2820 = vpop.permute.xlu0 %2819
        %2821 = vrot.lane.b32.xlu0 %v2661, 48
        %v2822 = vpop.permute.xlu0 %2821
        %2823 = vrot.lane.b32.xlu0 %v2662, 48
        %v2824 = vpop.permute.xlu0 %2823
        %2825 = vrot.lane.b32.xlu0 %v2663, 48
        %v2826 = vpop.permute.xlu0 %2825
        %2827 = vrot.lane.b32.xlu0 %v2664, 48
        %v2828 = vpop.permute.xlu0 %2827
        %2829 = vrot.lane.b32.xlu0 %v2665, 48
        %v2830 = vpop.permute.xlu0 %2829
        %2831 = vrot.lane.b32.xlu0 %v2666, 48
        %v2832 = vpop.permute.xlu0 %2831
        %2833 = vrot.lane.b32.xlu0 %v2667, 48
        %v2834 = vpop.permute.xlu0 %2833
        %2835 = vrot.lane.b32.xlu0 %v2668, 48
        %v2836 = vpop.permute.xlu0 %2835
        %2837 = vrot.lane.b32.xlu0 %v2669, 48
        %v2838 = vpop.permute.xlu0 %2837
        %2839 = vrot.lane.b32.xlu0 %v2670, 48
        %v2840 = vpop.permute.xlu0 %2839
        %2841 = vrot.lane.b32.xlu0 %v2671, 48
        %v2842 = vpop.permute.xlu0 %2841
        %2843 = vrot.lane.b32.xlu0 %v2672, 48
        %v2844 = vpop.permute.xlu0 %2843
        %2845 = vrot.lane.b32.xlu0 %v2673, 48
        %v2846 = vpop.permute.xlu0 %2845
        %2847 = vrot.lane.b32.xlu0 %v2674, 48
        %v2848 = vpop.permute.xlu0 %2847
        %2849 = vrot.lane.b32.xlu0 %v2675, 48
        %v2850 = vpop.permute.xlu0 %2849
        %2851 = vrot.lane.b32.xlu0 %v2676, 48
        %v2852 = vpop.permute.xlu0 %2851
        %2853 = vrot.lane.b32.xlu0 %v2677, 48
        %v2854 = vpop.permute.xlu0 %2853
        %2855 = vrot.lane.b32.xlu0 %v2678, 48
        %v2856 = vpop.permute.xlu0 %2855
        %2857 = vrot.lane.b32.xlu0 %v2679, 48
        %v2858 = vpop.permute.xlu0 %2857
        %2859 = vrot.lane.b32.xlu0 %v2680, 48
        %v2860 = vpop.permute.xlu0 %2859
        %2861 = vrot.lane.b32.xlu0 %v2681, 48
        %v2862 = vpop.permute.xlu0 %2861
        %2863 = vrot.lane.b32.xlu0 %v2682, 48
        %v2864 = vpop.permute.xlu0 %2863
        %2865 = vrot.lane.b32.xlu0 %v2683, 48
        %v2866 = vpop.permute.xlu0 %2865
        %2867 = vrot.lane.b32.xlu0 %v2684, 48
        %v2868 = vpop.permute.xlu0 %2867
        %2869 = vrot.lane.b32.xlu0 %v2685, 48
        %v2870 = vpop.permute.xlu0 %2869
        %2871 = vrot.lane.b32.xlu0 %v2686, 48
        %v2872 = vpop.permute.xlu0 %2871
        %2873 = vrot.lane.b32.xlu0 %v2687, 48
        %v2874 = vpop.permute.xlu0 %2873
        %2875 = vrot.lane.b32.xlu0 %v2688, 48
        %v2876 = vpop.permute.xlu0 %2875
        %2877 = vrot.lane.b32.xlu0 %v2689, 48
        %v2878 = vpop.permute.xlu0 %2877
        %2879 = vrot.lane.b32.xlu0 %v2690, 48
        %v2880 = vpop.permute.xlu0 %2879
        %2881 = vrot.lane.b32.xlu0 %v2691, 48
        %v2882 = vpop.permute.xlu0 %2881
        %2883 = vrot.lane.b32.xlu0 %v2692, 48
        %v2884 = vpop.permute.xlu0 %2883
        %vm2949 = vcmask 490880
        %2950 = vst.msk [vmem:[#allocation3] sm:$0xff] %vm2949, %v2758
        %2951 = vst.msk [vmem:[#allocation3 + $0x8] sm:$0xff] %vm2949, %v2760
        %2952 = vst.msk [vmem:[#allocation3 + $0x10] sm:$0xff] %vm2949, %v2762
        %2953 = vst.msk [vmem:[#allocation3 + $0x18] sm:$0xff] %vm2949, %v2764
        %2954 = vst.msk [vmem:[#allocation3 + $0x20] sm:$0xff] %vm2949, %v2766
        %2955 = vst.msk [vmem:[#allocation3 + $0x28] sm:$0xff] %vm2949, %v2768
        %2956 = vst.msk [vmem:[#allocation3 + $0x30] sm:$0xff] %vm2949, %v2770
        %2957 = vst.msk [vmem:[#allocation3 + $0x38] sm:$0xff] %vm2949, %v2772
        %2958 = vst.msk [vmem:[#allocation3 + $0x40] sm:$0xff] %vm2949, %v2774
        %2959 = vst.msk [vmem:[#allocation3 + $0x48] sm:$0xff] %vm2949, %v2776
        %2960 = vst.msk [vmem:[#allocation3 + $0x50] sm:$0xff] %vm2949, %v2778
        %2961 = vst.msk [vmem:[#allocation3 + $0x58] sm:$0xff] %vm2949, %v2780
        %2962 = vst.msk [vmem:[#allocation3 + $0x60] sm:$0xff] %vm2949, %v2782
        %2963 = vst.msk [vmem:[#allocation3 + $0x68] sm:$0xff] %vm2949, %v2784
        %2964 = vst.msk [vmem:[#allocation3 + $0x70] sm:$0xff] %vm2949, %v2786
        %2965 = vst.msk [vmem:[#allocation3 + $0x78] sm:$0xff] %vm2949, %v2788
        %2966 = vst.msk [vmem:[#allocation3 + $0x80] sm:$0xff] %vm2949, %v2790
        %2967 = vst.msk [vmem:[#allocation3 + $0x88] sm:$0xff] %vm2949, %v2792
        %2968 = vst.msk [vmem:[#allocation3 + $0x90] sm:$0xff] %vm2949, %v2794
        %2969 = vst.msk [vmem:[#allocation3 + $0x98] sm:$0xff] %vm2949, %v2796
        %2970 = vst.msk [vmem:[#allocation3 + $0xa0] sm:$0xff] %vm2949, %v2798
        %2971 = vst.msk [vmem:[#allocation3 + $0xa8] sm:$0xff] %vm2949, %v2800
        %2972 = vst.msk [vmem:[#allocation3 + $0xb0] sm:$0xff] %vm2949, %v2802
        %2973 = vst.msk [vmem:[#allocation3 + $0xb8] sm:$0xff] %vm2949, %v2804
        %2974 = vst.msk [vmem:[#allocation3 + $0xc0] sm:$0xff] %vm2949, %v2806
        %2975 = vst.msk [vmem:[#allocation3 + $0xc8] sm:$0xff] %vm2949, %v2808
        %2976 = vst.msk [vmem:[#allocation3 + $0xd0] sm:$0xff] %vm2949, %v2810
        %2977 = vst.msk [vmem:[#allocation3 + $0xd8] sm:$0xff] %vm2949, %v2812
        %2978 = vst.msk [vmem:[#allocation3 + $0xe0] sm:$0xff] %vm2949, %v2814
        %2979 = vst.msk [vmem:[#allocation3 + $0xe8] sm:$0xff] %vm2949, %v2816
        %2980 = vst.msk [vmem:[#allocation3 + $0xf0] sm:$0xff] %vm2949, %v2818
        %2981 = vst.msk [vmem:[#allocation3 + $0xf8] sm:$0xff] %vm2949, %v2820
        %2982 = vst.msk [vmem:[#allocation3 + $0x100] sm:$0xff] %vm2949, %v2822
        %2983 = vst.msk [vmem:[#allocation3 + $0x108] sm:$0xff] %vm2949, %v2824
        %2984 = vst.msk [vmem:[#allocation3 + $0x110] sm:$0xff] %vm2949, %v2826
        %2985 = vst.msk [vmem:[#allocation3 + $0x118] sm:$0xff] %vm2949, %v2828
        %2986 = vst.msk [vmem:[#allocation3 + $0x120] sm:$0xff] %vm2949, %v2830
        %2987 = vst.msk [vmem:[#allocation3 + $0x128] sm:$0xff] %vm2949, %v2832
        %2988 = vst.msk [vmem:[#allocation3 + $0x130] sm:$0xff] %vm2949, %v2834
        %2989 = vst.msk [vmem:[#allocation3 + $0x138] sm:$0xff] %vm2949, %v2836
        %2990 = vst.msk [vmem:[#allocation3 + $0x140] sm:$0xff] %vm2949, %v2838
        %2991 = vst.msk [vmem:[#allocation3 + $0x148] sm:$0xff] %vm2949, %v2840
        %2992 = vst.msk [vmem:[#allocation3 + $0x150] sm:$0xff] %vm2949, %v2842
        %2993 = vst.msk [vmem:[#allocation3 + $0x158] sm:$0xff] %vm2949, %v2844
        %2994 = vst.msk [vmem:[#allocation3 + $0x160] sm:$0xff] %vm2949, %v2846
        %2995 = vst.msk [vmem:[#allocation3 + $0x168] sm:$0xff] %vm2949, %v2848
        %2996 = vst.msk [vmem:[#allocation3 + $0x170] sm:$0xff] %vm2949, %v2850
        %2997 = vst.msk [vmem:[#allocation3 + $0x178] sm:$0xff] %vm2949, %v2852
        %2998 = vst.msk [vmem:[#allocation3 + $0x180] sm:$0xff] %vm2949, %v2854
        %2999 = vst.msk [vmem:[#allocation3 + $0x188] sm:$0xff] %vm2949, %v2856
        %3000 = vst.msk [vmem:[#allocation3 + $0x190] sm:$0xff] %vm2949, %v2858
        %3001 = vst.msk [vmem:[#allocation3 + $0x198] sm:$0xff] %vm2949, %v2860
        %3002 = vst.msk [vmem:[#allocation3 + $0x1a0] sm:$0xff] %vm2949, %v2862
        %3003 = vst.msk [vmem:[#allocation3 + $0x1a8] sm:$0xff] %vm2949, %v2864
        %3004 = vst.msk [vmem:[#allocation3 + $0x1b0] sm:$0xff] %vm2949, %v2866
        %3005 = vst.msk [vmem:[#allocation3 + $0x1b8] sm:$0xff] %vm2949, %v2868
        %3006 = vst.msk [vmem:[#allocation3 + $0x1c0] sm:$0xff] %vm2949, %v2870
        %3007 = vst.msk [vmem:[#allocation3 + $0x1c8] sm:$0xff] %vm2949, %v2872
        %3008 = vst.msk [vmem:[#allocation3 + $0x1d0] sm:$0xff] %vm2949, %v2874
        %3009 = vst.msk [vmem:[#allocation3 + $0x1d8] sm:$0xff] %vm2949, %v2876
        %3010 = vst.msk [vmem:[#allocation3 + $0x1e0] sm:$0xff] %vm2949, %v2878
        %3011 = vst.msk [vmem:[#allocation3 + $0x1e8] sm:$0xff] %vm2949, %v2880
        %3012 = vst.msk [vmem:[#allocation3 + $0x1f0] sm:$0xff] %vm2949, %v2882
        %3013 = vst.msk [vmem:[#allocation3 + $0x1f8] sm:$0xff] %vm2949, %v2884
        %v3014 = vld [vmem:[%s830 + $0x2] sm:$0xff]
        %v3015 = vld [vmem:[%s830 + $0xa] sm:$0xff]
        %v3016 = vld [vmem:[%s830 + $0x12] sm:$0xff]
        %v3017 = vld [vmem:[%s830 + $0x1a] sm:$0xff]
        %v3018 = vld [vmem:[%s830 + $0x2a] sm:$0xff]
        %v3019 = vld [vmem:[%s830 + $0x32] sm:$0xff]
        %v3020 = vld [vmem:[%s830 + $0x3a] sm:$0xff]
        %v3021 = vld [vmem:[%s830 + $0x42] sm:$0xff]
        %v3022 = vld [vmem:[%s830 + $0x52] sm:$0xff]
        %v3023 = vld [vmem:[%s830 + $0x5a] sm:$0xff]
        %v3024 = vld [vmem:[%s830 + $0x62] sm:$0xff]
        %v3025 = vld [vmem:[%s830 + $0x6a] sm:$0xff]
        %v3026 = vld [vmem:[%s830 + $0x7a] sm:$0xff]
        %v3027 = vld [vmem:[%s830 + $0x82] sm:$0xff]
        %v3028 = vld [vmem:[%s830 + $0x8a] sm:$0xff]
        %v3029 = vld [vmem:[%s830 + $0x92] sm:$0xff]
        %v3030 = vld [vmem:[%s830 + $0xa2] sm:$0xff]
        %v3031 = vld [vmem:[%s830 + $0xaa] sm:$0xff]
        %v3032 = vld [vmem:[%s830 + $0xb2] sm:$0xff]
        %v3033 = vld [vmem:[%s830 + $0xba] sm:$0xff]
        %v3034 = vld [vmem:[%s830 + $0xca] sm:$0xff]
        %v3035 = vld [vmem:[%s830 + $0xd2] sm:$0xff]
        %v3036 = vld [vmem:[%s830 + $0xda] sm:$0xff]
        %v3037 = vld [vmem:[%s830 + $0xe2] sm:$0xff]
        %v3038 = vld [vmem:[%s830 + $0xf2] sm:$0xff]
        %v3039 = vld [vmem:[%s830 + $0xfa] sm:$0xff]
        %v3040 = vld [vmem:[%s830 + $0x102] sm:$0xff]
        %v3041 = vld [vmem:[%s830 + $0x10a] sm:$0xff]
        %v3042 = vld [vmem:[%s830 + $0x11a] sm:$0xff]
        %v3043 = vld [vmem:[%s830 + $0x122] sm:$0xff]
        %v3044 = vld [vmem:[%s830 + $0x12a] sm:$0xff]
        %v3045 = vld [vmem:[%s830 + $0x132] sm:$0xff]
        %v3046 = vld [vmem:[%s830 + $0x142] sm:$0xff]
        %v3047 = vld [vmem:[%s830 + $0x14a] sm:$0xff]
        %v3048 = vld [vmem:[%s830 + $0x152] sm:$0xff]
        %v3049 = vld [vmem:[%s830 + $0x15a] sm:$0xff]
        %v3050 = vld [vmem:[%s830 + $0x16a] sm:$0xff]
        %v3051 = vld [vmem:[%s830 + $0x172] sm:$0xff]
        %v3052 = vld [vmem:[%s830 + $0x17a] sm:$0xff]
        %v3053 = vld [vmem:[%s830 + $0x182] sm:$0xff]
        %v3054 = vld [vmem:[%s830 + $0x192] sm:$0xff]
        %v3055 = vld [vmem:[%s830 + $0x19a] sm:$0xff]
        %v3056 = vld [vmem:[%s830 + $0x1a2] sm:$0xff]
        %v3057 = vld [vmem:[%s830 + $0x1aa] sm:$0xff]
        %v3058 = vld [vmem:[%s830 + $0x1ba] sm:$0xff]
        %v3059 = vld [vmem:[%s830 + $0x1c2] sm:$0xff]
        %v3060 = vld [vmem:[%s830 + $0x1ca] sm:$0xff]
        %v3061 = vld [vmem:[%s830 + $0x1d2] sm:$0xff]
        %v3062 = vld [vmem:[%s830 + $0x1e2] sm:$0xff]
        %v3063 = vld [vmem:[%s830 + $0x1ea] sm:$0xff]
        %v3064 = vld [vmem:[%s830 + $0x1f2] sm:$0xff]
        %v3065 = vld [vmem:[%s830 + $0x1fa] sm:$0xff]
        %v3066 = vld [vmem:[%s830 + $0x20a] sm:$0xff]
        %v3067 = vld [vmem:[%s830 + $0x212] sm:$0xff]
        %v3068 = vld [vmem:[%s830 + $0x21a] sm:$0xff]
        %v3069 = vld [vmem:[%s830 + $0x222] sm:$0xff]
        %v3070 = vld [vmem:[%s830 + $0x232] sm:$0xff]
        %v3071 = vld [vmem:[%s830 + $0x23a] sm:$0xff]
        %v3072 = vld [vmem:[%s830 + $0x242] sm:$0xff]
        %v3073 = vld [vmem:[%s830 + $0x24a] sm:$0xff]
        %v3074 = vld [vmem:[%s830 + $0x25a] sm:$0xff]
        %v3075 = vld [vmem:[%s830 + $0x262] sm:$0xff]
        %v3076 = vld [vmem:[%s830 + $0x26a] sm:$0xff]
        %v3077 = vld [vmem:[%s830 + $0x272] sm:$0xff]
        %3142 = vrot.lane.b32.xlu0 %v3014, 60
        %v3143 = vpop.permute.xlu0 %3142
        %3144 = vrot.lane.b32.xlu0 %v3015, 60
        %v3145 = vpop.permute.xlu0 %3144
        %3146 = vrot.lane.b32.xlu0 %v3016, 60
        %v3147 = vpop.permute.xlu0 %3146
        %3148 = vrot.lane.b32.xlu0 %v3017, 60
        %v3149 = vpop.permute.xlu0 %3148
        %3150 = vrot.lane.b32.xlu0 %v3018, 60
        %v3151 = vpop.permute.xlu0 %3150
        %3152 = vrot.lane.b32.xlu0 %v3019, 60
        %v3153 = vpop.permute.xlu0 %3152
        %3154 = vrot.lane.b32.xlu0 %v3020, 60
        %v3155 = vpop.permute.xlu0 %3154
        %3156 = vrot.lane.b32.xlu0 %v3021, 60
        %v3157 = vpop.permute.xlu0 %3156
        %3158 = vrot.lane.b32.xlu0 %v3022, 60
        %v3159 = vpop.permute.xlu0 %3158
        %3160 = vrot.lane.b32.xlu0 %v3023, 60
        %v3161 = vpop.permute.xlu0 %3160
        %3162 = vrot.lane.b32.xlu0 %v3024, 60
        %v3163 = vpop.permute.xlu0 %3162
        %3164 = vrot.lane.b32.xlu0 %v3025, 60
        %v3165 = vpop.permute.xlu0 %3164
        %3166 = vrot.lane.b32.xlu0 %v3026, 60
        %v3167 = vpop.permute.xlu0 %3166
        %3168 = vrot.lane.b32.xlu0 %v3027, 60
        %v3169 = vpop.permute.xlu0 %3168
        %3170 = vrot.lane.b32.xlu0 %v3028, 60
        %v3171 = vpop.permute.xlu0 %3170
        %3172 = vrot.lane.b32.xlu0 %v3029, 60
        %v3173 = vpop.permute.xlu0 %3172
        %3174 = vrot.lane.b32.xlu0 %v3030, 60
        %v3175 = vpop.permute.xlu0 %3174
        %3176 = vrot.lane.b32.xlu0 %v3031, 60
        %v3177 = vpop.permute.xlu0 %3176
        %3178 = vrot.lane.b32.xlu0 %v3032, 60
        %v3179 = vpop.permute.xlu0 %3178
        %3180 = vrot.lane.b32.xlu0 %v3033, 60
        %v3181 = vpop.permute.xlu0 %3180
        %3182 = vrot.lane.b32.xlu0 %v3034, 60
        %v3183 = vpop.permute.xlu0 %3182
        %3184 = vrot.lane.b32.xlu0 %v3035, 60
        %v3185 = vpop.permute.xlu0 %3184
        %3186 = vrot.lane.b32.xlu0 %v3036, 60
        %v3187 = vpop.permute.xlu0 %3186
        %3188 = vrot.lane.b32.xlu0 %v3037, 60
        %v3189 = vpop.permute.xlu0 %3188
        %3190 = vrot.lane.b32.xlu0 %v3038, 60
        %v3191 = vpop.permute.xlu0 %3190
        %3192 = vrot.lane.b32.xlu0 %v3039, 60
        %v3193 = vpop.permute.xlu0 %3192
        %3194 = vrot.lane.b32.xlu0 %v3040, 60
        %v3195 = vpop.permute.xlu0 %3194
        %3196 = vrot.lane.b32.xlu0 %v3041, 60
        %v3197 = vpop.permute.xlu0 %3196
        %3198 = vrot.lane.b32.xlu0 %v3042, 60
        %v3199 = vpop.permute.xlu0 %3198
        %3200 = vrot.lane.b32.xlu0 %v3043, 60
        %v3201 = vpop.permute.xlu0 %3200
        %3202 = vrot.lane.b32.xlu0 %v3044, 60
        %v3203 = vpop.permute.xlu0 %3202
        %3204 = vrot.lane.b32.xlu0 %v3045, 60
        %v3205 = vpop.permute.xlu0 %3204
        %3206 = vrot.lane.b32.xlu0 %v3046, 60
        %v3207 = vpop.permute.xlu0 %3206
        %3208 = vrot.lane.b32.xlu0 %v3047, 60
        %v3209 = vpop.permute.xlu0 %3208
        %3210 = vrot.lane.b32.xlu0 %v3048, 60
        %v3211 = vpop.permute.xlu0 %3210
        %3212 = vrot.lane.b32.xlu0 %v3049, 60
        %v3213 = vpop.permute.xlu0 %3212
        %3214 = vrot.lane.b32.xlu0 %v3050, 60
        %v3215 = vpop.permute.xlu0 %3214
        %3216 = vrot.lane.b32.xlu0 %v3051, 60
        %v3217 = vpop.permute.xlu0 %3216
        %3218 = vrot.lane.b32.xlu0 %v3052, 60
        %v3219 = vpop.permute.xlu0 %3218
        %3220 = vrot.lane.b32.xlu0 %v3053, 60
        %v3221 = vpop.permute.xlu0 %3220
        %3222 = vrot.lane.b32.xlu0 %v3054, 60
        %v3223 = vpop.permute.xlu0 %3222
        %3224 = vrot.lane.b32.xlu0 %v3055, 60
        %v3225 = vpop.permute.xlu0 %3224
        %3226 = vrot.lane.b32.xlu0 %v3056, 60
        %v3227 = vpop.permute.xlu0 %3226
        %3228 = vrot.lane.b32.xlu0 %v3057, 60
        %v3229 = vpop.permute.xlu0 %3228
        %3230 = vrot.lane.b32.xlu0 %v3058, 60
        %v3231 = vpop.permute.xlu0 %3230
        %3232 = vrot.lane.b32.xlu0 %v3059, 60
        %v3233 = vpop.permute.xlu0 %3232
        %3234 = vrot.lane.b32.xlu0 %v3060, 60
        %v3235 = vpop.permute.xlu0 %3234
        %3236 = vrot.lane.b32.xlu0 %v3061, 60
        %v3237 = vpop.permute.xlu0 %3236
        %3238 = vrot.lane.b32.xlu0 %v3062, 60
        %v3239 = vpop.permute.xlu0 %3238
        %3240 = vrot.lane.b32.xlu0 %v3063, 60
        %v3241 = vpop.permute.xlu0 %3240
        %3242 = vrot.lane.b32.xlu0 %v3064, 60
        %v3243 = vpop.permute.xlu0 %3242
        %3244 = vrot.lane.b32.xlu0 %v3065, 60
        %v3245 = vpop.permute.xlu0 %3244
        %3246 = vrot.lane.b32.xlu0 %v3066, 60
        %v3247 = vpop.permute.xlu0 %3246
        %3248 = vrot.lane.b32.xlu0 %v3067, 60
        %v3249 = vpop.permute.xlu0 %3248
        %3250 = vrot.lane.b32.xlu0 %v3068, 60
        %v3251 = vpop.permute.xlu0 %3250
        %3252 = vrot.lane.b32.xlu0 %v3069, 60
        %v3253 = vpop.permute.xlu0 %3252
        %3254 = vrot.lane.b32.xlu0 %v3070, 60
        %v3255 = vpop.permute.xlu0 %3254
        %3256 = vrot.lane.b32.xlu0 %v3071, 60
        %v3257 = vpop.permute.xlu0 %3256
        %3258 = vrot.lane.b32.xlu0 %v3072, 60
        %v3259 = vpop.permute.xlu0 %3258
        %3260 = vrot.lane.b32.xlu0 %v3073, 60
        %v3261 = vpop.permute.xlu0 %3260
        %3262 = vrot.lane.b32.xlu0 %v3074, 60
        %v3263 = vpop.permute.xlu0 %3262
        %3264 = vrot.lane.b32.xlu0 %v3075, 60
        %v3265 = vpop.permute.xlu0 %3264
        %3266 = vrot.lane.b32.xlu0 %v3076, 60
        %v3267 = vpop.permute.xlu0 %3266
        %3268 = vrot.lane.b32.xlu0 %v3077, 60
        %v3269 = vpop.permute.xlu0 %3268
        %vm3334 = vcmask 589280
        %3335 = vst.msk [vmem:[#allocation3] sm:$0xff] %vm3334, %v3143
        %3336 = vst.msk [vmem:[#allocation3 + $0x8] sm:$0xff] %vm3334, %v3145
        %3337 = vst.msk [vmem:[#allocation3 + $0x10] sm:$0xff] %vm3334, %v3147
        %3338 = vst.msk [vmem:[#allocation3 + $0x18] sm:$0xff] %vm3334, %v3149
        %3339 = vst.msk [vmem:[#allocation3 + $0x20] sm:$0xff] %vm3334, %v3151
        %3340 = vst.msk [vmem:[#allocation3 + $0x28] sm:$0xff] %vm3334, %v3153
        %3341 = vst.msk [vmem:[#allocation3 + $0x30] sm:$0xff] %vm3334, %v3155
        %3342 = vst.msk [vmem:[#allocation3 + $0x38] sm:$0xff] %vm3334, %v3157
        %3343 = vst.msk [vmem:[#allocation3 + $0x40] sm:$0xff] %vm3334, %v3159
        %3344 = vst.msk [vmem:[#allocation3 + $0x48] sm:$0xff] %vm3334, %v3161
        %3345 = vst.msk [vmem:[#allocation3 + $0x50] sm:$0xff] %vm3334, %v3163
        %3346 = vst.msk [vmem:[#allocation3 + $0x58] sm:$0xff] %vm3334, %v3165
        %3347 = vst.msk [vmem:[#allocation3 + $0x60] sm:$0xff] %vm3334, %v3167
        %3348 = vst.msk [vmem:[#allocation3 + $0x68] sm:$0xff] %vm3334, %v3169
        %3349 = vst.msk [vmem:[#allocation3 + $0x70] sm:$0xff] %vm3334, %v3171
        %3350 = vst.msk [vmem:[#allocation3 + $0x78] sm:$0xff] %vm3334, %v3173
        %3351 = vst.msk [vmem:[#allocation3 + $0x80] sm:$0xff] %vm3334, %v3175
        %3352 = vst.msk [vmem:[#allocation3 + $0x88] sm:$0xff] %vm3334, %v3177
        %3353 = vst.msk [vmem:[#allocation3 + $0x90] sm:$0xff] %vm3334, %v3179
        %3354 = vst.msk [vmem:[#allocation3 + $0x98] sm:$0xff] %vm3334, %v3181
        %3355 = vst.msk [vmem:[#allocation3 + $0xa0] sm:$0xff] %vm3334, %v3183
        %3356 = vst.msk [vmem:[#allocation3 + $0xa8] sm:$0xff] %vm3334, %v3185
        %3357 = vst.msk [vmem:[#allocation3 + $0xb0] sm:$0xff] %vm3334, %v3187
        %3358 = vst.msk [vmem:[#allocation3 + $0xb8] sm:$0xff] %vm3334, %v3189
        %3359 = vst.msk [vmem:[#allocation3 + $0xc0] sm:$0xff] %vm3334, %v3191
        %3360 = vst.msk [vmem:[#allocation3 + $0xc8] sm:$0xff] %vm3334, %v3193
        %3361 = vst.msk [vmem:[#allocation3 + $0xd0] sm:$0xff] %vm3334, %v3195
        %3362 = vst.msk [vmem:[#allocation3 + $0xd8] sm:$0xff] %vm3334, %v3197
        %3363 = vst.msk [vmem:[#allocation3 + $0xe0] sm:$0xff] %vm3334, %v3199
        %3364 = vst.msk [vmem:[#allocation3 + $0xe8] sm:$0xff] %vm3334, %v3201
        %3365 = vst.msk [vmem:[#allocation3 + $0xf0] sm:$0xff] %vm3334, %v3203
        %3366 = vst.msk [vmem:[#allocation3 + $0xf8] sm:$0xff] %vm3334, %v3205
        %3367 = vst.msk [vmem:[#allocation3 + $0x100] sm:$0xff] %vm3334, %v3207
        %3368 = vst.msk [vmem:[#allocation3 + $0x108] sm:$0xff] %vm3334, %v3209
        %3369 = vst.msk [vmem:[#allocation3 + $0x110] sm:$0xff] %vm3334, %v3211
        %3370 = vst.msk [vmem:[#allocation3 + $0x118] sm:$0xff] %vm3334, %v3213
        %3371 = vst.msk [vmem:[#allocation3 + $0x120] sm:$0xff] %vm3334, %v3215
        %3372 = vst.msk [vmem:[#allocation3 + $0x128] sm:$0xff] %vm3334, %v3217
        %3373 = vst.msk [vmem:[#allocation3 + $0x130] sm:$0xff] %vm3334, %v3219
        %3374 = vst.msk [vmem:[#allocation3 + $0x138] sm:$0xff] %vm3334, %v3221
        %3375 = vst.msk [vmem:[#allocation3 + $0x140] sm:$0xff] %vm3334, %v3223
        %3376 = vst.msk [vmem:[#allocation3 + $0x148] sm:$0xff] %vm3334, %v3225
        %3377 = vst.msk [vmem:[#allocation3 + $0x150] sm:$0xff] %vm3334, %v3227
        %3378 = vst.msk [vmem:[#allocation3 + $0x158] sm:$0xff] %vm3334, %v3229
        %3379 = vst.msk [vmem:[#allocation3 + $0x160] sm:$0xff] %vm3334, %v3231
        %3380 = vst.msk [vmem:[#allocation3 + $0x168] sm:$0xff] %vm3334, %v3233
        %3381 = vst.msk [vmem:[#allocation3 + $0x170] sm:$0xff] %vm3334, %v3235
        %3382 = vst.msk [vmem:[#allocation3 + $0x178] sm:$0xff] %vm3334, %v3237
        %3383 = vst.msk [vmem:[#allocation3 + $0x180] sm:$0xff] %vm3334, %v3239
        %3384 = vst.msk [vmem:[#allocation3 + $0x188] sm:$0xff] %vm3334, %v3241
        %3385 = vst.msk [vmem:[#allocation3 + $0x190] sm:$0xff] %vm3334, %v3243
        %3386 = vst.msk [vmem:[#allocation3 + $0x198] sm:$0xff] %vm3334, %v3245
        %3387 = vst.msk [vmem:[#allocation3 + $0x1a0] sm:$0xff] %vm3334, %v3247
        %3388 = vst.msk [vmem:[#allocation3 + $0x1a8] sm:$0xff] %vm3334, %v3249
        %3389 = vst.msk [vmem:[#allocation3 + $0x1b0] sm:$0xff] %vm3334, %v3251
        %3390 = vst.msk [vmem:[#allocation3 + $0x1b8] sm:$0xff] %vm3334, %v3253
        %3391 = vst.msk [vmem:[#allocation3 + $0x1c0] sm:$0xff] %vm3334, %v3255
        %3392 = vst.msk [vmem:[#allocation3 + $0x1c8] sm:$0xff] %vm3334, %v3257
        %3393 = vst.msk [vmem:[#allocation3 + $0x1d0] sm:$0xff] %vm3334, %v3259
        %3394 = vst.msk [vmem:[#allocation3 + $0x1d8] sm:$0xff] %vm3334, %v3261
        %3395 = vst.msk [vmem:[#allocation3 + $0x1e0] sm:$0xff] %vm3334, %v3263
        %3396 = vst.msk [vmem:[#allocation3 + $0x1e8] sm:$0xff] %vm3334, %v3265
        %3397 = vst.msk [vmem:[#allocation3 + $0x1f0] sm:$0xff] %vm3334, %v3267
        %3398 = vst.msk [vmem:[#allocation3 + $0x1f8] sm:$0xff] %vm3334, %v3269
        %s3399 = scalar_lea.vmem [#allocation2], 80
        %v3400 = vld [vmem:[%s3399] sm:$0xff]
        %v3401 = vld [vmem:[%s3399 + $0x8] sm:$0xff]
        %v3402 = vld [vmem:[%s3399 + $0x10] sm:$0xff]
        %v3403 = vld [vmem:[%s3399 + $0x18] sm:$0xff]
        %v3404 = vld [vmem:[%s3399 + $0x28] sm:$0xff]
        %v3405 = vld [vmem:[%s3399 + $0x30] sm:$0xff]
        %v3406 = vld [vmem:[%s3399 + $0x38] sm:$0xff]
        %v3407 = vld [vmem:[%s3399 + $0x40] sm:$0xff]
        %v3408 = vld [vmem:[%s3399 + $0x50] sm:$0xff]
        %v3409 = vld [vmem:[%s3399 + $0x58] sm:$0xff]
        %v3410 = vld [vmem:[%s3399 + $0x60] sm:$0xff]
        %v3411 = vld [vmem:[%s3399 + $0x68] sm:$0xff]
        %v3412 = vld [vmem:[%s3399 + $0x78] sm:$0xff]
        %v3413 = vld [vmem:[%s3399 + $0x80] sm:$0xff]
        %v3414 = vld [vmem:[%s3399 + $0x88] sm:$0xff]
        %v3415 = vld [vmem:[%s3399 + $0x90] sm:$0xff]
        %v3416 = vld [vmem:[%s3399 + $0xa0] sm:$0xff]
        %v3417 = vld [vmem:[%s3399 + $0xa8] sm:$0xff]
        %v3418 = vld [vmem:[%s3399 + $0xb0] sm:$0xff]
        %v3419 = vld [vmem:[%s3399 + $0xb8] sm:$0xff]
        %v3420 = vld [vmem:[%s3399 + $0xc8] sm:$0xff]
        %v3421 = vld [vmem:[%s3399 + $0xd0] sm:$0xff]
        %v3422 = vld [vmem:[%s3399 + $0xd8] sm:$0xff]
        %v3423 = vld [vmem:[%s3399 + $0xe0] sm:$0xff]
        %v3424 = vld [vmem:[%s3399 + $0xf0] sm:$0xff]
        %v3425 = vld [vmem:[%s3399 + $0xf8] sm:$0xff]
        %v3426 = vld [vmem:[%s3399 + $0x100] sm:$0xff]
        %v3427 = vld [vmem:[%s3399 + $0x108] sm:$0xff]
        %v3428 = vld [vmem:[%s3399 + $0x118] sm:$0xff]
        %v3429 = vld [vmem:[%s3399 + $0x120] sm:$0xff]
        %v3430 = vld [vmem:[%s3399 + $0x128] sm:$0xff]
        %v3431 = vld [vmem:[%s3399 + $0x130] sm:$0xff]
        %v3432 = vld [vmem:[%s3399 + $0x140] sm:$0xff]
        %v3433 = vld [vmem:[%s3399 + $0x148] sm:$0xff]
        %v3434 = vld [vmem:[%s3399 + $0x150] sm:$0xff]
        %v3435 = vld [vmem:[%s3399 + $0x158] sm:$0xff]
        %v3436 = vld [vmem:[%s3399 + $0x168] sm:$0xff]
        %v3437 = vld [vmem:[%s3399 + $0x170] sm:$0xff]
        %v3438 = vld [vmem:[%s3399 + $0x178] sm:$0xff]
        %v3439 = vld [vmem:[%s3399 + $0x180] sm:$0xff]
        %v3440 = vld [vmem:[%s3399 + $0x190] sm:$0xff]
        %v3441 = vld [vmem:[%s3399 + $0x198] sm:$0xff]
        %v3442 = vld [vmem:[%s3399 + $0x1a0] sm:$0xff]
        %v3443 = vld [vmem:[%s3399 + $0x1a8] sm:$0xff]
        %v3444 = vld [vmem:[%s3399 + $0x1b8] sm:$0xff]
        %v3445 = vld [vmem:[%s3399 + $0x1c0] sm:$0xff]
        %v3446 = vld [vmem:[%s3399 + $0x1c8] sm:$0xff]
        %v3447 = vld [vmem:[%s3399 + $0x1d0] sm:$0xff]
        %v3448 = vld [vmem:[%s3399 + $0x1e0] sm:$0xff]
        %v3449 = vld [vmem:[%s3399 + $0x1e8] sm:$0xff]
        %v3450 = vld [vmem:[%s3399 + $0x1f0] sm:$0xff]
        %v3451 = vld [vmem:[%s3399 + $0x1f8] sm:$0xff]
        %v3452 = vld [vmem:[%s3399 + $0x208] sm:$0xff]
        %v3453 = vld [vmem:[%s3399 + $0x210] sm:$0xff]
        %v3454 = vld [vmem:[%s3399 + $0x218] sm:$0xff]
        %v3455 = vld [vmem:[%s3399 + $0x220] sm:$0xff]
        %v3456 = vld [vmem:[%s3399 + $0x230] sm:$0xff]
        %v3457 = vld [vmem:[%s3399 + $0x238] sm:$0xff]
        %v3458 = vld [vmem:[%s3399 + $0x240] sm:$0xff]
        %v3459 = vld [vmem:[%s3399 + $0x248] sm:$0xff]
        %v3460 = vld [vmem:[%s3399 + $0x258] sm:$0xff]
        %v3461 = vld [vmem:[%s3399 + $0x260] sm:$0xff]
        %v3462 = vld [vmem:[%s3399 + $0x268] sm:$0xff]
        %v3463 = vld [vmem:[%s3399 + $0x270] sm:$0xff]
        %3528 = vrot.lane.b32.xlu0 %v3400, 72
        %v3529 = vpop.permute.xlu0 %3528
        %3530 = vrot.lane.b32.xlu0 %v3401, 72
        %v3531 = vpop.permute.xlu0 %3530
        %3532 = vrot.lane.b32.xlu0 %v3402, 72
        %v3533 = vpop.permute.xlu0 %3532
        %3534 = vrot.lane.b32.xlu0 %v3403, 72
        %v3535 = vpop.permute.xlu0 %3534
        %3536 = vrot.lane.b32.xlu0 %v3404, 72
        %v3537 = vpop.permute.xlu0 %3536
        %3538 = vrot.lane.b32.xlu0 %v3405, 72
        %v3539 = vpop.permute.xlu0 %3538
        %3540 = vrot.lane.b32.xlu0 %v3406, 72
        %v3541 = vpop.permute.xlu0 %3540
        %3542 = vrot.lane.b32.xlu0 %v3407, 72
        %v3543 = vpop.permute.xlu0 %3542
        %3544 = vrot.lane.b32.xlu0 %v3408, 72
        %v3545 = vpop.permute.xlu0 %3544
        %3546 = vrot.lane.b32.xlu0 %v3409, 72
        %v3547 = vpop.permute.xlu0 %3546
        %3548 = vrot.lane.b32.xlu0 %v3410, 72
        %v3549 = vpop.permute.xlu0 %3548
        %3550 = vrot.lane.b32.xlu0 %v3411, 72
        %v3551 = vpop.permute.xlu0 %3550
        %3552 = vrot.lane.b32.xlu0 %v3412, 72
        %v3553 = vpop.permute.xlu0 %3552
        %3554 = vrot.lane.b32.xlu0 %v3413, 72
        %v3555 = vpop.permute.xlu0 %3554
        %3556 = vrot.lane.b32.xlu0 %v3414, 72
        %v3557 = vpop.permute.xlu0 %3556
        %3558 = vrot.lane.b32.xlu0 %v3415, 72
        %v3559 = vpop.permute.xlu0 %3558
        %3560 = vrot.lane.b32.xlu0 %v3416, 72
        %v3561 = vpop.permute.xlu0 %3560
        %3562 = vrot.lane.b32.xlu0 %v3417, 72
        %v3563 = vpop.permute.xlu0 %3562
        %3564 = vrot.lane.b32.xlu0 %v3418, 72
        %v3565 = vpop.permute.xlu0 %3564
        %3566 = vrot.lane.b32.xlu0 %v3419, 72
        %v3567 = vpop.permute.xlu0 %3566
        %3568 = vrot.lane.b32.xlu0 %v3420, 72
        %v3569 = vpop.permute.xlu0 %3568
        %3570 = vrot.lane.b32.xlu0 %v3421, 72
        %v3571 = vpop.permute.xlu0 %3570
        %3572 = vrot.lane.b32.xlu0 %v3422, 72
        %v3573 = vpop.permute.xlu0 %3572
        %3574 = vrot.lane.b32.xlu0 %v3423, 72
        %v3575 = vpop.permute.xlu0 %3574
        %3576 = vrot.lane.b32.xlu0 %v3424, 72
        %v3577 = vpop.permute.xlu0 %3576
        %3578 = vrot.lane.b32.xlu0 %v3425, 72
        %v3579 = vpop.permute.xlu0 %3578
        %3580 = vrot.lane.b32.xlu0 %v3426, 72
        %v3581 = vpop.permute.xlu0 %3580
        %3582 = vrot.lane.b32.xlu0 %v3427, 72
        %v3583 = vpop.permute.xlu0 %3582
        %3584 = vrot.lane.b32.xlu0 %v3428, 72
        %v3585 = vpop.permute.xlu0 %3584
        %3586 = vrot.lane.b32.xlu0 %v3429, 72
        %v3587 = vpop.permute.xlu0 %3586
        %3588 = vrot.lane.b32.xlu0 %v3430, 72
        %v3589 = vpop.permute.xlu0 %3588
        %3590 = vrot.lane.b32.xlu0 %v3431, 72
        %v3591 = vpop.permute.xlu0 %3590
        %3592 = vrot.lane.b32.xlu0 %v3432, 72
        %v3593 = vpop.permute.xlu0 %3592
        %3594 = vrot.lane.b32.xlu0 %v3433, 72
        %v3595 = vpop.permute.xlu0 %3594
        %3596 = vrot.lane.b32.xlu0 %v3434, 72
        %v3597 = vpop.permute.xlu0 %3596
        %3598 = vrot.lane.b32.xlu0 %v3435, 72
        %v3599 = vpop.permute.xlu0 %3598
        %3600 = vrot.lane.b32.xlu0 %v3436, 72
        %v3601 = vpop.permute.xlu0 %3600
        %3602 = vrot.lane.b32.xlu0 %v3437, 72
        %v3603 = vpop.permute.xlu0 %3602
        %3604 = vrot.lane.b32.xlu0 %v3438, 72
        %v3605 = vpop.permute.xlu0 %3604
        %3606 = vrot.lane.b32.xlu0 %v3439, 72
        %v3607 = vpop.permute.xlu0 %3606
        %3608 = vrot.lane.b32.xlu0 %v3440, 72
        %v3609 = vpop.permute.xlu0 %3608
        %3610 = vrot.lane.b32.xlu0 %v3441, 72
        %v3611 = vpop.permute.xlu0 %3610
        %3612 = vrot.lane.b32.xlu0 %v3442, 72
        %v3613 = vpop.permute.xlu0 %3612
        %3614 = vrot.lane.b32.xlu0 %v3443, 72
        %v3615 = vpop.permute.xlu0 %3614
        %3616 = vrot.lane.b32.xlu0 %v3444, 72
        %v3617 = vpop.permute.xlu0 %3616
        %3618 = vrot.lane.b32.xlu0 %v3445, 72
        %v3619 = vpop.permute.xlu0 %3618
        %3620 = vrot.lane.b32.xlu0 %v3446, 72
        %v3621 = vpop.permute.xlu0 %3620
        %3622 = vrot.lane.b32.xlu0 %v3447, 72
        %v3623 = vpop.permute.xlu0 %3622
        %3624 = vrot.lane.b32.xlu0 %v3448, 72
        %v3625 = vpop.permute.xlu0 %3624
        %3626 = vrot.lane.b32.xlu0 %v3449, 72
        %v3627 = vpop.permute.xlu0 %3626
        %3628 = vrot.lane.b32.xlu0 %v3450, 72
        %v3629 = vpop.permute.xlu0 %3628
        %3630 = vrot.lane.b32.xlu0 %v3451, 72
        %v3631 = vpop.permute.xlu0 %3630
        %3632 = vrot.lane.b32.xlu0 %v3452, 72
        %v3633 = vpop.permute.xlu0 %3632
        %3634 = vrot.lane.b32.xlu0 %v3453, 72
        %v3635 = vpop.permute.xlu0 %3634
        %3636 = vrot.lane.b32.xlu0 %v3454, 72
        %v3637 = vpop.permute.xlu0 %3636
        %3638 = vrot.lane.b32.xlu0 %v3455, 72
        %v3639 = vpop.permute.xlu0 %3638
        %3640 = vrot.lane.b32.xlu0 %v3456, 72
        %v3641 = vpop.permute.xlu0 %3640
        %3642 = vrot.lane.b32.xlu0 %v3457, 72
        %v3643 = vpop.permute.xlu0 %3642
        %3644 = vrot.lane.b32.xlu0 %v3458, 72
        %v3645 = vpop.permute.xlu0 %3644
        %3646 = vrot.lane.b32.xlu0 %v3459, 72
        %v3647 = vpop.permute.xlu0 %3646
        %3648 = vrot.lane.b32.xlu0 %v3460, 72
        %v3649 = vpop.permute.xlu0 %3648
        %3650 = vrot.lane.b32.xlu0 %v3461, 72
        %v3651 = vpop.permute.xlu0 %3650
        %3652 = vrot.lane.b32.xlu0 %v3462, 72
        %v3653 = vpop.permute.xlu0 %3652
        %3654 = vrot.lane.b32.xlu0 %v3463, 72
        %v3655 = vpop.permute.xlu0 %3654
        %vm3720 = vcmask 687680
        %3721 = vst.msk [vmem:[#allocation3] sm:$0xff] %vm3720, %v3529
        %3722 = vst.msk [vmem:[#allocation3 + $0x8] sm:$0xff] %vm3720, %v3531
        %3723 = vst.msk [vmem:[#allocation3 + $0x10] sm:$0xff] %vm3720, %v3533
        %3724 = vst.msk [vmem:[#allocation3 + $0x18] sm:$0xff] %vm3720, %v3535
        %3725 = vst.msk [vmem:[#allocation3 + $0x20] sm:$0xff] %vm3720, %v3537
        %3726 = vst.msk [vmem:[#allocation3 + $0x28] sm:$0xff] %vm3720, %v3539
        %3727 = vst.msk [vmem:[#allocation3 + $0x30] sm:$0xff] %vm3720, %v3541
        %3728 = vst.msk [vmem:[#allocation3 + $0x38] sm:$0xff] %vm3720, %v3543
        %3729 = vst.msk [vmem:[#allocation3 + $0x40] sm:$0xff] %vm3720, %v3545
        %3730 = vst.msk [vmem:[#allocation3 + $0x48] sm:$0xff] %vm3720, %v3547
        %3731 = vst.msk [vmem:[#allocation3 + $0x50] sm:$0xff] %vm3720, %v3549
        %3732 = vst.msk [vmem:[#allocation3 + $0x58] sm:$0xff] %vm3720, %v3551
        %3733 = vst.msk [vmem:[#allocation3 + $0x60] sm:$0xff] %vm3720, %v3553
        %3734 = vst.msk [vmem:[#allocation3 + $0x68] sm:$0xff] %vm3720, %v3555
        %3735 = vst.msk [vmem:[#allocation3 + $0x70] sm:$0xff] %vm3720, %v3557
        %3736 = vst.msk [vmem:[#allocation3 + $0x78] sm:$0xff] %vm3720, %v3559
        %3737 = vst.msk [vmem:[#allocation3 + $0x80] sm:$0xff] %vm3720, %v3561
        %3738 = vst.msk [vmem:[#allocation3 + $0x88] sm:$0xff] %vm3720, %v3563
        %3739 = vst.msk [vmem:[#allocation3 + $0x90] sm:$0xff] %vm3720, %v3565
        %3740 = vst.msk [vmem:[#allocation3 + $0x98] sm:$0xff] %vm3720, %v3567
        %3741 = vst.msk [vmem:[#allocation3 + $0xa0] sm:$0xff] %vm3720, %v3569
        %3742 = vst.msk [vmem:[#allocation3 + $0xa8] sm:$0xff] %vm3720, %v3571
        %3743 = vst.msk [vmem:[#allocation3 + $0xb0] sm:$0xff] %vm3720, %v3573
        %3744 = vst.msk [vmem:[#allocation3 + $0xb8] sm:$0xff] %vm3720, %v3575
        %3745 = vst.msk [vmem:[#allocation3 + $0xc0] sm:$0xff] %vm3720, %v3577
        %3746 = vst.msk [vmem:[#allocation3 + $0xc8] sm:$0xff] %vm3720, %v3579
        %3747 = vst.msk [vmem:[#allocation3 + $0xd0] sm:$0xff] %vm3720, %v3581
        %3748 = vst.msk [vmem:[#allocation3 + $0xd8] sm:$0xff] %vm3720, %v3583
        %3749 = vst.msk [vmem:[#allocation3 + $0xe0] sm:$0xff] %vm3720, %v3585
        %3750 = vst.msk [vmem:[#allocation3 + $0xe8] sm:$0xff] %vm3720, %v3587
        %3751 = vst.msk [vmem:[#allocation3 + $0xf0] sm:$0xff] %vm3720, %v3589
        %3752 = vst.msk [vmem:[#allocation3 + $0xf8] sm:$0xff] %vm3720, %v3591
        %3753 = vst.msk [vmem:[#allocation3 + $0x100] sm:$0xff] %vm3720, %v3593
        %3754 = vst.msk [vmem:[#allocation3 + $0x108] sm:$0xff] %vm3720, %v3595
        %3755 = vst.msk [vmem:[#allocation3 + $0x110] sm:$0xff] %vm3720, %v3597
        %3756 = vst.msk [vmem:[#allocation3 + $0x118] sm:$0xff] %vm3720, %v3599
        %3757 = vst.msk [vmem:[#allocation3 + $0x120] sm:$0xff] %vm3720, %v3601
        %3758 = vst.msk [vmem:[#allocation3 + $0x128] sm:$0xff] %vm3720, %v3603
        %3759 = vst.msk [vmem:[#allocation3 + $0x130] sm:$0xff] %vm3720, %v3605
        %3760 = vst.msk [vmem:[#allocation3 + $0x138] sm:$0xff] %vm3720, %v3607
        %3761 = vst.msk [vmem:[#allocation3 + $0x140] sm:$0xff] %vm3720, %v3609
        %3762 = vst.msk [vmem:[#allocation3 + $0x148] sm:$0xff] %vm3720, %v3611
        %3763 = vst.msk [vmem:[#allocation3 + $0x150] sm:$0xff] %vm3720, %v3613
        %3764 = vst.msk [vmem:[#allocation3 + $0x158] sm:$0xff] %vm3720, %v3615
        %3765 = vst.msk [vmem:[#allocation3 + $0x160] sm:$0xff] %vm3720, %v3617
        %3766 = vst.msk [vmem:[#allocation3 + $0x168] sm:$0xff] %vm3720, %v3619
        %3767 = vst.msk [vmem:[#allocation3 + $0x170] sm:$0xff] %vm3720, %v3621
        %3768 = vst.msk [vmem:[#allocation3 + $0x178] sm:$0xff] %vm3720, %v3623
        %3769 = vst.msk [vmem:[#allocation3 + $0x180] sm:$0xff] %vm3720, %v3625
        %3770 = vst.msk [vmem:[#allocation3 + $0x188] sm:$0xff] %vm3720, %v3627
        %3771 = vst.msk [vmem:[#allocation3 + $0x190] sm:$0xff] %vm3720, %v3629
        %3772 = vst.msk [vmem:[#allocation3 + $0x198] sm:$0xff] %vm3720, %v3631
        %3773 = vst.msk [vmem:[#allocation3 + $0x1a0] sm:$0xff] %vm3720, %v3633
        %3774 = vst.msk [vmem:[#allocation3 + $0x1a8] sm:$0xff] %vm3720, %v3635
        %3775 = vst.msk [vmem:[#allocation3 + $0x1b0] sm:$0xff] %vm3720, %v3637
        %3776 = vst.msk [vmem:[#allocation3 + $0x1b8] sm:$0xff] %vm3720, %v3639
        %3777 = vst.msk [vmem:[#allocation3 + $0x1c0] sm:$0xff] %vm3720, %v3641
        %3778 = vst.msk [vmem:[#allocation3 + $0x1c8] sm:$0xff] %vm3720, %v3643
        %3779 = vst.msk [vmem:[#allocation3 + $0x1d0] sm:$0xff] %vm3720, %v3645
        %3780 = vst.msk [vmem:[#allocation3 + $0x1d8] sm:$0xff] %vm3720, %v3647
        %3781 = vst.msk [vmem:[#allocation3 + $0x1e0] sm:$0xff] %vm3720, %v3649
        %3782 = vst.msk [vmem:[#allocation3 + $0x1e8] sm:$0xff] %vm3720, %v3651
        %3783 = vst.msk [vmem:[#allocation3 + $0x1f0] sm:$0xff] %vm3720, %v3653
        %3784 = vst.msk [vmem:[#allocation3 + $0x1f8] sm:$0xff] %vm3720, %v3655
        %v3785 = vld [vmem:[%s3399 + $0x1] sm:$0xff]
        %v3786 = vld [vmem:[%s3399 + $0x9] sm:$0xff]
        %v3787 = vld [vmem:[%s3399 + $0x11] sm:$0xff]
        %v3788 = vld [vmem:[%s3399 + $0x19] sm:$0xff]
        %v3789 = vld [vmem:[%s3399 + $0x29] sm:$0xff]
        %v3790 = vld [vmem:[%s3399 + $0x31] sm:$0xff]
        %v3791 = vld [vmem:[%s3399 + $0x39] sm:$0xff]
        %v3792 = vld [vmem:[%s3399 + $0x41] sm:$0xff]
        %v3793 = vld [vmem:[%s3399 + $0x51] sm:$0xff]
        %v3794 = vld [vmem:[%s3399 + $0x59] sm:$0xff]
        %v3795 = vld [vmem:[%s3399 + $0x61] sm:$0xff]
        %v3796 = vld [vmem:[%s3399 + $0x69] sm:$0xff]
        %v3797 = vld [vmem:[%s3399 + $0x79] sm:$0xff]
        %v3798 = vld [vmem:[%s3399 + $0x81] sm:$0xff]
        %v3799 = vld [vmem:[%s3399 + $0x89] sm:$0xff]
        %v3800 = vld [vmem:[%s3399 + $0x91] sm:$0xff]
        %v3801 = vld [vmem:[%s3399 + $0xa1] sm:$0xff]
        %v3802 = vld [vmem:[%s3399 + $0xa9] sm:$0xff]
        %v3803 = vld [vmem:[%s3399 + $0xb1] sm:$0xff]
        %v3804 = vld [vmem:[%s3399 + $0xb9] sm:$0xff]
        %v3805 = vld [vmem:[%s3399 + $0xc9] sm:$0xff]
        %v3806 = vld [vmem:[%s3399 + $0xd1] sm:$0xff]
        %v3807 = vld [vmem:[%s3399 + $0xd9] sm:$0xff]
        %v3808 = vld [vmem:[%s3399 + $0xe1] sm:$0xff]
        %v3809 = vld [vmem:[%s3399 + $0xf1] sm:$0xff]
        %v3810 = vld [vmem:[%s3399 + $0xf9] sm:$0xff]
        %v3811 = vld [vmem:[%s3399 + $0x101] sm:$0xff]
        %v3812 = vld [vmem:[%s3399 + $0x109] sm:$0xff]
        %v3813 = vld [vmem:[%s3399 + $0x119] sm:$0xff]
        %v3814 = vld [vmem:[%s3399 + $0x121] sm:$0xff]
        %v3815 = vld [vmem:[%s3399 + $0x129] sm:$0xff]
        %v3816 = vld [vmem:[%s3399 + $0x131] sm:$0xff]
        %v3817 = vld [vmem:[%s3399 + $0x141] sm:$0xff]
        %v3818 = vld [vmem:[%s3399 + $0x149] sm:$0xff]
        %v3819 = vld [vmem:[%s3399 + $0x151] sm:$0xff]
        %v3820 = vld [vmem:[%s3399 + $0x159] sm:$0xff]
        %v3821 = vld [vmem:[%s3399 + $0x169] sm:$0xff]
        %v3822 = vld [vmem:[%s3399 + $0x171] sm:$0xff]
        %v3823 = vld [vmem:[%s3399 + $0x179] sm:$0xff]
        %v3824 = vld [vmem:[%s3399 + $0x181] sm:$0xff]
        %v3825 = vld [vmem:[%s3399 + $0x191] sm:$0xff]
        %v3826 = vld [vmem:[%s3399 + $0x199] sm:$0xff]
        %v3827 = vld [vmem:[%s3399 + $0x1a1] sm:$0xff]
        %v3828 = vld [vmem:[%s3399 + $0x1a9] sm:$0xff]
        %v3829 = vld [vmem:[%s3399 + $0x1b9] sm:$0xff]
        %v3830 = vld [vmem:[%s3399 + $0x1c1] sm:$0xff]
        %v3831 = vld [vmem:[%s3399 + $0x1c9] sm:$0xff]
        %v3832 = vld [vmem:[%s3399 + $0x1d1] sm:$0xff]
        %v3833 = vld [vmem:[%s3399 + $0x1e1] sm:$0xff]
        %v3834 = vld [vmem:[%s3399 + $0x1e9] sm:$0xff]
        %v3835 = vld [vmem:[%s3399 + $0x1f1] sm:$0xff]
        %v3836 = vld [vmem:[%s3399 + $0x1f9] sm:$0xff]
        %v3837 = vld [vmem:[%s3399 + $0x209] sm:$0xff]
        %v3838 = vld [vmem:[%s3399 + $0x211] sm:$0xff]
        %v3839 = vld [vmem:[%s3399 + $0x219] sm:$0xff]
        %v3840 = vld [vmem:[%s3399 + $0x221] sm:$0xff]
        %v3841 = vld [vmem:[%s3399 + $0x231] sm:$0xff]
        %v3842 = vld [vmem:[%s3399 + $0x239] sm:$0xff]
        %v3843 = vld [vmem:[%s3399 + $0x241] sm:$0xff]
        %v3844 = vld [vmem:[%s3399 + $0x249] sm:$0xff]
        %v3845 = vld [vmem:[%s3399 + $0x259] sm:$0xff]
        %v3846 = vld [vmem:[%s3399 + $0x261] sm:$0xff]
        %v3847 = vld [vmem:[%s3399 + $0x269] sm:$0xff]
        %v3848 = vld [vmem:[%s3399 + $0x271] sm:$0xff]
        %3913 = vrot.lane.b32.xlu0 %v3785, 84
        %v3914 = vpop.permute.xlu0 %3913
        %3915 = vrot.lane.b32.xlu0 %v3786, 84
        %v3916 = vpop.permute.xlu0 %3915
        %3917 = vrot.lane.b32.xlu0 %v3787, 84
        %v3918 = vpop.permute.xlu0 %3917
        %3919 = vrot.lane.b32.xlu0 %v3788, 84
        %v3920 = vpop.permute.xlu0 %3919
        %3921 = vrot.lane.b32.xlu0 %v3789, 84
        %v3922 = vpop.permute.xlu0 %3921
        %3923 = vrot.lane.b32.xlu0 %v3790, 84
        %v3924 = vpop.permute.xlu0 %3923
        %3925 = vrot.lane.b32.xlu0 %v3791, 84
        %v3926 = vpop.permute.xlu0 %3925
        %3927 = vrot.lane.b32.xlu0 %v3792, 84
        %v3928 = vpop.permute.xlu0 %3927
        %3929 = vrot.lane.b32.xlu0 %v3793, 84
        %v3930 = vpop.permute.xlu0 %3929
        %3931 = vrot.lane.b32.xlu0 %v3794, 84
        %v3932 = vpop.permute.xlu0 %3931
        %3933 = vrot.lane.b32.xlu0 %v3795, 84
        %v3934 = vpop.permute.xlu0 %3933
        %3935 = vrot.lane.b32.xlu0 %v3796, 84
        %v3936 = vpop.permute.xlu0 %3935
        %3937 = vrot.lane.b32.xlu0 %v3797, 84
        %v3938 = vpop.permute.xlu0 %3937
        %3939 = vrot.lane.b32.xlu0 %v3798, 84
        %v3940 = vpop.permute.xlu0 %3939
        %3941 = vrot.lane.b32.xlu0 %v3799, 84
        %v3942 = vpop.permute.xlu0 %3941
        %3943 = vrot.lane.b32.xlu0 %v3800, 84
        %v3944 = vpop.permute.xlu0 %3943
        %3945 = vrot.lane.b32.xlu0 %v3801, 84
        %v3946 = vpop.permute.xlu0 %3945
        %3947 = vrot.lane.b32.xlu0 %v3802, 84
        %v3948 = vpop.permute.xlu0 %3947
        %3949 = vrot.lane.b32.xlu0 %v3803, 84
        %v3950 = vpop.permute.xlu0 %3949
        %3951 = vrot.lane.b32.xlu0 %v3804, 84
        %v3952 = vpop.permute.xlu0 %3951
        %3953 = vrot.lane.b32.xlu0 %v3805, 84
        %v3954 = vpop.permute.xlu0 %3953
        %3955 = vrot.lane.b32.xlu0 %v3806, 84
        %v3956 = vpop.permute.xlu0 %3955
        %3957 = vrot.lane.b32.xlu0 %v3807, 84
        %v3958 = vpop.permute.xlu0 %3957
        %3959 = vrot.lane.b32.xlu0 %v3808, 84
        %v3960 = vpop.permute.xlu0 %3959
        %3961 = vrot.lane.b32.xlu0 %v3809, 84
        %v3962 = vpop.permute.xlu0 %3961
        %3963 = vrot.lane.b32.xlu0 %v3810, 84
        %v3964 = vpop.permute.xlu0 %3963
        %3965 = vrot.lane.b32.xlu0 %v3811, 84
        %v3966 = vpop.permute.xlu0 %3965
        %3967 = vrot.lane.b32.xlu0 %v3812, 84
        %v3968 = vpop.permute.xlu0 %3967
        %3969 = vrot.lane.b32.xlu0 %v3813, 84
        %v3970 = vpop.permute.xlu0 %3969
        %3971 = vrot.lane.b32.xlu0 %v3814, 84
        %v3972 = vpop.permute.xlu0 %3971
        %3973 = vrot.lane.b32.xlu0 %v3815, 84
        %v3974 = vpop.permute.xlu0 %3973
        %3975 = vrot.lane.b32.xlu0 %v3816, 84
        %v3976 = vpop.permute.xlu0 %3975
        %3977 = vrot.lane.b32.xlu0 %v3817, 84
        %v3978 = vpop.permute.xlu0 %3977
        %3979 = vrot.lane.b32.xlu0 %v3818, 84
        %v3980 = vpop.permute.xlu0 %3979
        %3981 = vrot.lane.b32.xlu0 %v3819, 84
        %v3982 = vpop.permute.xlu0 %3981
        %3983 = vrot.lane.b32.xlu0 %v3820, 84
        %v3984 = vpop.permute.xlu0 %3983
        %3985 = vrot.lane.b32.xlu0 %v3821, 84
        %v3986 = vpop.permute.xlu0 %3985
        %3987 = vrot.lane.b32.xlu0 %v3822, 84
        %v3988 = vpop.permute.xlu0 %3987
        %3989 = vrot.lane.b32.xlu0 %v3823, 84
        %v3990 = vpop.permute.xlu0 %3989
        %3991 = vrot.lane.b32.xlu0 %v3824, 84
        %v3992 = vpop.permute.xlu0 %3991
        %3993 = vrot.lane.b32.xlu0 %v3825, 84
        %v3994 = vpop.permute.xlu0 %3993
        %3995 = vrot.lane.b32.xlu0 %v3826, 84
        %v3996 = vpop.permute.xlu0 %3995
        %3997 = vrot.lane.b32.xlu0 %v3827, 84
        %v3998 = vpop.permute.xlu0 %3997
        %3999 = vrot.lane.b32.xlu0 %v3828, 84
        %v4000 = vpop.permute.xlu0 %3999
        %4001 = vrot.lane.b32.xlu0 %v3829, 84
        %v4002 = vpop.permute.xlu0 %4001
        %4003 = vrot.lane.b32.xlu0 %v3830, 84
        %v4004 = vpop.permute.xlu0 %4003
        %4005 = vrot.lane.b32.xlu0 %v3831, 84
        %v4006 = vpop.permute.xlu0 %4005
        %4007 = vrot.lane.b32.xlu0 %v3832, 84
        %v4008 = vpop.permute.xlu0 %4007
        %4009 = vrot.lane.b32.xlu0 %v3833, 84
        %v4010 = vpop.permute.xlu0 %4009
        %4011 = vrot.lane.b32.xlu0 %v3834, 84
        %v4012 = vpop.permute.xlu0 %4011
        %4013 = vrot.lane.b32.xlu0 %v3835, 84
        %v4014 = vpop.permute.xlu0 %4013
        %4015 = vrot.lane.b32.xlu0 %v3836, 84
        %v4016 = vpop.permute.xlu0 %4015
        %4017 = vrot.lane.b32.xlu0 %v3837, 84
        %v4018 = vpop.permute.xlu0 %4017
        %4019 = vrot.lane.b32.xlu0 %v3838, 84
        %v4020 = vpop.permute.xlu0 %4019
        %4021 = vrot.lane.b32.xlu0 %v3839, 84
        %v4022 = vpop.permute.xlu0 %4021
        %4023 = vrot.lane.b32.xlu0 %v3840, 84
        %v4024 = vpop.permute.xlu0 %4023
        %4025 = vrot.lane.b32.xlu0 %v3841, 84
        %v4026 = vpop.permute.xlu0 %4025
        %4027 = vrot.lane.b32.xlu0 %v3842, 84
        %v4028 = vpop.permute.xlu0 %4027
        %4029 = vrot.lane.b32.xlu0 %v3843, 84
        %v4030 = vpop.permute.xlu0 %4029
        %4031 = vrot.lane.b32.xlu0 %v3844, 84
        %v4032 = vpop.permute.xlu0 %4031
        %4033 = vrot.lane.b32.xlu0 %v3845, 84
        %v4034 = vpop.permute.xlu0 %4033
        %4035 = vrot.lane.b32.xlu0 %v3846, 84
        %v4036 = vpop.permute.xlu0 %4035
        %4037 = vrot.lane.b32.xlu0 %v3847, 84
        %v4038 = vpop.permute.xlu0 %4037
        %4039 = vrot.lane.b32.xlu0 %v3848, 84
        %v4040 = vpop.permute.xlu0 %4039
        %vm4105 = vcmask 786080
        %4106 = vst.msk [vmem:[#allocation3] sm:$0xff] %vm4105, %v3914
        %4107 = vst.msk [vmem:[#allocation3 + $0x8] sm:$0xff] %vm4105, %v3916
        %4108 = vst.msk [vmem:[#allocation3 + $0x10] sm:$0xff] %vm4105, %v3918
        %4109 = vst.msk [vmem:[#allocation3 + $0x18] sm:$0xff] %vm4105, %v3920
        %4110 = vst.msk [vmem:[#allocation3 + $0x20] sm:$0xff] %vm4105, %v3922
        %4111 = vst.msk [vmem:[#allocation3 + $0x28] sm:$0xff] %vm4105, %v3924
        %4112 = vst.msk [vmem:[#allocation3 + $0x30] sm:$0xff] %vm4105, %v3926
        %4113 = vst.msk [vmem:[#allocation3 + $0x38] sm:$0xff] %vm4105, %v3928
        %4114 = vst.msk [vmem:[#allocation3 + $0x40] sm:$0xff] %vm4105, %v3930
        %4115 = vst.msk [vmem:[#allocation3 + $0x48] sm:$0xff] %vm4105, %v3932
        %4116 = vst.msk [vmem:[#allocation3 + $0x50] sm:$0xff] %vm4105, %v3934
        %4117 = vst.msk [vmem:[#allocation3 + $0x58] sm:$0xff] %vm4105, %v3936
        %4118 = vst.msk [vmem:[#allocation3 + $0x60] sm:$0xff] %vm4105, %v3938
        %4119 = vst.msk [vmem:[#allocation3 + $0x68] sm:$0xff] %vm4105, %v3940
        %4120 = vst.msk [vmem:[#allocation3 + $0x70] sm:$0xff] %vm4105, %v3942
        %4121 = vst.msk [vmem:[#allocation3 + $0x78] sm:$0xff] %vm4105, %v3944
        %4122 = vst.msk [vmem:[#allocation3 + $0x80] sm:$0xff] %vm4105, %v3946
        %4123 = vst.msk [vmem:[#allocation3 + $0x88] sm:$0xff] %vm4105, %v3948
        %4124 = vst.msk [vmem:[#allocation3 + $0x90] sm:$0xff] %vm4105, %v3950
        %4125 = vst.msk [vmem:[#allocation3 + $0x98] sm:$0xff] %vm4105, %v3952
        %4126 = vst.msk [vmem:[#allocation3 + $0xa0] sm:$0xff] %vm4105, %v3954
        %4127 = vst.msk [vmem:[#allocation3 + $0xa8] sm:$0xff] %vm4105, %v3956
        %4128 = vst.msk [vmem:[#allocation3 + $0xb0] sm:$0xff] %vm4105, %v3958
        %4129 = vst.msk [vmem:[#allocation3 + $0xb8] sm:$0xff] %vm4105, %v3960
        %4130 = vst.msk [vmem:[#allocation3 + $0xc0] sm:$0xff] %vm4105, %v3962
        %4131 = vst.msk [vmem:[#allocation3 + $0xc8] sm:$0xff] %vm4105, %v3964
        %4132 = vst.msk [vmem:[#allocation3 + $0xd0] sm:$0xff] %vm4105, %v3966
        %4133 = vst.msk [vmem:[#allocation3 + $0xd8] sm:$0xff] %vm4105, %v3968
        %4134 = vst.msk [vmem:[#allocation3 + $0xe0] sm:$0xff] %vm4105, %v3970
        %4135 = vst.msk [vmem:[#allocation3 + $0xe8] sm:$0xff] %vm4105, %v3972
        %4136 = vst.msk [vmem:[#allocation3 + $0xf0] sm:$0xff] %vm4105, %v3974
        %4137 = vst.msk [vmem:[#allocation3 + $0xf8] sm:$0xff] %vm4105, %v3976
        %4138 = vst.msk [vmem:[#allocation3 + $0x100] sm:$0xff] %vm4105, %v3978
        %4139 = vst.msk [vmem:[#allocation3 + $0x108] sm:$0xff] %vm4105, %v3980
        %4140 = vst.msk [vmem:[#allocation3 + $0x110] sm:$0xff] %vm4105, %v3982
        %4141 = vst.msk [vmem:[#allocation3 + $0x118] sm:$0xff] %vm4105, %v3984
        %4142 = vst.msk [vmem:[#allocation3 + $0x120] sm:$0xff] %vm4105, %v3986
        %4143 = vst.msk [vmem:[#allocation3 + $0x128] sm:$0xff] %vm4105, %v3988
        %4144 = vst.msk [vmem:[#allocation3 + $0x130] sm:$0xff] %vm4105, %v3990
        %4145 = vst.msk [vmem:[#allocation3 + $0x138] sm:$0xff] %vm4105, %v3992
        %4146 = vst.msk [vmem:[#allocation3 + $0x140] sm:$0xff] %vm4105, %v3994
        %4147 = vst.msk [vmem:[#allocation3 + $0x148] sm:$0xff] %vm4105, %v3996
        %4148 = vst.msk [vmem:[#allocation3 + $0x150] sm:$0xff] %vm4105, %v3998
        %4149 = vst.msk [vmem:[#allocation3 + $0x158] sm:$0xff] %vm4105, %v4000
        %4150 = vst.msk [vmem:[#allocation3 + $0x160] sm:$0xff] %vm4105, %v4002
        %4151 = vst.msk [vmem:[#allocation3 + $0x168] sm:$0xff] %vm4105, %v4004
        %4152 = vst.msk [vmem:[#allocation3 + $0x170] sm:$0xff] %vm4105, %v4006
        %4153 = vst.msk [vmem:[#allocation3 + $0x178] sm:$0xff] %vm4105, %v4008
        %4154 = vst.msk [vmem:[#allocation3 + $0x180] sm:$0xff] %vm4105, %v4010
        %4155 = vst.msk [vmem:[#allocation3 + $0x188] sm:$0xff] %vm4105, %v4012
        %4156 = vst.msk [vmem:[#allocation3 + $0x190] sm:$0xff] %vm4105, %v4014
        %4157 = vst.msk [vmem:[#allocation3 + $0x198] sm:$0xff] %vm4105, %v4016
        %4158 = vst.msk [vmem:[#allocation3 + $0x1a0] sm:$0xff] %vm4105, %v4018
        %4159 = vst.msk [vmem:[#allocation3 + $0x1a8] sm:$0xff] %vm4105, %v4020
        %4160 = vst.msk [vmem:[#allocation3 + $0x1b0] sm:$0xff] %vm4105, %v4022
        %4161 = vst.msk [vmem:[#allocation3 + $0x1b8] sm:$0xff] %vm4105, %v4024
        %4162 = vst.msk [vmem:[#allocation3 + $0x1c0] sm:$0xff] %vm4105, %v4026
        %4163 = vst.msk [vmem:[#allocation3 + $0x1c8] sm:$0xff] %vm4105, %v4028
        %4164 = vst.msk [vmem:[#allocation3 + $0x1d0] sm:$0xff] %vm4105, %v4030
        %4165 = vst.msk [vmem:[#allocation3 + $0x1d8] sm:$0xff] %vm4105, %v4032
        %4166 = vst.msk [vmem:[#allocation3 + $0x1e0] sm:$0xff] %vm4105, %v4034
        %4167 = vst.msk [vmem:[#allocation3 + $0x1e8] sm:$0xff] %vm4105, %v4036
        %4168 = vst.msk [vmem:[#allocation3 + $0x1f0] sm:$0xff] %vm4105, %v4038
        %4169 = vst.msk [vmem:[#allocation3 + $0x1f8] sm:$0xff] %vm4105, %v4040
        %v4170 = vld [vmem:[%s3399 + $0x2] sm:$0xff]
        %v4171 = vld [vmem:[%s3399 + $0xa] sm:$0xff]
        %v4172 = vld [vmem:[%s3399 + $0x12] sm:$0xff]
        %v4173 = vld [vmem:[%s3399 + $0x1a] sm:$0xff]
        %v4174 = vld [vmem:[%s3399 + $0x2a] sm:$0xff]
        %v4175 = vld [vmem:[%s3399 + $0x32] sm:$0xff]
        %v4176 = vld [vmem:[%s3399 + $0x3a] sm:$0xff]
        %v4177 = vld [vmem:[%s3399 + $0x42] sm:$0xff]
        %v4178 = vld [vmem:[%s3399 + $0x52] sm:$0xff]
        %v4179 = vld [vmem:[%s3399 + $0x5a] sm:$0xff]
        %v4180 = vld [vmem:[%s3399 + $0x62] sm:$0xff]
        %v4181 = vld [vmem:[%s3399 + $0x6a] sm:$0xff]
        %v4182 = vld [vmem:[%s3399 + $0x7a] sm:$0xff]
        %v4183 = vld [vmem:[%s3399 + $0x82] sm:$0xff]
        %v4184 = vld [vmem:[%s3399 + $0x8a] sm:$0xff]
        %v4185 = vld [vmem:[%s3399 + $0x92] sm:$0xff]
        %v4186 = vld [vmem:[%s3399 + $0xa2] sm:$0xff]
        %v4187 = vld [vmem:[%s3399 + $0xaa] sm:$0xff]
        %v4188 = vld [vmem:[%s3399 + $0xb2] sm:$0xff]
        %v4189 = vld [vmem:[%s3399 + $0xba] sm:$0xff]
        %v4190 = vld [vmem:[%s3399 + $0xca] sm:$0xff]
        %v4191 = vld [vmem:[%s3399 + $0xd2] sm:$0xff]
        %v4192 = vld [vmem:[%s3399 + $0xda] sm:$0xff]
        %v4193 = vld [vmem:[%s3399 + $0xe2] sm:$0xff]
        %v4194 = vld [vmem:[%s3399 + $0xf2] sm:$0xff]
        %v4195 = vld [vmem:[%s3399 + $0xfa] sm:$0xff]
        %v4196 = vld [vmem:[%s3399 + $0x102] sm:$0xff]
        %v4197 = vld [vmem:[%s3399 + $0x10a] sm:$0xff]
        %v4198 = vld [vmem:[%s3399 + $0x11a] sm:$0xff]
        %v4199 = vld [vmem:[%s3399 + $0x122] sm:$0xff]
        %v4200 = vld [vmem:[%s3399 + $0x12a] sm:$0xff]
        %v4201 = vld [vmem:[%s3399 + $0x132] sm:$0xff]
        %v4202 = vld [vmem:[%s3399 + $0x142] sm:$0xff]
        %v4203 = vld [vmem:[%s3399 + $0x14a] sm:$0xff]
        %v4204 = vld [vmem:[%s3399 + $0x152] sm:$0xff]
        %v4205 = vld [vmem:[%s3399 + $0x15a] sm:$0xff]
        %v4206 = vld [vmem:[%s3399 + $0x16a] sm:$0xff]
        %v4207 = vld [vmem:[%s3399 + $0x172] sm:$0xff]
        %v4208 = vld [vmem:[%s3399 + $0x17a] sm:$0xff]
        %v4209 = vld [vmem:[%s3399 + $0x182] sm:$0xff]
        %v4210 = vld [vmem:[%s3399 + $0x192] sm:$0xff]
        %v4211 = vld [vmem:[%s3399 + $0x19a] sm:$0xff]
        %v4212 = vld [vmem:[%s3399 + $0x1a2] sm:$0xff]
        %v4213 = vld [vmem:[%s3399 + $0x1aa] sm:$0xff]
        %v4214 = vld [vmem:[%s3399 + $0x1ba] sm:$0xff]
        %v4215 = vld [vmem:[%s3399 + $0x1c2] sm:$0xff]
        %v4216 = vld [vmem:[%s3399 + $0x1ca] sm:$0xff]
        %v4217 = vld [vmem:[%s3399 + $0x1d2] sm:$0xff]
        %v4218 = vld [vmem:[%s3399 + $0x1e2] sm:$0xff]
        %v4219 = vld [vmem:[%s3399 + $0x1ea] sm:$0xff]
        %v4220 = vld [vmem:[%s3399 + $0x1f2] sm:$0xff]
        %v4221 = vld [vmem:[%s3399 + $0x1fa] sm:$0xff]
        %v4222 = vld [vmem:[%s3399 + $0x20a] sm:$0xff]
        %v4223 = vld [vmem:[%s3399 + $0x212] sm:$0xff]
        %v4224 = vld [vmem:[%s3399 + $0x21a] sm:$0xff]
        %v4225 = vld [vmem:[%s3399 + $0x222] sm:$0xff]
        %v4226 = vld [vmem:[%s3399 + $0x232] sm:$0xff]
        %v4227 = vld [vmem:[%s3399 + $0x23a] sm:$0xff]
        %v4228 = vld [vmem:[%s3399 + $0x242] sm:$0xff]
        %v4229 = vld [vmem:[%s3399 + $0x24a] sm:$0xff]
        %v4230 = vld [vmem:[%s3399 + $0x25a] sm:$0xff]
        %v4231 = vld [vmem:[%s3399 + $0x262] sm:$0xff]
        %v4232 = vld [vmem:[%s3399 + $0x26a] sm:$0xff]
        %v4233 = vld [vmem:[%s3399 + $0x272] sm:$0xff]
        %4298 = vrot.lane.b32.xlu0 %v4170, 96
        %v4299 = vpop.permute.xlu0 %4298
        %4300 = vrot.lane.b32.xlu0 %v4171, 96
        %v4301 = vpop.permute.xlu0 %4300
        %4302 = vrot.lane.b32.xlu0 %v4172, 96
        %v4303 = vpop.permute.xlu0 %4302
        %4304 = vrot.lane.b32.xlu0 %v4173, 96
        %v4305 = vpop.permute.xlu0 %4304
        %4306 = vrot.lane.b32.xlu0 %v4174, 96
        %v4307 = vpop.permute.xlu0 %4306
        %4308 = vrot.lane.b32.xlu0 %v4175, 96
        %v4309 = vpop.permute.xlu0 %4308
        %4310 = vrot.lane.b32.xlu0 %v4176, 96
        %v4311 = vpop.permute.xlu0 %4310
        %4312 = vrot.lane.b32.xlu0 %v4177, 96
        %v4313 = vpop.permute.xlu0 %4312
        %4314 = vrot.lane.b32.xlu0 %v4178, 96
        %v4315 = vpop.permute.xlu0 %4314
        %4316 = vrot.lane.b32.xlu0 %v4179, 96
        %v4317 = vpop.permute.xlu0 %4316
        %4318 = vrot.lane.b32.xlu0 %v4180, 96
        %v4319 = vpop.permute.xlu0 %4318
        %4320 = vrot.lane.b32.xlu0 %v4181, 96
        %v4321 = vpop.permute.xlu0 %4320
        %4322 = vrot.lane.b32.xlu0 %v4182, 96
        %v4323 = vpop.permute.xlu0 %4322
        %4324 = vrot.lane.b32.xlu0 %v4183, 96
        %v4325 = vpop.permute.xlu0 %4324
        %4326 = vrot.lane.b32.xlu0 %v4184, 96
        %v4327 = vpop.permute.xlu0 %4326
        %4328 = vrot.lane.b32.xlu0 %v4185, 96
        %v4329 = vpop.permute.xlu0 %4328
        %4330 = vrot.lane.b32.xlu0 %v4186, 96
        %v4331 = vpop.permute.xlu0 %4330
        %4332 = vrot.lane.b32.xlu0 %v4187, 96
        %v4333 = vpop.permute.xlu0 %4332
        %4334 = vrot.lane.b32.xlu0 %v4188, 96
        %v4335 = vpop.permute.xlu0 %4334
        %4336 = vrot.lane.b32.xlu0 %v4189, 96
        %v4337 = vpop.permute.xlu0 %4336
        %4338 = vrot.lane.b32.xlu0 %v4190, 96
        %v4339 = vpop.permute.xlu0 %4338
        %4340 = vrot.lane.b32.xlu0 %v4191, 96
        %v4341 = vpop.permute.xlu0 %4340
        %4342 = vrot.lane.b32.xlu0 %v4192, 96
        %v4343 = vpop.permute.xlu0 %4342
        %4344 = vrot.lane.b32.xlu0 %v4193, 96
        %v4345 = vpop.permute.xlu0 %4344
        %4346 = vrot.lane.b32.xlu0 %v4194, 96
        %v4347 = vpop.permute.xlu0 %4346
        %4348 = vrot.lane.b32.xlu0 %v4195, 96
        %v4349 = vpop.permute.xlu0 %4348
        %4350 = vrot.lane.b32.xlu0 %v4196, 96
        %v4351 = vpop.permute.xlu0 %4350
        %4352 = vrot.lane.b32.xlu0 %v4197, 96
        %v4353 = vpop.permute.xlu0 %4352
        %4354 = vrot.lane.b32.xlu0 %v4198, 96
        %v4355 = vpop.permute.xlu0 %4354
        %4356 = vrot.lane.b32.xlu0 %v4199, 96
        %v4357 = vpop.permute.xlu0 %4356
        %4358 = vrot.lane.b32.xlu0 %v4200, 96
        %v4359 = vpop.permute.xlu0 %4358
        %4360 = vrot.lane.b32.xlu0 %v4201, 96
        %v4361 = vpop.permute.xlu0 %4360
        %4362 = vrot.lane.b32.xlu0 %v4202, 96
        %v4363 = vpop.permute.xlu0 %4362
        %4364 = vrot.lane.b32.xlu0 %v4203, 96
        %v4365 = vpop.permute.xlu0 %4364
        %4366 = vrot.lane.b32.xlu0 %v4204, 96
        %v4367 = vpop.permute.xlu0 %4366
        %4368 = vrot.lane.b32.xlu0 %v4205, 96
        %v4369 = vpop.permute.xlu0 %4368
        %4370 = vrot.lane.b32.xlu0 %v4206, 96
        %v4371 = vpop.permute.xlu0 %4370
        %4372 = vrot.lane.b32.xlu0 %v4207, 96
        %v4373 = vpop.permute.xlu0 %4372
        %4374 = vrot.lane.b32.xlu0 %v4208, 96
        %v4375 = vpop.permute.xlu0 %4374
        %4376 = vrot.lane.b32.xlu0 %v4209, 96
        %v4377 = vpop.permute.xlu0 %4376
        %4378 = vrot.lane.b32.xlu0 %v4210, 96
        %v4379 = vpop.permute.xlu0 %4378
        %4380 = vrot.lane.b32.xlu0 %v4211, 96
        %v4381 = vpop.permute.xlu0 %4380
        %4382 = vrot.lane.b32.xlu0 %v4212, 96
        %v4383 = vpop.permute.xlu0 %4382
        %4384 = vrot.lane.b32.xlu0 %v4213, 96
        %v4385 = vpop.permute.xlu0 %4384
        %4386 = vrot.lane.b32.xlu0 %v4214, 96
        %v4387 = vpop.permute.xlu0 %4386
        %4388 = vrot.lane.b32.xlu0 %v4215, 96
        %v4389 = vpop.permute.xlu0 %4388
        %4390 = vrot.lane.b32.xlu0 %v4216, 96
        %v4391 = vpop.permute.xlu0 %4390
        %4392 = vrot.lane.b32.xlu0 %v4217, 96
        %v4393 = vpop.permute.xlu0 %4392
        %4394 = vrot.lane.b32.xlu0 %v4218, 96
        %v4395 = vpop.permute.xlu0 %4394
        %4396 = vrot.lane.b32.xlu0 %v4219, 96
        %v4397 = vpop.permute.xlu0 %4396
        %4398 = vrot.lane.b32.xlu0 %v4220, 96
        %v4399 = vpop.permute.xlu0 %4398
        %4400 = vrot.lane.b32.xlu0 %v4221, 96
        %v4401 = vpop.permute.xlu0 %4400
        %4402 = vrot.lane.b32.xlu0 %v4222, 96
        %v4403 = vpop.permute.xlu0 %4402
        %4404 = vrot.lane.b32.xlu0 %v4223, 96
        %v4405 = vpop.permute.xlu0 %4404
        %4406 = vrot.lane.b32.xlu0 %v4224, 96
        %v4407 = vpop.permute.xlu0 %4406
        %4408 = vrot.lane.b32.xlu0 %v4225, 96
        %v4409 = vpop.permute.xlu0 %4408
        %4410 = vrot.lane.b32.xlu0 %v4226, 96
        %v4411 = vpop.permute.xlu0 %4410
        %4412 = vrot.lane.b32.xlu0 %v4227, 96
        %v4413 = vpop.permute.xlu0 %4412
        %4414 = vrot.lane.b32.xlu0 %v4228, 96
        %v4415 = vpop.permute.xlu0 %4414
        %4416 = vrot.lane.b32.xlu0 %v4229, 96
        %v4417 = vpop.permute.xlu0 %4416
        %4418 = vrot.lane.b32.xlu0 %v4230, 96
        %v4419 = vpop.permute.xlu0 %4418
        %4420 = vrot.lane.b32.xlu0 %v4231, 96
        %v4421 = vpop.permute.xlu0 %4420
        %4422 = vrot.lane.b32.xlu0 %v4232, 96
        %v4423 = vpop.permute.xlu0 %4422
        %4424 = vrot.lane.b32.xlu0 %v4233, 96
        %v4425 = vpop.permute.xlu0 %4424
        %vm4490 = vcmask 884480
        %4491 = vst.msk [vmem:[#allocation3] sm:$0xff] %vm4490, %v4299
        %4492 = vst.msk [vmem:[#allocation3 + $0x8] sm:$0xff] %vm4490, %v4301
        %4493 = vst.msk [vmem:[#allocation3 + $0x10] sm:$0xff] %vm4490, %v4303
        %4494 = vst.msk [vmem:[#allocation3 + $0x18] sm:$0xff] %vm4490, %v4305
        %4495 = vst.msk [vmem:[#allocation3 + $0x20] sm:$0xff] %vm4490, %v4307
        %4496 = vst.msk [vmem:[#allocation3 + $0x28] sm:$0xff] %vm4490, %v4309
        %4497 = vst.msk [vmem:[#allocation3 + $0x30] sm:$0xff] %vm4490, %v4311
        %4498 = vst.msk [vmem:[#allocation3 + $0x38] sm:$0xff] %vm4490, %v4313
        %4499 = vst.msk [vmem:[#allocation3 + $0x40] sm:$0xff] %vm4490, %v4315
        %4500 = vst.msk [vmem:[#allocation3 + $0x48] sm:$0xff] %vm4490, %v4317
        %4501 = vst.msk [vmem:[#allocation3 + $0x50] sm:$0xff] %vm4490, %v4319
        %4502 = vst.msk [vmem:[#allocation3 + $0x58] sm:$0xff] %vm4490, %v4321
        %4503 = vst.msk [vmem:[#allocation3 + $0x60] sm:$0xff] %vm4490, %v4323
        %4504 = vst.msk [vmem:[#allocation3 + $0x68] sm:$0xff] %vm4490, %v4325
        %4505 = vst.msk [vmem:[#allocation3 + $0x70] sm:$0xff] %vm4490, %v4327
        %4506 = vst.msk [vmem:[#allocation3 + $0x78] sm:$0xff] %vm4490, %v4329
        %4507 = vst.msk [vmem:[#allocation3 + $0x80] sm:$0xff] %vm4490, %v4331
        %4508 = vst.msk [vmem:[#allocation3 + $0x88] sm:$0xff] %vm4490, %v4333
        %4509 = vst.msk [vmem:[#allocation3 + $0x90] sm:$0xff] %vm4490, %v4335
        %4510 = vst.msk [vmem:[#allocation3 + $0x98] sm:$0xff] %vm4490, %v4337
        %4511 = vst.msk [vmem:[#allocation3 + $0xa0] sm:$0xff] %vm4490, %v4339
        %4512 = vst.msk [vmem:[#allocation3 + $0xa8] sm:$0xff] %vm4490, %v4341
        %4513 = vst.msk [vmem:[#allocation3 + $0xb0] sm:$0xff] %vm4490, %v4343
        %4514 = vst.msk [vmem:[#allocation3 + $0xb8] sm:$0xff] %vm4490, %v4345
        %4515 = vst.msk [vmem:[#allocation3 + $0xc0] sm:$0xff] %vm4490, %v4347
        %4516 = vst.msk [vmem:[#allocation3 + $0xc8] sm:$0xff] %vm4490, %v4349
        %4517 = vst.msk [vmem:[#allocation3 + $0xd0] sm:$0xff] %vm4490, %v4351
        %4518 = vst.msk [vmem:[#allocation3 + $0xd8] sm:$0xff] %vm4490, %v4353
        %4519 = vst.msk [vmem:[#allocation3 + $0xe0] sm:$0xff] %vm4490, %v4355
        %4520 = vst.msk [vmem:[#allocation3 + $0xe8] sm:$0xff] %vm4490, %v4357
        %4521 = vst.msk [vmem:[#allocation3 + $0xf0] sm:$0xff] %vm4490, %v4359
        %4522 = vst.msk [vmem:[#allocation3 + $0xf8] sm:$0xff] %vm4490, %v4361
        %4523 = vst.msk [vmem:[#allocation3 + $0x100] sm:$0xff] %vm4490, %v4363
        %4524 = vst.msk [vmem:[#allocation3 + $0x108] sm:$0xff] %vm4490, %v4365
        %4525 = vst.msk [vmem:[#allocation3 + $0x110] sm:$0xff] %vm4490, %v4367
        %4526 = vst.msk [vmem:[#allocation3 + $0x118] sm:$0xff] %vm4490, %v4369
        %4527 = vst.msk [vmem:[#allocation3 + $0x120] sm:$0xff] %vm4490, %v4371
        %4528 = vst.msk [vmem:[#allocation3 + $0x128] sm:$0xff] %vm4490, %v4373
        %4529 = vst.msk [vmem:[#allocation3 + $0x130] sm:$0xff] %vm4490, %v4375
        %4530 = vst.msk [vmem:[#allocation3 + $0x138] sm:$0xff] %vm4490, %v4377
        %4531 = vst.msk [vmem:[#allocation3 + $0x140] sm:$0xff] %vm4490, %v4379
        %4532 = vst.msk [vmem:[#allocation3 + $0x148] sm:$0xff] %vm4490, %v4381
        %4533 = vst.msk [vmem:[#allocation3 + $0x150] sm:$0xff] %vm4490, %v4383
        %4534 = vst.msk [vmem:[#allocation3 + $0x158] sm:$0xff] %vm4490, %v4385
        %4535 = vst.msk [vmem:[#allocation3 + $0x160] sm:$0xff] %vm4490, %v4387
        %4536 = vst.msk [vmem:[#allocation3 + $0x168] sm:$0xff] %vm4490, %v4389
        %4537 = vst.msk [vmem:[#allocation3 + $0x170] sm:$0xff] %vm4490, %v4391
        %4538 = vst.msk [vmem:[#allocation3 + $0x178] sm:$0xff] %vm4490, %v4393
        %4539 = vst.msk [vmem:[#allocation3 + $0x180] sm:$0xff] %vm4490, %v4395
        %4540 = vst.msk [vmem:[#allocation3 + $0x188] sm:$0xff] %vm4490, %v4397
        %4541 = vst.msk [vmem:[#allocation3 + $0x190] sm:$0xff] %vm4490, %v4399
        %4542 = vst.msk [vmem:[#allocation3 + $0x198] sm:$0xff] %vm4490, %v4401
        %4543 = vst.msk [vmem:[#allocation3 + $0x1a0] sm:$0xff] %vm4490, %v4403
        %4544 = vst.msk [vmem:[#allocation3 + $0x1a8] sm:$0xff] %vm4490, %v4405
        %4545 = vst.msk [vmem:[#allocation3 + $0x1b0] sm:$0xff] %vm4490, %v4407
        %4546 = vst.msk [vmem:[#allocation3 + $0x1b8] sm:$0xff] %vm4490, %v4409
        %4547 = vst.msk [vmem:[#allocation3 + $0x1c0] sm:$0xff] %vm4490, %v4411
        %4548 = vst.msk [vmem:[#allocation3 + $0x1c8] sm:$0xff] %vm4490, %v4413
        %4549 = vst.msk [vmem:[#allocation3 + $0x1d0] sm:$0xff] %vm4490, %v4415
        %4550 = vst.msk [vmem:[#allocation3 + $0x1d8] sm:$0xff] %vm4490, %v4417
        %4551 = vst.msk [vmem:[#allocation3 + $0x1e0] sm:$0xff] %vm4490, %v4419
        %4552 = vst.msk [vmem:[#allocation3 + $0x1e8] sm:$0xff] %vm4490, %v4421
        %4553 = vst.msk [vmem:[#allocation3 + $0x1f0] sm:$0xff] %vm4490, %v4423
        %4554 = vst.msk [vmem:[#allocation3 + $0x1f8] sm:$0xff] %vm4490, %v4425
        %v4555 = vld [vmem:[#allocation3] sm:$0xff]
        %v4556 = vld [vmem:[#allocation3 + $0x8] sm:$0xff]
        %v4557 = vld [vmem:[#allocation3 + $0x10] sm:$0xff]
        %v4558 = vld [vmem:[#allocation3 + $0x18] sm:$0xff]
        %v4559 = vld [vmem:[#allocation3 + $0x20] sm:$0xff]
        %v4560 = vld [vmem:[#allocation3 + $0x28] sm:$0xff]
        %v4561 = vld [vmem:[#allocation3 + $0x30] sm:$0xff]
        %v4562 = vld [vmem:[#allocation3 + $0x38] sm:$0xff]
        %v4563 = vld [vmem:[#allocation3 + $0x40] sm:$0xff]
        %v4564 = vld [vmem:[#allocation3 + $0x48] sm:$0xff]
        %v4565 = vld [vmem:[#allocation3 + $0x50] sm:$0xff]
        %v4566 = vld [vmem:[#allocation3 + $0x58] sm:$0xff]
        %v4567 = vld [vmem:[#allocation3 + $0x60] sm:$0xff]
        %v4568 = vld [vmem:[#allocation3 + $0x68] sm:$0xff]
        %v4569 = vld [vmem:[#allocation3 + $0x70] sm:$0xff]
        %v4570 = vld [vmem:[#allocation3 + $0x78] sm:$0xff]
        %v4571 = vld [vmem:[#allocation3 + $0x80] sm:$0xff]
        %v4572 = vld [vmem:[#allocation3 + $0x88] sm:$0xff]
        %v4573 = vld [vmem:[#allocation3 + $0x90] sm:$0xff]
        %v4574 = vld [vmem:[#allocation3 + $0x98] sm:$0xff]
        %v4575 = vld [vmem:[#allocation3 + $0xa0] sm:$0xff]
        %v4576 = vld [vmem:[#allocation3 + $0xa8] sm:$0xff]
        %v4577 = vld [vmem:[#allocation3 + $0xb0] sm:$0xff]
        %v4578 = vld [vmem:[#allocation3 + $0xb8] sm:$0xff]
        %v4579 = vld [vmem:[#allocation3 + $0xc0] sm:$0xff]
        %v4580 = vld [vmem:[#allocation3 + $0xc8] sm:$0xff]
        %v4581 = vld [vmem:[#allocation3 + $0xd0] sm:$0xff]
        %v4582 = vld [vmem:[#allocation3 + $0xd8] sm:$0xff]
        %v4583 = vld [vmem:[#allocation3 + $0xe0] sm:$0xff]
        %v4584 = vld [vmem:[#allocation3 + $0xe8] sm:$0xff]
        %v4585 = vld [vmem:[#allocation3 + $0xf0] sm:$0xff]
        %v4586 = vld [vmem:[#allocation3 + $0xf8] sm:$0xff]
        %v4587 = vld [vmem:[#allocation3 + $0x100] sm:$0xff]
        %v4588 = vld [vmem:[#allocation3 + $0x108] sm:$0xff]
        %v4589 = vld [vmem:[#allocation3 + $0x110] sm:$0xff]
        %v4590 = vld [vmem:[#allocation3 + $0x118] sm:$0xff]
        %v4591 = vld [vmem:[#allocation3 + $0x120] sm:$0xff]
        %v4592 = vld [vmem:[#allocation3 + $0x128] sm:$0xff]
        %v4593 = vld [vmem:[#allocation3 + $0x130] sm:$0xff]
        %v4594 = vld [vmem:[#allocation3 + $0x138] sm:$0xff]
        %v4595 = vld [vmem:[#allocation3 + $0x140] sm:$0xff]
        %v4596 = vld [vmem:[#allocation3 + $0x148] sm:$0xff]
        %v4597 = vld [vmem:[#allocation3 + $0x150] sm:$0xff]
        %v4598 = vld [vmem:[#allocation3 + $0x158] sm:$0xff]
        %v4599 = vld [vmem:[#allocation3 + $0x160] sm:$0xff]
        %v4600 = vld [vmem:[#allocation3 + $0x168] sm:$0xff]
        %v4601 = vld [vmem:[#allocation3 + $0x170] sm:$0xff]
        %v4602 = vld [vmem:[#allocation3 + $0x178] sm:$0xff]
        %v4603 = vld [vmem:[#allocation3 + $0x180] sm:$0xff]
        %v4604 = vld [vmem:[#allocation3 + $0x188] sm:$0xff]
        %v4605 = vld [vmem:[#allocation3 + $0x190] sm:$0xff]
        %v4606 = vld [vmem:[#allocation3 + $0x198] sm:$0xff]
        %v4607 = vld [vmem:[#allocation3 + $0x1a0] sm:$0xff]
        %v4608 = vld [vmem:[#allocation3 + $0x1a8] sm:$0xff]
        %v4609 = vld [vmem:[#allocation3 + $0x1b0] sm:$0xff]
        %v4610 = vld [vmem:[#allocation3 + $0x1b8] sm:$0xff]
        %v4611 = vld [vmem:[#allocation3 + $0x1c0] sm:$0xff]
        %v4612 = vld [vmem:[#allocation3 + $0x1c8] sm:$0xff]
        %v4613 = vld [vmem:[#allocation3 + $0x1d0] sm:$0xff]
        %v4614 = vld [vmem:[#allocation3 + $0x1d8] sm:$0xff]
        %v4615 = vld [vmem:[#allocation3 + $0x1e0] sm:$0xff]
        %v4616 = vld [vmem:[#allocation3 + $0x1e8] sm:$0xff]
        %v4617 = vld [vmem:[#allocation3 + $0x1f0] sm:$0xff]
        %v4618 = vld [vmem:[#allocation3 + $0x1f8] sm:$0xff]
        %v4619 = vld [vmem:[%s6] sm:$0xff]
        %v4620 = vld [vmem:[%s6 + $0x8] sm:$0xff]
        %v4621 = vld [vmem:[%s6 + $0x10] sm:$0xff]
        %v4622 = vld [vmem:[%s6 + $0x18] sm:$0xff]
        %v4623 = vld [vmem:[%s6 + $0x20] sm:$0xff]
        %v4624 = vld [vmem:[%s6 + $0x28] sm:$0xff]
        %v4625 = vld [vmem:[%s6 + $0x30] sm:$0xff]
        %v4626 = vld [vmem:[%s6 + $0x38] sm:$0xff]
        %v4627 = vld [vmem:[%s6 + $0x40] sm:$0xff]
        %v4628 = vld [vmem:[%s6 + $0x48] sm:$0xff]
        %v4629 = vld [vmem:[%s6 + $0x50] sm:$0xff]
        %v4630 = vld [vmem:[%s6 + $0x58] sm:$0xff]
        %v4631 = vld [vmem:[%s6 + $0x60] sm:$0xff]
        %v4632 = vld [vmem:[%s6 + $0x68] sm:$0xf]
        %vm4633 = vcmask 883712
        %v4635 = vsel %vm4633, %v4555, 0
        %v4638 = vsel %vm4633, %v4556, 0
        %v4641 = vsel %vm4633, %v4557, 0
        %v4644 = vsel %vm4633, %v4558, 0
        %v4647 = vsel %vm4633, %v4559, 0
        %v4650 = vsel %vm4633, %v4560, 0
        %v4653 = vsel %vm4633, %v4561, 0
        %v4656 = vsel %vm4633, %v4562, 0
        %v4659 = vsel %vm4633, %v4563, 0
        %v4662 = vsel %vm4633, %v4564, 0
        %v4665 = vsel %vm4633, %v4565, 0
        %v4668 = vsel %vm4633, %v4566, 0
        %v4671 = vsel %vm4633, %v4567, 0
        %v4674 = vsel %vm4633, %v4568, 0
        %v4677 = vsel %vm4633, %v4569, 0
        %v4680 = vsel %vm4633, %v4570, 0
        %v4683 = vsel %vm4633, %v4571, 0
        %v4686 = vsel %vm4633, %v4572, 0
        %v4689 = vsel %vm4633, %v4573, 0
        %v4692 = vsel %vm4633, %v4574, 0
        %v4695 = vsel %vm4633, %v4575, 0
        %v4698 = vsel %vm4633, %v4576, 0
        %v4701 = vsel %vm4633, %v4577, 0
        %v4704 = vsel %vm4633, %v4578, 0
        %v4707 = vsel %vm4633, %v4579, 0
        %v4710 = vsel %vm4633, %v4580, 0
        %v4713 = vsel %vm4633, %v4581, 0
        %v4716 = vsel %vm4633, %v4582, 0
        %v4719 = vsel %vm4633, %v4583, 0
        %v4722 = vsel %vm4633, %v4584, 0
        %v4725 = vsel %vm4633, %v4585, 0
        %v4728 = vsel %vm4633, %v4586, 0
        %v4731 = vsel %vm4633, %v4587, 0
        %v4734 = vsel %vm4633, %v4588, 0
        %v4737 = vsel %vm4633, %v4589, 0
        %v4740 = vsel %vm4633, %v4590, 0
        %v4743 = vsel %vm4633, %v4591, 0
        %v4746 = vsel %vm4633, %v4592, 0
        %v4749 = vsel %vm4633, %v4593, 0
        %v4752 = vsel %vm4633, %v4594, 0
        %v4755 = vsel %vm4633, %v4595, 0
        %v4758 = vsel %vm4633, %v4596, 0
        %v4761 = vsel %vm4633, %v4597, 0
        %v4764 = vsel %vm4633, %v4598, 0
        %v4767 = vsel %vm4633, %v4599, 0
        %v4770 = vsel %vm4633, %v4600, 0
        %v4773 = vsel %vm4633, %v4601, 0
        %v4776 = vsel %vm4633, %v4602, 0
        %v4779 = vsel %vm4633, %v4603, 0
        %v4782 = vsel %vm4633, %v4604, 0
        %v4785 = vsel %vm4633, %v4605, 0
        %v4788 = vsel %vm4633, %v4606, 0
        %v4791 = vsel %vm4633, %v4607, 0
        %v4794 = vsel %vm4633, %v4608, 0
        %v4797 = vsel %vm4633, %v4609, 0
        %v4800 = vsel %vm4633, %v4610, 0
        %v4803 = vsel %vm4633, %v4611, 0
        %v4806 = vsel %vm4633, %v4612, 0
        %v4809 = vsel %vm4633, %v4613, 0
        %v4812 = vsel %vm4633, %v4614, 0
        %v4815 = vsel %vm4633, %v4615, 0
        %v4818 = vsel %vm4633, %v4616, 0
        %v4821 = vsel %vm4633, %v4617, 0
        %v4824 = vsel %vm4633, %v4618, 0
        %vm4826 = vcmask 1043456
        %v4828 = vsel %vm4826, %v4632, 0
        %4830 = vmatprep.subr.mxu0 0.0
        %4831 = vmatpush1.msra.mxu0 0.0
        %4832 = vmatprep.subr.mxu0 0.0
        %4833 = vmatpush1.msra.mxu0 0.0
        %4834 = vmatprep.subr.mxu0 0.0
        %4835 = vmatpush1.msra.mxu0 %v4828
        %4836 = vmatprep.subr.mxu0 0.0
        %4837 = vmatpush1.msra.mxu0 %v4631
        %4838 = vmatprep.subr.mxu0 0.0
        %4839 = vmatpush1.msra.mxu0 %v4630
        %4840 = vmatprep.subr.mxu0 0.0
        %4841 = vmatpush1.msra.mxu0 %v4629
        %4842 = vmatprep.subr.mxu0 0.0
        %4843 = vmatpush1.msra.mxu0 %v4628
        %4844 = vmatprep.subr.mxu0 0.0
        %4845 = vmatpush1.msra.mxu0 %v4627
        %4846 = vmatprep.subr.mxu0 0.0
        %4847 = vmatpush1.msra.mxu0 %v4626
        %4848 = vmatprep.subr.mxu0 0.0
        %4849 = vmatpush1.msra.mxu0 %v4625
        %4850 = vmatprep.subr.mxu0 0.0
        %4851 = vmatpush1.msra.mxu0 %v4624
        %4852 = vmatprep.subr.mxu0 0.0
        %4853 = vmatpush1.msra.mxu0 %v4623
        %4854 = vmatprep.subr.mxu0 0.0
        %4855 = vmatpush1.msra.mxu0 %v4622
        %4856 = vmatprep.subr.mxu0 0.0
        %4857 = vmatpush1.msra.mxu0 %v4621
        %4858 = vmatprep.subr.mxu0 0.0
        %4859 = vmatpush1.msra.mxu0 %v4620
        %4860 = vmatprep.subr.mxu0 0.0
        %4861 = vmatpush1.msra.mxu0 %v4619
        %4862 = vmatprep.subr.mxu0 0.0
        %4863 = vmatpush2.msra.mxu0 0.0
        %4864 = vmatprep.subr.mxu0 0.0
        %4865 = vmatpush2.msra.mxu0 0.0
        %4866 = vmatprep.subr.mxu0 0.0
        %4867 = vmatpush2.msra.mxu0 0.0
        %4868 = vmatprep.subr.mxu0 0.0
        %4869 = vmatpush2.msra.mxu0 0.0
        %4870 = vmatprep.subr.mxu0 0.0
        %4871 = vmatpush2.msra.mxu0 0.0
        %4872 = vmatprep.subr.mxu0 0.0
        %4873 = vmatpush2.msra.mxu0 0.0
        %4874 = vmatprep.subr.mxu0 0.0
        %4875 = vmatpush2.msra.mxu0 0.0
        %4876 = vmatprep.subr.mxu0 0.0
        %4877 = vmatpush2.msra.mxu0 0.0
        %4878 = vmatprep.subr.mxu0 0.0
        %4879 = vmatpush2.msra.mxu0 0.0
        %4880 = vmatprep.subr.mxu0 0.0
        %4881 = vmatpush2.msra.mxu0 0.0
        %4882 = vmatprep.subr.mxu0 0.0
        %4883 = vmatpush2.msra.mxu0 0.0
        %4884 = vmatprep.subr.mxu0 0.0
        %4885 = vmatpush2.msra.mxu0 0.0
        %4886 = vmatprep.subr.mxu0 0.0
        %4887 = vmatpush2.msra.mxu0 0.0
        %4888 = vmatprep.subr.mxu0 0.0
        %4889 = vmatpush2.msra.mxu0 0.0
        %4890 = vmatprep.subr.mxu0 0.0
        %4891 = vmatpush2.msra.mxu0 0.0
        %4892 = vmatprep.subr.mxu0 0.0
        %4893 = vmatpush2.msra.mxu0 0.0
        %4894 = vmatprep.mubr.f32.mxu0 0.0
        %4895 = vmatmul.mubr.f32.gmra.mxu0 %v4635
        %v4896 = vpop.f32.mrf.mxu0
        %v4897 = vadd.f32 0.0, %v4896
        %v4898 = vpop.f32.mrf.mxu0
        %4899 = vmatprep.mubr.f32.mxu0 0.0
        %4900 = vmatmul.mubr.f32.gmra.mxu0 %v4638
        %v4901 = vpop.f32.mrf.mxu0
        %v4902 = vadd.f32 0.0, %v4901
        %v4903 = vpop.f32.mrf.mxu0
        %4904 = vmatprep.mubr.f32.mxu0 0.0
        %4905 = vmatmul.mubr.f32.gmra.mxu0 %v4641
        %v4906 = vpop.f32.mrf.mxu0
        %v4907 = vadd.f32 0.0, %v4906
        %v4908 = vpop.f32.mrf.mxu0
        %4909 = vmatprep.mubr.f32.mxu0 0.0
        %4910 = vmatmul.mubr.f32.gmra.mxu0 %v4644
        %v4911 = vpop.f32.mrf.mxu0
        %v4912 = vadd.f32 0.0, %v4911
        %v4913 = vpop.f32.mrf.mxu0
        %4914 = vmatprep.mubr.f32.mxu0 0.0
        %4915 = vmatmul.mubr.f32.gmra.mxu0 %v4647
        %v4916 = vpop.f32.mrf.mxu0
        %v4917 = vadd.f32 0.0, %v4916
        %v4918 = vpop.f32.mrf.mxu0
        %4919 = vmatprep.mubr.f32.mxu0 0.0
        %4920 = vmatmul.mubr.f32.gmra.mxu0 %v4650
        %v4921 = vpop.f32.mrf.mxu0
        %v4922 = vadd.f32 0.0, %v4921
        %v4923 = vpop.f32.mrf.mxu0
        %4924 = vmatprep.mubr.f32.mxu0 0.0
        %4925 = vmatmul.mubr.f32.gmra.mxu0 %v4653
        %v4926 = vpop.f32.mrf.mxu0
        %v4927 = vadd.f32 0.0, %v4926
        %v4928 = vpop.f32.mrf.mxu0
        %4929 = vmatprep.mubr.f32.mxu0 0.0
        %4930 = vmatmul.mubr.f32.gmra.mxu0 %v4656
        %v4931 = vpop.f32.mrf.mxu0
        %v4932 = vadd.f32 0.0, %v4931
        %v4933 = vpop.f32.mrf.mxu0
        %4934 = vmatprep.mubr.f32.mxu0 0.0
        %4935 = vmatmul.mubr.f32.gmra.mxu0 %v4659
        %v4936 = vpop.f32.mrf.mxu0
        %v4937 = vadd.f32 0.0, %v4936
        %v4938 = vpop.f32.mrf.mxu0
        %4939 = vmatprep.mubr.f32.mxu0 0.0
        %4940 = vmatmul.mubr.f32.gmra.mxu0 %v4662
        %v4941 = vpop.f32.mrf.mxu0
        %v4942 = vadd.f32 0.0, %v4941
        %v4943 = vpop.f32.mrf.mxu0
        %4944 = vmatprep.mubr.f32.mxu0 0.0
        %4945 = vmatmul.mubr.f32.gmra.mxu0 %v4665
        %v4946 = vpop.f32.mrf.mxu0
        %v4947 = vadd.f32 0.0, %v4946
        %v4948 = vpop.f32.mrf.mxu0
        %4949 = vmatprep.mubr.f32.mxu0 0.0
        %4950 = vmatmul.mubr.f32.gmra.mxu0 %v4668
        %v4951 = vpop.f32.mrf.mxu0
        %v4952 = vadd.f32 0.0, %v4951
        %v4953 = vpop.f32.mrf.mxu0
        %4954 = vmatprep.mubr.f32.mxu0 0.0
        %4955 = vmatmul.mubr.f32.gmra.mxu0 %v4671
        %v4956 = vpop.f32.mrf.mxu0
        %v4957 = vadd.f32 0.0, %v4956
        %v4958 = vpop.f32.mrf.mxu0
        %4959 = vmatprep.mubr.f32.mxu0 0.0
        %4960 = vmatmul.mubr.f32.gmra.mxu0 %v4674
        %v4961 = vpop.f32.mrf.mxu0
        %v4962 = vadd.f32 0.0, %v4961
        %v4963 = vpop.f32.mrf.mxu0
        %4964 = vmatprep.mubr.f32.mxu0 0.0
        %4965 = vmatmul.mubr.f32.gmra.mxu0 %v4677
        %v4966 = vpop.f32.mrf.mxu0
        %v4967 = vadd.f32 0.0, %v4966
        %v4968 = vpop.f32.mrf.mxu0
        %4969 = vmatprep.mubr.f32.mxu0 0.0
        %4970 = vmatmul.mubr.f32.gmra.mxu0 %v4680
        %v4971 = vpop.f32.mrf.mxu0
        %v4972 = vadd.f32 0.0, %v4971
        %v4973 = vpop.f32.mrf.mxu0
        %4974 = vmatprep.mubr.f32.mxu0 0.0
        %4975 = vmatmul.mubr.f32.gmra.mxu0 %v4683
        %v4976 = vpop.f32.mrf.mxu0
        %v4977 = vadd.f32 0.0, %v4976
        %v4978 = vpop.f32.mrf.mxu0
        %4979 = vmatprep.mubr.f32.mxu0 0.0
        %4980 = vmatmul.mubr.f32.gmra.mxu0 %v4686
        %v4981 = vpop.f32.mrf.mxu0
        %v4982 = vadd.f32 0.0, %v4981
        %v4983 = vpop.f32.mrf.mxu0
        %4984 = vmatprep.mubr.f32.mxu0 0.0
        %4985 = vmatmul.mubr.f32.gmra.mxu0 %v4689
        %v4986 = vpop.f32.mrf.mxu0
        %v4987 = vadd.f32 0.0, %v4986
        %v4988 = vpop.f32.mrf.mxu0
        %4989 = vmatprep.mubr.f32.mxu0 0.0
        %4990 = vmatmul.mubr.f32.gmra.mxu0 %v4692
        %v4991 = vpop.f32.mrf.mxu0
        %v4992 = vadd.f32 0.0, %v4991
        %v4993 = vpop.f32.mrf.mxu0
        %4994 = vmatprep.mubr.f32.mxu0 0.0
        %4995 = vmatmul.mubr.f32.gmra.mxu0 %v4695
        %v4996 = vpop.f32.mrf.mxu0
        %v4997 = vadd.f32 0.0, %v4996
        %v4998 = vpop.f32.mrf.mxu0
        %4999 = vmatprep.mubr.f32.mxu0 0.0
        %5000 = vmatmul.mubr.f32.gmra.mxu0 %v4698
        %v5001 = vpop.f32.mrf.mxu0
        %v5002 = vadd.f32 0.0, %v5001
        %v5003 = vpop.f32.mrf.mxu0
        %5004 = vmatprep.mubr.f32.mxu0 0.0
        %5005 = vmatmul.mubr.f32.gmra.mxu0 %v4701
        %v5006 = vpop.f32.mrf.mxu0
        %v5007 = vadd.f32 0.0, %v5006
        %v5008 = vpop.f32.mrf.mxu0
        %5009 = vmatprep.mubr.f32.mxu0 0.0
        %5010 = vmatmul.mubr.f32.gmra.mxu0 %v4704
        %v5011 = vpop.f32.mrf.mxu0
        %v5012 = vadd.f32 0.0, %v5011
        %v5013 = vpop.f32.mrf.mxu0
        %5014 = vmatprep.mubr.f32.mxu0 0.0
        %5015 = vmatmul.mubr.f32.gmra.mxu0 %v4707
        %v5016 = vpop.f32.mrf.mxu0
        %v5017 = vadd.f32 0.0, %v5016
        %v5018 = vpop.f32.mrf.mxu0
        %5019 = vmatprep.mubr.f32.mxu0 0.0
        %5020 = vmatmul.mubr.f32.gmra.mxu0 %v4710
        %v5021 = vpop.f32.mrf.mxu0
        %v5022 = vadd.f32 0.0, %v5021
        %v5023 = vpop.f32.mrf.mxu0
        %5024 = vmatprep.mubr.f32.mxu0 0.0
        %5025 = vmatmul.mubr.f32.gmra.mxu0 %v4713
        %v5026 = vpop.f32.mrf.mxu0
        %v5027 = vadd.f32 0.0, %v5026
        %v5028 = vpop.f32.mrf.mxu0
        %5029 = vmatprep.mubr.f32.mxu0 0.0
        %5030 = vmatmul.mubr.f32.gmra.mxu0 %v4716
        %v5031 = vpop.f32.mrf.mxu0
        %v5032 = vadd.f32 0.0, %v5031
        %v5033 = vpop.f32.mrf.mxu0
        %5034 = vmatprep.mubr.f32.mxu0 0.0
        %5035 = vmatmul.mubr.f32.gmra.mxu0 %v4719
        %v5036 = vpop.f32.mrf.mxu0
        %v5037 = vadd.f32 0.0, %v5036
        %v5038 = vpop.f32.mrf.mxu0
        %5039 = vmatprep.mubr.f32.mxu0 0.0
        %5040 = vmatmul.mubr.f32.gmra.mxu0 %v4722
        %v5041 = vpop.f32.mrf.mxu0
        %v5042 = vadd.f32 0.0, %v5041
        %v5043 = vpop.f32.mrf.mxu0
        %5044 = vmatprep.mubr.f32.mxu0 0.0
        %5045 = vmatmul.mubr.f32.gmra.mxu0 %v4725
        %v5046 = vpop.f32.mrf.mxu0
        %v5047 = vadd.f32 0.0, %v5046
        %v5048 = vpop.f32.mrf.mxu0
        %5049 = vmatprep.mubr.f32.mxu0 0.0
        %5050 = vmatmul.mubr.f32.gmra.mxu0 %v4728
        %v5051 = vpop.f32.mrf.mxu0
        %v5052 = vadd.f32 0.0, %v5051
        %v5053 = vpop.f32.mrf.mxu0
        %5054 = vmatprep.mubr.f32.mxu0 0.0
        %5055 = vmatmul.mubr.f32.gmra.mxu0 %v4731
        %v5056 = vpop.f32.mrf.mxu0
        %v5057 = vadd.f32 0.0, %v5056
        %v5058 = vpop.f32.mrf.mxu0
        %5059 = vmatprep.mubr.f32.mxu0 0.0
        %5060 = vmatmul.mubr.f32.gmra.mxu0 %v4734
        %v5061 = vpop.f32.mrf.mxu0
        %v5062 = vadd.f32 0.0, %v5061
        %v5063 = vpop.f32.mrf.mxu0
        %5064 = vmatprep.mubr.f32.mxu0 0.0
        %5065 = vmatmul.mubr.f32.gmra.mxu0 %v4737
        %v5066 = vpop.f32.mrf.mxu0
        %v5067 = vadd.f32 0.0, %v5066
        %v5068 = vpop.f32.mrf.mxu0
        %5069 = vmatprep.mubr.f32.mxu0 0.0
        %5070 = vmatmul.mubr.f32.gmra.mxu0 %v4740
        %v5071 = vpop.f32.mrf.mxu0
        %v5072 = vadd.f32 0.0, %v5071
        %v5073 = vpop.f32.mrf.mxu0
        %5074 = vmatprep.mubr.f32.mxu0 0.0
        %5075 = vmatmul.mubr.f32.gmra.mxu0 %v4743
        %v5076 = vpop.f32.mrf.mxu0
        %v5077 = vadd.f32 0.0, %v5076
        %v5078 = vpop.f32.mrf.mxu0
        %5079 = vmatprep.mubr.f32.mxu0 0.0
        %5080 = vmatmul.mubr.f32.gmra.mxu0 %v4746
        %v5081 = vpop.f32.mrf.mxu0
        %v5082 = vadd.f32 0.0, %v5081
        %v5083 = vpop.f32.mrf.mxu0
        %5084 = vmatprep.mubr.f32.mxu0 0.0
        %5085 = vmatmul.mubr.f32.gmra.mxu0 %v4749
        %v5086 = vpop.f32.mrf.mxu0
        %v5087 = vadd.f32 0.0, %v5086
        %v5088 = vpop.f32.mrf.mxu0
        %5089 = vmatprep.mubr.f32.mxu0 0.0
        %5090 = vmatmul.mubr.f32.gmra.mxu0 %v4752
        %v5091 = vpop.f32.mrf.mxu0
        %v5092 = vadd.f32 0.0, %v5091
        %v5093 = vpop.f32.mrf.mxu0
        %5094 = vmatprep.mubr.f32.mxu0 0.0
        %5095 = vmatmul.mubr.f32.gmra.mxu0 %v4755
        %v5096 = vpop.f32.mrf.mxu0
        %v5097 = vadd.f32 0.0, %v5096
        %v5098 = vpop.f32.mrf.mxu0
        %5099 = vmatprep.mubr.f32.mxu0 0.0
        %5100 = vmatmul.mubr.f32.gmra.mxu0 %v4758
        %v5101 = vpop.f32.mrf.mxu0
        %v5102 = vadd.f32 0.0, %v5101
        %v5103 = vpop.f32.mrf.mxu0
        %5104 = vmatprep.mubr.f32.mxu0 0.0
        %5105 = vmatmul.mubr.f32.gmra.mxu0 %v4761
        %v5106 = vpop.f32.mrf.mxu0
        %v5107 = vadd.f32 0.0, %v5106
        %v5108 = vpop.f32.mrf.mxu0
        %5109 = vmatprep.mubr.f32.mxu0 0.0
        %5110 = vmatmul.mubr.f32.gmra.mxu0 %v4764
        %v5111 = vpop.f32.mrf.mxu0
        %v5112 = vadd.f32 0.0, %v5111
        %v5113 = vpop.f32.mrf.mxu0
        %5114 = vmatprep.mubr.f32.mxu0 0.0
        %5115 = vmatmul.mubr.f32.gmra.mxu0 %v4767
        %v5116 = vpop.f32.mrf.mxu0
        %v5117 = vadd.f32 0.0, %v5116
        %v5118 = vpop.f32.mrf.mxu0
        %5119 = vmatprep.mubr.f32.mxu0 0.0
        %5120 = vmatmul.mubr.f32.gmra.mxu0 %v4770
        %v5121 = vpop.f32.mrf.mxu0
        %v5122 = vadd.f32 0.0, %v5121
        %v5123 = vpop.f32.mrf.mxu0
        %5124 = vmatprep.mubr.f32.mxu0 0.0
        %5125 = vmatmul.mubr.f32.gmra.mxu0 %v4773
        %v5126 = vpop.f32.mrf.mxu0
        %v5127 = vadd.f32 0.0, %v5126
        %v5128 = vpop.f32.mrf.mxu0
        %5129 = vmatprep.mubr.f32.mxu0 0.0
        %5130 = vmatmul.mubr.f32.gmra.mxu0 %v4776
        %v5131 = vpop.f32.mrf.mxu0
        %v5132 = vadd.f32 0.0, %v5131
        %v5133 = vpop.f32.mrf.mxu0
        %5134 = vmatprep.mubr.f32.mxu0 0.0
        %5135 = vmatmul.mubr.f32.gmra.mxu0 %v4779
        %v5136 = vpop.f32.mrf.mxu0
        %v5137 = vadd.f32 0.0, %v5136
        %v5138 = vpop.f32.mrf.mxu0
        %5139 = vmatprep.mubr.f32.mxu0 0.0
        %5140 = vmatmul.mubr.f32.gmra.mxu0 %v4782
        %v5141 = vpop.f32.mrf.mxu0
        %v5142 = vadd.f32 0.0, %v5141
        %v5143 = vpop.f32.mrf.mxu0
        %5144 = vmatprep.mubr.f32.mxu0 0.0
        %5145 = vmatmul.mubr.f32.gmra.mxu0 %v4785
        %v5146 = vpop.f32.mrf.mxu0
        %v5147 = vadd.f32 0.0, %v5146
        %v5148 = vpop.f32.mrf.mxu0
        %5149 = vmatprep.mubr.f32.mxu0 0.0
        %5150 = vmatmul.mubr.f32.gmra.mxu0 %v4788
        %v5151 = vpop.f32.mrf.mxu0
        %v5152 = vadd.f32 0.0, %v5151
        %v5153 = vpop.f32.mrf.mxu0
        %5154 = vmatprep.mubr.f32.mxu0 0.0
        %5155 = vmatmul.mubr.f32.gmra.mxu0 %v4791
        %v5156 = vpop.f32.mrf.mxu0
        %v5157 = vadd.f32 0.0, %v5156
        %v5158 = vpop.f32.mrf.mxu0
        %5159 = vmatprep.mubr.f32.mxu0 0.0
        %5160 = vmatmul.mubr.f32.gmra.mxu0 %v4794
        %v5161 = vpop.f32.mrf.mxu0
        %v5162 = vadd.f32 0.0, %v5161
        %v5163 = vpop.f32.mrf.mxu0
        %5164 = vmatprep.mubr.f32.mxu0 0.0
        %5165 = vmatmul.mubr.f32.gmra.mxu0 %v4797
        %v5166 = vpop.f32.mrf.mxu0
        %v5167 = vadd.f32 0.0, %v5166
        %v5168 = vpop.f32.mrf.mxu0
        %5169 = vmatprep.mubr.f32.mxu0 0.0
        %5170 = vmatmul.mubr.f32.gmra.mxu0 %v4800
        %v5171 = vpop.f32.mrf.mxu0
        %v5172 = vadd.f32 0.0, %v5171
        %v5173 = vpop.f32.mrf.mxu0
        %5174 = vmatprep.mubr.f32.mxu0 0.0
        %5175 = vmatmul.mubr.f32.gmra.mxu0 %v4803
        %v5176 = vpop.f32.mrf.mxu0
        %v5177 = vadd.f32 0.0, %v5176
        %v5178 = vpop.f32.mrf.mxu0
        %5179 = vmatprep.mubr.f32.mxu0 0.0
        %5180 = vmatmul.mubr.f32.gmra.mxu0 %v4806
        %v5181 = vpop.f32.mrf.mxu0
        %v5182 = vadd.f32 0.0, %v5181
        %v5183 = vpop.f32.mrf.mxu0
        %5184 = vmatprep.mubr.f32.mxu0 0.0
        %5185 = vmatmul.mubr.f32.gmra.mxu0 %v4809
        %v5186 = vpop.f32.mrf.mxu0
        %v5187 = vadd.f32 0.0, %v5186
        %v5188 = vpop.f32.mrf.mxu0
        %5189 = vmatprep.mubr.f32.mxu0 0.0
        %5190 = vmatmul.mubr.f32.gmra.mxu0 %v4812
        %v5191 = vpop.f32.mrf.mxu0
        %v5192 = vadd.f32 0.0, %v5191
        %v5193 = vpop.f32.mrf.mxu0
        %5194 = vmatprep.mubr.f32.mxu0 0.0
        %5195 = vmatmul.mubr.f32.gmra.mxu0 %v4815
        %v5196 = vpop.f32.mrf.mxu0
        %v5197 = vadd.f32 0.0, %v5196
        %v5198 = vpop.f32.mrf.mxu0
        %5199 = vmatprep.mubr.f32.mxu0 0.0
        %5200 = vmatmul.mubr.f32.gmra.mxu0 %v4818
        %v5201 = vpop.f32.mrf.mxu0
        %v5202 = vadd.f32 0.0, %v5201
        %v5203 = vpop.f32.mrf.mxu0
        %5204 = vmatprep.mubr.f32.mxu0 0.0
        %5205 = vmatmul.mubr.f32.gmra.mxu0 %v4821
        %v5206 = vpop.f32.mrf.mxu0
        %v5207 = vadd.f32 0.0, %v5206
        %v5208 = vpop.f32.mrf.mxu0
        %5209 = vmatprep.mubr.f32.mxu0 0.0
        %5210 = vmatmul.mubr.f32.gmra.mxu0 %v4824
        %v5211 = vpop.f32.mrf.mxu0
        %v5212 = vadd.f32 0.0, %v5211
        %v5213 = vpop.f32.mrf.mxu0
        %5214 = vdwg.mxu0
        %v5215 = vld [vmem:[%s7] sm:$0x1]
        %v5217 = vlaneseq
        %v5218 = vshrl.u32 %v5217, 7
        %v5219 = vsub.s32 0, %v5218
        %v5220 = vrot.slane %v5215, %v5219
        %v5222 = vmul.f32 %v4897, %v5220
        %v5223 = vmul.f32 %v4902, %v5220
        %v5224 = vmul.f32 %v4907, %v5220
        %v5225 = vmul.f32 %v4912, %v5220
        %v5226 = vmul.f32 %v4917, %v5220
        %v5227 = vmul.f32 %v4922, %v5220
        %v5228 = vmul.f32 %v4927, %v5220
        %v5229 = vmul.f32 %v4932, %v5220
        %v5230 = vmul.f32 %v4937, %v5220
        %v5231 = vmul.f32 %v4942, %v5220
        %v5232 = vmul.f32 %v4947, %v5220
        %v5233 = vmul.f32 %v4952, %v5220
        %v5234 = vmul.f32 %v4957, %v5220
        %v5235 = vmul.f32 %v4962, %v5220
        %v5236 = vmul.f32 %v4967, %v5220
        %v5237 = vmul.f32 %v4972, %v5220
        %v5238 = vmul.f32 %v4977, %v5220
        %v5239 = vmul.f32 %v4982, %v5220
        %v5240 = vmul.f32 %v4987, %v5220
        %v5241 = vmul.f32 %v4992, %v5220
        %v5242 = vmul.f32 %v4997, %v5220
        %v5243 = vmul.f32 %v5002, %v5220
        %v5244 = vmul.f32 %v5007, %v5220
        %v5245 = vmul.f32 %v5012, %v5220
        %v5246 = vmul.f32 %v5017, %v5220
        %v5247 = vmul.f32 %v5022, %v5220
        %v5248 = vmul.f32 %v5027, %v5220
        %v5249 = vmul.f32 %v5032, %v5220
        %v5250 = vmul.f32 %v5037, %v5220
        %v5251 = vmul.f32 %v5042, %v5220
        %v5252 = vmul.f32 %v5047, %v5220
        %v5253 = vmul.f32 %v5052, %v5220
        %v5254 = vmul.f32 %v5057, %v5220
        %v5255 = vmul.f32 %v5062, %v5220
        %v5256 = vmul.f32 %v5067, %v5220
        %v5257 = vmul.f32 %v5072, %v5220
        %v5258 = vmul.f32 %v5077, %v5220
        %v5259 = vmul.f32 %v5082, %v5220
        %v5260 = vmul.f32 %v5087, %v5220
        %v5261 = vmul.f32 %v5092, %v5220
        %v5262 = vmul.f32 %v5097, %v5220
        %v5263 = vmul.f32 %v5102, %v5220
        %v5264 = vmul.f32 %v5107, %v5220
        %v5265 = vmul.f32 %v5112, %v5220
        %v5266 = vmul.f32 %v5117, %v5220
        %v5267 = vmul.f32 %v5122, %v5220
        %v5268 = vmul.f32 %v5127, %v5220
        %v5269 = vmul.f32 %v5132, %v5220
        %v5270 = vmul.f32 %v5137, %v5220
        %v5271 = vmul.f32 %v5142, %v5220
        %v5272 = vmul.f32 %v5147, %v5220
        %v5273 = vmul.f32 %v5152, %v5220
        %v5274 = vmul.f32 %v5157, %v5220
        %v5275 = vmul.f32 %v5162, %v5220
        %v5276 = vmul.f32 %v5167, %v5220
        %v5277 = vmul.f32 %v5172, %v5220
        %v5278 = vmul.f32 %v5177, %v5220
        %v5279 = vmul.f32 %v5182, %v5220
        %v5280 = vmul.f32 %v5187, %v5220
        %v5281 = vmul.f32 %v5192, %v5220
        %v5282 = vmul.f32 %v5197, %v5220
        %v5283 = vmul.f32 %v5202, %v5220
        %v5284 = vmul.f32 %v5207, %v5220
        %v5285 = vmul.f32 %v5212, %v5220
        %v5286 = vld [vmem:[%s8] sm:$0x1]
        %v5288 = vlaneseq
        %v5289 = vshrl.u32 %v5288, 7
        %v5290 = vsub.s32 0, %v5289
        %v5291 = vrot.slane %v5286, %v5290
        %v5293 = vadd.f32 %v5222, %v5291
        %v5294 = vadd.f32 %v5223, %v5291
        %v5295 = vadd.f32 %v5224, %v5291
        %v5296 = vadd.f32 %v5225, %v5291
        %v5297 = vadd.f32 %v5226, %v5291
        %v5298 = vadd.f32 %v5227, %v5291
        %v5299 = vadd.f32 %v5228, %v5291
        %v5300 = vadd.f32 %v5229, %v5291
        %v5301 = vadd.f32 %v5230, %v5291
        %v5302 = vadd.f32 %v5231, %v5291
        %v5303 = vadd.f32 %v5232, %v5291
        %v5304 = vadd.f32 %v5233, %v5291
        %v5305 = vadd.f32 %v5234, %v5291
        %v5306 = vadd.f32 %v5235, %v5291
        %v5307 = vadd.f32 %v5236, %v5291
        %v5308 = vadd.f32 %v5237, %v5291
        %v5309 = vadd.f32 %v5238, %v5291
        %v5310 = vadd.f32 %v5239, %v5291
        %v5311 = vadd.f32 %v5240, %v5291
        %v5312 = vadd.f32 %v5241, %v5291
        %v5313 = vadd.f32 %v5242, %v5291
        %v5314 = vadd.f32 %v5243, %v5291
        %v5315 = vadd.f32 %v5244, %v5291
        %v5316 = vadd.f32 %v5245, %v5291
        %v5317 = vadd.f32 %v5246, %v5291
        %v5318 = vadd.f32 %v5247, %v5291
        %v5319 = vadd.f32 %v5248, %v5291
        %v5320 = vadd.f32 %v5249, %v5291
        %v5321 = vadd.f32 %v5250, %v5291
        %v5322 = vadd.f32 %v5251, %v5291
        %v5323 = vadd.f32 %v5252, %v5291
        %v5324 = vadd.f32 %v5253, %v5291
        %v5325 = vadd.f32 %v5254, %v5291
        %v5326 = vadd.f32 %v5255, %v5291
        %v5327 = vadd.f32 %v5256, %v5291
        %v5328 = vadd.f32 %v5257, %v5291
        %v5329 = vadd.f32 %v5258, %v5291
        %v5330 = vadd.f32 %v5259, %v5291
        %v5331 = vadd.f32 %v5260, %v5291
        %v5332 = vadd.f32 %v5261, %v5291
        %v5333 = vadd.f32 %v5262, %v5291
        %v5334 = vadd.f32 %v5263, %v5291
        %v5335 = vadd.f32 %v5264, %v5291
        %v5336 = vadd.f32 %v5265, %v5291
        %v5337 = vadd.f32 %v5266, %v5291
        %v5338 = vadd.f32 %v5267, %v5291
        %v5339 = vadd.f32 %v5268, %v5291
        %v5340 = vadd.f32 %v5269, %v5291
        %v5341 = vadd.f32 %v5270, %v5291
        %v5342 = vadd.f32 %v5271, %v5291
        %v5343 = vadd.f32 %v5272, %v5291
        %v5344 = vadd.f32 %v5273, %v5291
        %v5345 = vadd.f32 %v5274, %v5291
        %v5346 = vadd.f32 %v5275, %v5291
        %v5347 = vadd.f32 %v5276, %v5291
        %v5348 = vadd.f32 %v5277, %v5291
        %v5349 = vadd.f32 %v5278, %v5291
        %v5350 = vadd.f32 %v5279, %v5291
        %v5351 = vadd.f32 %v5280, %v5291
        %v5352 = vadd.f32 %v5281, %v5291
        %v5353 = vadd.f32 %v5282, %v5291
        %v5354 = vadd.f32 %v5283, %v5291
        %v5355 = vadd.f32 %v5284, %v5291
        %v5356 = vadd.f32 %v5285, %v5291
        %v5357 = vmax.f32 %v5293, 0.0
        %v5358 = vmax.f32 %v5294, 0.0
        %v5359 = vmax.f32 %v5295, 0.0
        %v5360 = vmax.f32 %v5296, 0.0
        %v5361 = vmax.f32 %v5297, 0.0
        %v5362 = vmax.f32 %v5298, 0.0
        %v5363 = vmax.f32 %v5299, 0.0
        %v5364 = vmax.f32 %v5300, 0.0
        %v5365 = vmax.f32 %v5301, 0.0
        %v5366 = vmax.f32 %v5302, 0.0
        %v5367 = vmax.f32 %v5303, 0.0
        %v5368 = vmax.f32 %v5304, 0.0
        %v5369 = vmax.f32 %v5305, 0.0
        %v5370 = vmax.f32 %v5306, 0.0
        %v5371 = vmax.f32 %v5307, 0.0
        %v5372 = vmax.f32 %v5308, 0.0
        %v5373 = vmax.f32 %v5309, 0.0
        %v5374 = vmax.f32 %v5310, 0.0
        %v5375 = vmax.f32 %v5311, 0.0
        %v5376 = vmax.f32 %v5312, 0.0
        %v5377 = vmax.f32 %v5313, 0.0
        %v5378 = vmax.f32 %v5314, 0.0
        %v5379 = vmax.f32 %v5315, 0.0
        %v5380 = vmax.f32 %v5316, 0.0
        %v5381 = vmax.f32 %v5317, 0.0
        %v5382 = vmax.f32 %v5318, 0.0
        %v5383 = vmax.f32 %v5319, 0.0
        %v5384 = vmax.f32 %v5320, 0.0
        %v5385 = vmax.f32 %v5321, 0.0
        %v5386 = vmax.f32 %v5322, 0.0
        %v5387 = vmax.f32 %v5323, 0.0
        %v5388 = vmax.f32 %v5324, 0.0
        %v5389 = vmax.f32 %v5325, 0.0
        %v5390 = vmax.f32 %v5326, 0.0
        %v5391 = vmax.f32 %v5327, 0.0
        %v5392 = vmax.f32 %v5328, 0.0
        %v5393 = vmax.f32 %v5329, 0.0
        %v5394 = vmax.f32 %v5330, 0.0
        %v5395 = vmax.f32 %v5331, 0.0
        %v5396 = vmax.f32 %v5332, 0.0
        %v5397 = vmax.f32 %v5333, 0.0
        %v5398 = vmax.f32 %v5334, 0.0
        %v5399 = vmax.f32 %v5335, 0.0
        %v5400 = vmax.f32 %v5336, 0.0
        %v5401 = vmax.f32 %v5337, 0.0
        %v5402 = vmax.f32 %v5338, 0.0
        %v5403 = vmax.f32 %v5339, 0.0
        %v5404 = vmax.f32 %v5340, 0.0
        %v5405 = vmax.f32 %v5341, 0.0
        %v5406 = vmax.f32 %v5342, 0.0
        %v5407 = vmax.f32 %v5343, 0.0
        %v5408 = vmax.f32 %v5344, 0.0
        %v5409 = vmax.f32 %v5345, 0.0
        %v5410 = vmax.f32 %v5346, 0.0
        %v5411 = vmax.f32 %v5347, 0.0
        %v5412 = vmax.f32 %v5348, 0.0
        %v5413 = vmax.f32 %v5349, 0.0
        %v5414 = vmax.f32 %v5350, 0.0
        %v5415 = vmax.f32 %v5351, 0.0
        %v5416 = vmax.f32 %v5352, 0.0
        %v5417 = vmax.f32 %v5353, 0.0
        %v5418 = vmax.f32 %v5354, 0.0
        %v5419 = vmax.f32 %v5355, 0.0
        %v5420 = vmax.f32 %v5356, 0.0
        %5421 = vst [vmem:[%s560] sm:$0xff] %v5357
        %5422 = vst [vmem:[%s560 + $0x8] sm:$0xff] %v5358
        %5423 = vst [vmem:[%s560 + $0x10] sm:$0xff] %v5359
        %5424 = vst [vmem:[%s560 + $0x18] sm:$0xff] %v5360
        %5425 = vst [vmem:[%s560 + $0x20] sm:$0xff] %v5361
        %5426 = vst [vmem:[%s560 + $0x28] sm:$0xff] %v5362
        %5427 = vst [vmem:[%s560 + $0x30] sm:$0xff] %v5363
        %5428 = vst [vmem:[%s560 + $0x38] sm:$0xff] %v5364
        %5429 = vst [vmem:[%s560 + $0x40] sm:$0xff] %v5365
        %5430 = vst [vmem:[%s560 + $0x48] sm:$0xff] %v5366
        %5431 = vst [vmem:[%s560 + $0x50] sm:$0xff] %v5367
        %5432 = vst [vmem:[%s560 + $0x58] sm:$0xff] %v5368
        %5433 = vst [vmem:[%s560 + $0x60] sm:$0xff] %v5369
        %5434 = vst [vmem:[%s560 + $0x68] sm:$0xff] %v5370
        %5435 = vst [vmem:[%s560 + $0x70] sm:$0xff] %v5371
        %5436 = vst [vmem:[%s560 + $0x78] sm:$0xff] %v5372
        %5437 = vst [vmem:[%s560 + $0x80] sm:$0xff] %v5373
        %5438 = vst [vmem:[%s560 + $0x88] sm:$0xff] %v5374
        %5439 = vst [vmem:[%s560 + $0x90] sm:$0xff] %v5375
        %5440 = vst [vmem:[%s560 + $0x98] sm:$0xff] %v5376
        %5441 = vst [vmem:[%s560 + $0xa0] sm:$0xff] %v5377
        %5442 = vst [vmem:[%s560 + $0xa8] sm:$0xff] %v5378
        %5443 = vst [vmem:[%s560 + $0xb0] sm:$0xff] %v5379
        %5444 = vst [vmem:[%s560 + $0xb8] sm:$0xff] %v5380
        %5445 = vst [vmem:[%s560 + $0xc0] sm:$0xff] %v5381
        %5446 = vst [vmem:[%s560 + $0xc8] sm:$0xff] %v5382
        %5447 = vst [vmem:[%s560 + $0xd0] sm:$0xff] %v5383
        %5448 = vst [vmem:[%s560 + $0xd8] sm:$0xff] %v5384
        %5449 = vst [vmem:[%s560 + $0xe0] sm:$0xff] %v5385
        %5450 = vst [vmem:[%s560 + $0xe8] sm:$0xff] %v5386
        %5451 = vst [vmem:[%s560 + $0xf0] sm:$0xff] %v5387
        %5452 = vst [vmem:[%s560 + $0xf8] sm:$0xff] %v5388
        %5453 = vst [vmem:[%s560 + $0x100] sm:$0xff] %v5389
        %5454 = vst [vmem:[%s560 + $0x108] sm:$0xff] %v5390
        %5455 = vst [vmem:[%s560 + $0x110] sm:$0xff] %v5391
        %5456 = vst [vmem:[%s560 + $0x118] sm:$0xff] %v5392
        %5457 = vst [vmem:[%s560 + $0x120] sm:$0xff] %v5393
        %5458 = vst [vmem:[%s560 + $0x128] sm:$0xff] %v5394
        %5459 = vst [vmem:[%s560 + $0x130] sm:$0xff] %v5395
        %5460 = vst [vmem:[%s560 + $0x138] sm:$0xff] %v5396
        %5461 = vst [vmem:[%s560 + $0x140] sm:$0xff] %v5397
        %5462 = vst [vmem:[%s560 + $0x148] sm:$0xff] %v5398
        %5463 = vst [vmem:[%s560 + $0x150] sm:$0xff] %v5399
        %5464 = vst [vmem:[%s560 + $0x158] sm:$0xff] %v5400
        %5465 = vst [vmem:[%s560 + $0x160] sm:$0xff] %v5401
        %5466 = vst [vmem:[%s560 + $0x168] sm:$0xff] %v5402
        %5467 = vst [vmem:[%s560 + $0x170] sm:$0xff] %v5403
        %5468 = vst [vmem:[%s560 + $0x178] sm:$0xff] %v5404
        %5469 = vst [vmem:[%s560 + $0x180] sm:$0xff] %v5405
        %5470 = vst [vmem:[%s560 + $0x188] sm:$0xff] %v5406
        %5471 = vst [vmem:[%s560 + $0x190] sm:$0xff] %v5407
        %5472 = vst [vmem:[%s560 + $0x198] sm:$0xff] %v5408
        %5473 = vst [vmem:[%s560 + $0x1a0] sm:$0xff] %v5409
        %5474 = vst [vmem:[%s560 + $0x1a8] sm:$0xff] %v5410
        %5475 = vst [vmem:[%s560 + $0x1b0] sm:$0xff] %v5411
        %5476 = vst [vmem:[%s560 + $0x1b8] sm:$0xff] %v5412
        %5477 = vst [vmem:[%s560 + $0x1c0] sm:$0xff] %v5413
        %5478 = vst [vmem:[%s560 + $0x1c8] sm:$0xff] %v5414
        %5479 = vst [vmem:[%s560 + $0x1d0] sm:$0xff] %v5415
        %5480 = vst [vmem:[%s560 + $0x1d8] sm:$0xff] %v5416
        %5481 = vst [vmem:[%s560 + $0x1e0] sm:$0xff] %v5417
        %5482 = vst [vmem:[%s560 + $0x1e8] sm:$0xff] %v5418
        %5483 = vst [vmem:[%s560 + $0x1f0] sm:$0xff] %v5419
        %5484 = vst [vmem:[%s560 + $0x1f8] sm:$0xff] %v5420
        %s5485 = sand.u32 %s308, 1
        %s5486 = scalar_lea.sflag [#allocation5], %s5485
        %s5487 = sand.u32 %s308, 1
        %s5488 = smul.addr %s5487, 512
        %s5489 = scalar_lea.vmem [#allocation4], %s5488
        // Predicated region
        $region57: #{tpu_custom_call.1} parent=55 // pred_check
          %p5490 = pneg %p318
        $region58: #{tpu_custom_call.1} parent=55 // pred_check_branch
          %5492 = sbr.rel (%p5490) target = $region60
        $region59: #{tpu_custom_call.1} parent=55 // pred_region
          %s5493 = smul.u32 64, %s28
          %s5495 = ssub.s32 8192, 8192
          %5496 = vsyncadd %s5486, %s5495
          %s5497 = smul.addr %s27, 128
          %s5498 = sadd.s32 %s5493, %s5497
          %s5499 = smul.addr %s5498, 128
          %s5500 = scalar_lea.hbm %s9, %s5499
          %s5501 = sshll.u32 %s5489, 4
          %s5502 = int_to_ptr.vmem [resolvable:$true] %s5501
          %5507 = dma.vmem_to_hbm [thread:$0]  %s5502, 8192, %s5500, %s5486, 128, 128, 8
        $region60: #{tpu_custom_call.1} parent=55 // pred_fallthru
          _
      $region56: #{tpu_custom_call.1} parent=5 // pred_fallthru
        _
      %p5508 = scmp.le.s32.totalorder 2, %s18
      // Predicated region
      $region61: #{tpu_custom_call.1} parent=5 // pred_check
        %p5509 = pneg %p5508
      $region62: #{tpu_custom_call.1} parent=5 // pred_check_branch
        %5511 = sbr.rel (%p5509) target = $region64
      $region63: #{tpu_custom_call.1} parent=5 // pred_region
        %s5512 = ssub.s32 %s18, 2
        // Predicated region
        $region65: #{tpu_custom_call.1} parent=63 // pred_check
          %p5513 = pneg %p324
        $region66: #{tpu_custom_call.1} parent=63 // pred_check_branch
          %5515 = sbr.rel (%p5513) target = $region68
        $region67: #{tpu_custom_call.1} parent=63 // pred_region
          %s5516 = sand.u32 %s309, 1
          %s5517 = scalar_lea.sflag [#allocation5], %s5516
          %s5518 = sand.u32 %s309, 1
          %s5519 = smul.addr %s5518, 512
          %s5520 = scalar_lea.vmem [#allocation4], %s5519
          %5521 = dma.done %s5517, 8192
        $region68: #{tpu_custom_call.1} parent=63 // pred_fallthru
          _
      $region64: #{tpu_custom_call.1} parent=5 // pred_fallthru
        _
    $region6: #{tpu_custom_call.1} parent=1 // loop_footer
      %s22 = sadd.s32 1, %s18
    $region7: #{tpu_custom_call.1} parent=1 // loop_footer_branch
      %17 = sbr.rel target = $region3
    $region8: #{tpu_custom_call.1} parent=1 // loop_exit
      _
    %5522 = vsyncpa [#allocation5], 1
    %s5523 = scalar_lea.sflag [#allocation5], 1
    %5524 = vsyncpa %s5523, 1

</llo_original>
